<compile_context>
chip_gen: v7x
topology: tpu7x:2x2x1
jax: 0.10.0
libtpu: 0.0.40
codegen_flags: <defaults>
</compile_context>

<pallas_src>
import jax
import jax.numpy as jnp
from jax import lax
from jax.experimental import pallas as pl
from jax.experimental.pallas import tpu as pltpu

# ----------------------- configuration (small, deterministic) ----------------
X_DIM    = 3
H_DIM    = 32
N_LAYERS = 2
X_SCALE  = 2.0     # exercised (forward scales x1/x2 when != 1)
ALPHA    = 0.01    # unused (BaseNet hyperparam, definition not provided)
GAMMA    = 1.0     # unused (BaseNet hyperparam, definition not provided)
Y_DIM    = 3

N_POINTS = 512     # number of rows
N_SPLITS = 2       # row shards -> one per TensorCore on v7x ("parallel" axis)
MAX_TN   = 4096    # max rows per grid step (live state is tiny; VMEM no issue)
LANES    = 128     # lane padding for the output block / final-proj weights


def _softplus(v):
    # numerically stable softplus (matches torch.nn.Softplus beta=1, threshold=20)
    return jnp.where(v > 20.0, v, jnp.log1p(jnp.exp(jnp.minimum(v, 20.0))))


# ------------------------------- Pallas wrapper --------------------------------
def encoder2_forward(x1, x2, params):
    w0, b0, wh, bh, wout, bout = params
    n = x1.shape[0]
    assert n % N_SPLITS == 0
    rows_per_split = n // N_SPLITS
    tn = min(rows_per_split, MAX_TN)
    assert rows_per_split % tn == 0 and tn % 8 == 0
    steps = rows_per_split // tn
    grid = (N_SPLITS, steps)
    inv_count = 1.0 / float(n * X_DIM)

    # torch.cat([x1, x2], dim=1) once in the wrapper (essentially free in XLA).
    x = jnp.concatenate([x1, x2], axis=1)                # (N, 2*X_DIM)

    # Output projection rearranged for the linearity refactor, lane-padded:
    #   y[j] = sum_d G[d,:] @ wout[:, d*Y+j]  +  sum_d s[d] * bout[0, d*Y+j]
    wout2 = jnp.transpose(wout.reshape(H_DIM, X_DIM, Y_DIM), (1, 0, 2))
    wout2 = jnp.pad(wout2, ((0, 0), (0, 0), (0, LANES - Y_DIM)))   # (X_DIM,H,128)
    bout2 = jnp.pad(bout.reshape(X_DIM, Y_DIM),
                    ((0, 0), (0, LANES - Y_DIM)))                  # (X_DIM,128)

    def kernel(x_ref, w0_ref, b0_ref, wh_ref, bh_ref, wout2_ref, bout2_ref,
               o_ref, g_acc, s_acc):
        s_idx = pl.program_id(1)

        @pl.when(s_idx == 0)
        def _():
            g_acc[...] = jnp.zeros_like(g_acc)
            s_acc[...] = jnp.zeros_like(s_acc)

        xv = x_ref[...]                                  # (tn, 2*X_DIM)
        if X_SCALE != 1.0:                               # compile-time check
            xv = xv * X_SCALE
        x1v = xv[:, :X_DIM]                              # scaled x1 (static slice)

        # ---- netA (BaseNet approx: Linear+Softplus MLP), concat folded ----
        h = _softplus(
            jnp.dot(xv, w0_ref[...], preferred_element_type=jnp.float32)
            + b0_ref[...])                               # (tn, H_DIM)
        for l in range(N_LAYERS):
            h = _softplus(
                jnp.dot(h, wh_ref[l], preferred_element_type=jnp.float32)
                + bh_ref[l])
        # TODO(synk): at very large N, lane-pack 4 row groups into (tn/4, 128)
        #             activations and/or cast MXU operands to bf16 (v6e); not
        #             worthwhile at these shapes.

        # ---- linearity refactor: accumulate G += x1^T h (K=tn MXU
        #      contraction into a tiny (X_DIM, H_DIM) scratch) and
        #      s += row-sum(x1); final projection deferred to last step ----
        g_acc[...] += lax.dot_general(
            x1v, h, (((0,), (0,)), ((), ())),
            preferred_element_type=jnp.float32)          # (X_DIM, H_DIM)
        s_acc[...] += jnp.sum(x1v, axis=0, keepdims=True)  # (1, X_DIM)

        @pl.when(s_idx == pl.num_programs(1) - 1)
        def _():
            g = g_acc[...]                               # (X_DIM, H_DIM)
            y = jnp.dot(s_acc[...], bout2_ref[...],
                        preferred_element_type=jnp.float32)      # (1, 128)
            for d in range(X_DIM):
                y = y + jnp.dot(g[d:d + 1, :], wout2_ref[d],
                                preferred_element_type=jnp.float32)
            # single lane-padded store per split (no per-step masked stores)
            o_ref[...] = jnp.broadcast_to(y * inv_count, o_ref.shape)

    def full_spec(a):
        return pl.BlockSpec(a.shape, lambda p, s, nd=a.ndim: (0,) * nd)

    in_specs = [
        pl.BlockSpec((tn, 2 * X_DIM), lambda p, s: (p * steps + s, 0)),  # x
        full_spec(w0), full_spec(b0), full_spec(wh), full_spec(bh),
        full_spec(wout2), full_spec(bout2),
    ]
    # Per-split lane-padded output row; last two dims tile-aligned (8, 128).
    out_spec = pl.BlockSpec((None, 8, LANES), lambda p, s: (p, 0, 0))

    out = pl.pallas_call(
        kernel,
        out_shape=jax.ShapeDtypeStruct((N_SPLITS, 8, LANES), jnp.float32),
        grid_spec=pltpu.PrefetchScalarGridSpec(
            num_scalar_prefetch=0,
            grid=grid,
            in_specs=in_specs,
            out_specs=out_spec,
            scratch_shapes=[pltpu.VMEM((X_DIM, H_DIM), jnp.float32),  # G
                            pltpu.VMEM((1, X_DIM), jnp.float32)],     # s
        ),
        compiler_params=pltpu.CompilerParams(
            dimension_semantics=("parallel", "arbitrary")),
    )(x, w0, b0, wh, bh, wout2, bout2)

    # combine per-split (per-core) partials; each is already scaled by inv_count
    y = jnp.sum(out[:, 0, :Y_DIM], axis=0, keepdims=True)   # (1, Y_DIM)
    # torch: y.view(1, -1).expand(N, y_dim)  -> broadcast view, no compute.
    return jnp.broadcast_to(y, (n, Y_DIM))


# --------------------------- pure-JAX reference --------------------------------
def _mm(a, b):
    return jnp.dot(a, b, precision=lax.Precision.HIGHEST)


def encoder2_ref(x1, x2, params):
    w0, b0, wh, bh, wout, bout = params
    n_pts = x1.shape[0]
    if X_SCALE != 1.0:
        x1 = x1 * X_SCALE
        x2 = x2 * X_SCALE
    x = jnp.concatenate([x1, x2], axis=1)
    h = _softplus(_mm(x, w0) + b0)
    for l in range(N_LAYERS):
        h = _softplus(_mm(h, wh[l]) + bh[l])
    y1 = (_mm(h, wout) + bout).reshape(n_pts, X_DIM, Y_DIM)
    x1r = x1.reshape(n_pts, X_DIM, 1)
    y = (y1 * x1r).mean(axis=(0, 1))          # (Y_DIM,)
    y = y.reshape(1, -1)
    return jnp.broadcast_to(y, (n_pts, Y_DIM))


# ----------------------------------- main --------------------------------------
if __name__ == "__main__":
    key = jax.random.PRNGKey(0)
    keys = jax.random.split(key, 10)

    def init(k, shape, fan_in, scale=1.0):
        return (scale * jax.random.normal(k, shape, jnp.float32)
                / jnp.sqrt(jnp.float32(fan_in)))

    w0   = init(keys[0], (2 * X_DIM, H_DIM), 2 * X_DIM)
    b0   = init(keys[1], (1, H_DIM), 1.0, 0.1)
    wh   = init(keys[2], (N_LAYERS, H_DIM, H_DIM), H_DIM)
    bh   = init(keys[3], (N_LAYERS, 1, H_DIM), 1.0, 0.1)
    wout = init(keys[4], (H_DIM, X_DIM * Y_DIM), H_DIM)
    bout = init(keys[5], (1, X_DIM * Y_DIM), 1.0, 0.1)
    params = (w0, b0, wh, bh, wout, bout)

    x1 = jax.random.uniform(keys[6], (N_POINTS, X_DIM), jnp.float32, -1.0, 1.0)
    x2 = jax.random.uniform(keys[7], (N_POINTS, X_DIM), jnp.float32, -1.0, 1.0)

    y_kernel = encoder2_forward(x1, x2, params)
    jax.block_until_ready(y_kernel)

    y_ref = encoder2_ref(x1, x2, params)
    jax.block_until_ready(y_ref)

    assert y_kernel.shape == (N_POINTS, Y_DIM)
    err = float(jnp.max(jnp.abs(y_kernel - y_ref)))
    # small drift expected: kernel dots run at default MXU precision vs the
    # HIGHEST-precision pure-JAX reference
    assert jnp.allclose(y_kernel, y_ref, rtol=1e-3, atol=2e-3), err

    print("KERNEL_OK")
</pallas_src>

<mosaic_0001>
module attributes {stable_mosaic.version = 11 : i64} {
  func.func @kernel(%arg0: i32, %arg1: i32, %arg2: memref<256x6xf32, #tpu.memory_space<vmem>>, %arg3: memref<6x32xf32, #tpu.memory_space<vmem>>, %arg4: memref<1x32xf32, #tpu.memory_space<vmem>>, %arg5: memref<2x32x32xf32, #tpu.memory_space<vmem>>, %arg6: memref<2x1x32xf32, #tpu.memory_space<vmem>>, %arg7: memref<3x32x128xf32, #tpu.memory_space<vmem>>, %arg8: memref<3x128xf32, #tpu.memory_space<vmem>>, %arg9: memref<1x8x128xf32, #tpu.memory_space<vmem>>, %arg10: memref<3x32xf32, #tpu.memory_space<vmem>>, %arg11: memref<1x3xf32, #tpu.memory_space<vmem>>) attributes {dimension_semantics = [#tpu.dimension_semantics<parallel>, #tpu.dimension_semantics<arbitrary>], iteration_bounds = array<i64: 2, 1>, scalar_prefetch = 0 : i64, scratch_operands = 2 : i64, tpu.core_type = #tpu.core_type<tc>, window_params = [{transform_indices = @transform_0, window_bounds = array<i64: 256, 6>}, {pipeline_mode = #tpu.pipeline_mode<synchronous>, transform_indices = @transform_1, window_bounds = array<i64: 6, 32>}, {pipeline_mode = #tpu.pipeline_mode<synchronous>, transform_indices = @transform_2, window_bounds = array<i64: 1, 32>}, {pipeline_mode = #tpu.pipeline_mode<synchronous>, transform_indices = @transform_3, window_bounds = array<i64: 2, 32, 32>}, {pipeline_mode = #tpu.pipeline_mode<synchronous>, transform_indices = @transform_4, window_bounds = array<i64: 2, 1, 32>}, {pipeline_mode = #tpu.pipeline_mode<synchronous>, transform_indices = @transform_5, window_bounds = array<i64: 3, 32, 128>}, {pipeline_mode = #tpu.pipeline_mode<synchronous>, transform_indices = @transform_6, window_bounds = array<i64: 3, 128>}, {transform_indices = @transform_7, window_bounds = array<i64: 1, 8, 128>}]} {
    %c0_i32 = arith.constant 0 : i32
    %0 = arith.cmpi eq, %arg1, %c0_i32 : i32
    %1 = arith.extui %0 : i1 to i32
    %c0_i32_0 = arith.constant 0 : i32
    %2 = arith.cmpi ne, %1, %c0_i32_0 : i32
    scf.if %2 {
      %cst_38 = arith.constant 0.000000e+00 : f32
      %59 = vector.broadcast %cst_38 : f32 to vector<3x32xf32>
      %c0_39 = arith.constant 0 : index
      %c0_40 = arith.constant 0 : index
      %60 = vector.load %arg10[%c0_39, %c0_40] : memref<3x32xf32, #tpu.memory_space<vmem>>, vector<3x32xf32>
      tpu.vector_store %arg10[%c0_39, %c0_40], %59 {strides = array<i32>} : memref<3x32xf32, #tpu.memory_space<vmem>>, vector<3x32xf32>,
      %cst_41 = arith.constant 0.000000e+00 : f32
      %61 = vector.broadcast %cst_41 : f32 to vector<1x3xf32>
      %c0_42 = arith.constant 0 : index
      %c0_43 = arith.constant 0 : index
      %62 = vector.load %arg11[%c0_42, %c0_43] : memref<1x3xf32, #tpu.memory_space<vmem>>, vector<1x3xf32>
      tpu.vector_store %arg11[%c0_42, %c0_43], %61 {strides = array<i32>} : memref<1x3xf32, #tpu.memory_space<vmem>>, vector<1x3xf32>,
    } else {
    }
    %c0 = arith.constant 0 : index
    %c0_1 = arith.constant 0 : index
    %3 = vector.load %arg2[%c0, %c0_1] : memref<256x6xf32, #tpu.memory_space<vmem>>, vector<256x6xf32>
    %cst = arith.constant 2.000000e+00 : f32
    %4 = vector.broadcast %cst : f32 to vector<256x6xf32>
    %5 = arith.mulf %3, %4 : vector<256x6xf32>
    %6 = vector.extract_strided_slice %5 {offsets = [0, 0], sizes = [256, 3], strides = [1, 1]} : vector<256x6xf32> to vector<256x3xf32>
    %c0_2 = arith.constant 0 : index
    %c0_3 = arith.constant 0 : index
    %7 = vector.load %arg3[%c0_2, %c0_3] : memref<6x32xf32, #tpu.memory_space<vmem>>, vector<6x32xf32>
    %cst_4 = arith.constant dense<0.000000e+00> : vector<256x32xf32>
    %8 = tpu.matmul %5, %7, %cst_4 {dimension_numbers = #tpu.dot_dimension_numbers<[1], [0], [0], [1], [0, 0, 1, 1], [], []>} : vector<256x6xf32>, vector<6x32xf32>, vector<256x32xf32> -> vector<256x32xf32>
    %c0_5 = arith.constant 0 : index
    %c0_6 = arith.constant 0 : index
    %9 = vector.load %arg4[%c0_5, %c0_6] : memref<1x32xf32, #tpu.memory_space<vmem>>, vector<1x32xf32>
    %10 = vector.broadcast %9 : vector<1x32xf32> to vector<256x32xf32>
    %11 = arith.addf %8, %10 : vector<256x32xf32>
    %cst_7 = arith.constant 2.000000e+01 : f32
    %12 = vector.broadcast %cst_7 : f32 to vector<256x32xf32>
    %13 = arith.cmpf ogt, %11, %12 : vector<256x32xf32>
    %cst_8 = arith.constant 2.000000e+01 : f32
    %14 = vector.broadcast %cst_8 : f32 to vector<256x32xf32>
    %15 = arith.minimumf %11, %14 : vector<256x32xf32>
    %16 = math.exp %15 : vector<256x32xf32>
    %17 = math.log1p %16 : vector<256x32xf32>
    %18 = arith.select %13, %11, %17 : vector<256x32xi1>, vector<256x32xf32>
    %c0_9 = arith.constant 0 : index
    %c0_10 = arith.constant 0 : index
    %c0_11 = arith.constant 0 : index
    %19 = vector.load %arg5[%c0_9, %c0_10, %c0_11] : memref<2x32x32xf32, #tpu.memory_space<vmem>>, vector<1x32x32xf32>
    %20 = vector.shape_cast %19 : vector<1x32x32xf32> to vector<32x32xf32>
    %cst_12 = arith.constant dense<0.000000e+00> : vector<256x32xf32>
    %21 = tpu.matmul %18, %20, %cst_12 {dimension_numbers = #tpu.dot_dimension_numbers<[1], [0], [0], [1], [0, 0, 1, 1], [], []>} : vector<256x32xf32>, vector<32x32xf32>, vector<256x32xf32> -> vector<256x32xf32>
    %c0_13 = arith.constant 0 : index
    %c0_14 = arith.constant 0 : index
    %c0_15 = arith.constant 0 : index
    %22 = vector.load %arg6[%c0_13, %c0_14, %c0_15] : memref<2x1x32xf32, #tpu.memory_space<vmem>>, vector<1x1x32xf32>
    %23 = vector.shape_cast %22 : vector<1x1x32xf32> to vector<1x32xf32>
    %24 = vector.broadcast %23 : vector<1x32xf32> to vector<256x32xf32>
    %25 = arith.addf %21, %24 : vector<256x32xf32>
    %cst_16 = arith.constant 2.000000e+01 : f32
    %26 = vector.broadcast %cst_16 : f32 to vector<256x32xf32>
    %27 = arith.cmpf ogt, %25, %26 : vector<256x32xf32>
    %cst_17 = arith.constant 2.000000e+01 : f32
    %28 = vector.broadcast %cst_17 : f32 to vector<256x32xf32>
    %29 = arith.minimumf %25, %28 : vector<256x32xf32>
    %30 = math.exp %29 : vector<256x32xf32>
    %31 = math.log1p %30 : vector<256x32xf32>
    %32 = arith.select %27, %25, %31 : vector<256x32xi1>, vector<256x32xf32>
    %c1 = arith.constant 1 : index
    %c0_18 = arith.constant 0 : index
    %c0_19 = arith.constant 0 : index
    %33 = vector.load %arg5[%c1, %c0_18, %c0_19] : memref<2x32x32xf32, #tpu.memory_space<vmem>>, vector<1x32x32xf32>
    %34 = vector.shape_cast %33 : vector<1x32x32xf32> to vector<32x32xf32>
    %cst_20 = arith.constant dense<0.000000e+00> : vector<256x32xf32>
    %35 = tpu.matmul %32, %34, %cst_20 {dimension_numbers = #tpu.dot_dimension_numbers<[1], [0], [0], [1], [0, 0, 1, 1], [], []>} : vector<256x32xf32>, vector<32x32xf32>, vector<256x32xf32> -> vector<256x32xf32>
    %c1_21 = arith.constant 1 : index
    %c0_22 = arith.constant 0 : index
    %c0_23 = arith.constant 0 : index
    %36 = vector.load %arg6[%c1_21, %c0_22, %c0_23] : memref<2x1x32xf32, #tpu.memory_space<vmem>>, vector<1x1x32xf32>
    %37 = vector.shape_cast %36 : vector<1x1x32xf32> to vector<1x32xf32>
    %38 = vector.broadcast %37 : vector<1x32xf32> to vector<256x32xf32>
    %39 = arith.addf %35, %38 : vector<256x32xf32>
    %cst_24 = arith.constant 2.000000e+01 : f32
    %40 = vector.broadcast %cst_24 : f32 to vector<256x32xf32>
    %41 = arith.cmpf ogt, %39, %40 : vector<256x32xf32>
    %cst_25 = arith.constant 2.000000e+01 : f32
    %42 = vector.broadcast %cst_25 : f32 to vector<256x32xf32>
    %43 = arith.minimumf %39, %42 : vector<256x32xf32>
    %44 = math.exp %43 : vector<256x32xf32>
    %45 = math.log1p %44 : vector<256x32xf32>
    %46 = arith.select %41, %39, %45 : vector<256x32xi1>, vector<256x32xf32>
    %c0_26 = arith.constant 0 : index
    %c0_27 = arith.constant 0 : index
    %47 = vector.load %arg10[%c0_26, %c0_27] : memref<3x32xf32, #tpu.memory_space<vmem>>, vector<3x32xf32>
    %cst_28 = arith.constant dense<0.000000e+00> : vector<3x32xf32>
    %48 = tpu.matmul %6, %46, %cst_28 {dimension_numbers = #tpu.dot_dimension_numbers<[0], [0], [1], [1], [0, 1, 1, 1], [], []>} : vector<256x3xf32>, vector<256x32xf32>, vector<3x32xf32> -> vector<3x32xf32>
    %49 = arith.addf %47, %48 : vector<3x32xf32>
    %c0_29 = arith.constant 0 : index
    %c0_30 = arith.constant 0 : index
    %50 = vector.load %arg10[%c0_29, %c0_30] : memref<3x32xf32, #tpu.memory_space<vmem>>, vector<3x32xf32>
    tpu.vector_store %arg10[%c0_29, %c0_30], %49 {strides = array<i32>} : memref<3x32xf32, #tpu.memory_space<vmem>>, vector<3x32xf32>,
    %c0_31 = arith.constant 0 : index
    %c0_32 = arith.constant 0 : index
    %51 = vector.load %arg11[%c0_31, %c0_32] : memref<1x3xf32, #tpu.memory_space<vmem>>, vector<1x3xf32>
    %cst_33 = arith.constant dense<0.000000e+00> : vector<3xf32>
    %52 = vector.multi_reduction <add>, %6, %cst_33 [0] : vector<256x3xf32> to vector<3xf32>
    %53 = vector.shape_cast %52 : vector<3xf32> to vector<1x3xf32>
    %54 = arith.addf %51, %53 : vector<1x3xf32>
    %c0_34 = arith.constant 0 : index
    %c0_35 = arith.constant 0 : index
    %55 = vector.load %arg11[%c0_34, %c0_35] : memref<1x3xf32, #tpu.memory_space<vmem>>, vector<1x3xf32>
    tpu.vector_store %arg11[%c0_34, %c0_35], %54 {strides = array<i32>} : memref<1x3xf32, #tpu.memory_space<vmem>>, vector<1x3xf32>,
    %c0_i32_36 = arith.constant 0 : i32
    %56 = arith.cmpi eq, %arg1, %c0_i32_36 : i32
    %57 = arith.extui %56 : i1 to i32
    %c0_i32_37 = arith.constant 0 : i32
    %58 = arith.cmpi ne, %57, %c0_i32_37 : i32
    scf.if %58 {
      %c0_38 = arith.constant 0 : index
      %c0_39 = arith.constant 0 : index
      %59 = vector.load %arg10[%c0_38, %c0_39] : memref<3x32xf32, #tpu.memory_space<vmem>>, vector<3x32xf32>
      %c0_40 = arith.constant 0 : index
      %c0_41 = arith.constant 0 : index
      %60 = vector.load %arg11[%c0_40, %c0_41] : memref<1x3xf32, #tpu.memory_space<vmem>>, vector<1x3xf32>
      %c0_42 = arith.constant 0 : index
      %c0_43 = arith.constant 0 : index
      %61 = vector.load %arg8[%c0_42, %c0_43] : memref<3x128xf32, #tpu.memory_space<vmem>>, vector<3x128xf32>
      %cst_44 = arith.constant dense<0.000000e+00> : vector<1x128xf32>
      %62 = tpu.matmul %60, %61, %cst_44 {dimension_numbers = #tpu.dot_dimension_numbers<[1], [0], [0], [1], [0, 0, 1, 1], [], []>} : vector<1x3xf32>, vector<3x128xf32>, vector<1x128xf32> -> vector<1x128xf32>
      %63 = vector.extract_strided_slice %59 {offsets = [0, 0], sizes = [1, 32], strides = [1, 1]} : vector<3x32xf32> to vector<1x32xf32>
      %c0_45 = arith.constant 0 : index
      %c0_46 = arith.constant 0 : index
      %c0_47 = arith.constant 0 : index
      %64 = vector.load %arg7[%c0_45, %c0_46, %c0_47] : memref<3x32x128xf32, #tpu.memory_space<vmem>>, vector<1x32x128xf32>
      %65 = vector.shape_cast %64 : vector<1x32x128xf32> to vector<32x128xf32>
      %cst_48 = arith.constant dense<0.000000e+00> : vector<1x128xf32>
      %66 = tpu.matmul %63, %65, %cst_48 {dimension_numbers = #tpu.dot_dimension_numbers<[1], [0], [0], [1], [0, 0, 1, 1], [], []>} : vector<1x32xf32>, vector<32x128xf32>, vector<1x128xf32> -> vector<1x128xf32>
      %67 = arith.addf %62, %66 : vector<1x128xf32>
      %68 = vector.extract_strided_slice %59 {offsets = [1, 0], sizes = [1, 32], strides = [1, 1]} : vector<3x32xf32> to vector<1x32xf32>
      %c1_49 = arith.constant 1 : index
      %c0_50 = arith.constant 0 : index
      %c0_51 = arith.constant 0 : index
      %69 = vector.load %arg7[%c1_49, %c0_50, %c0_51] : memref<3x32x128xf32, #tpu.memory_space<vmem>>, vector<1x32x128xf32>
      %70 = vector.shape_cast %69 : vector<1x32x128xf32> to vector<32x128xf32>
      %cst_52 = arith.constant dense<0.000000e+00> : vector<1x128xf32>
      %71 = tpu.matmul %68, %70, %cst_52 {dimension_numbers = #tpu.dot_dimension_numbers<[1], [0], [0], [1], [0, 0, 1, 1], [], []>} : vector<1x32xf32>, vector<32x128xf32>, vector<1x128xf32> -> vector<1x128xf32>
      %72 = arith.addf %67, %71 : vector<1x128xf32>
      %73 = vector.extract_strided_slice %59 {offsets = [2, 0], sizes = [1, 32], strides = [1, 1]} : vector<3x32xf32> to vector<1x32xf32>
      %c2 = arith.constant 2 : index
      %c0_53 = arith.constant 0 : index
      %c0_54 = arith.constant 0 : index
      %74 = vector.load %arg7[%c2, %c0_53, %c0_54] : memref<3x32x128xf32, #tpu.memory_space<vmem>>, vector<1x32x128xf32>
      %75 = vector.shape_cast %74 : vector<1x32x128xf32> to vector<32x128xf32>
      %cst_55 = arith.constant dense<0.000000e+00> : vector<1x128xf32>
      %76 = tpu.matmul %73, %75, %cst_55 {dimension_numbers = #tpu.dot_dimension_numbers<[1], [0], [0], [1], [0, 0, 1, 1], [], []>} : vector<1x32xf32>, vector<32x128xf32>, vector<1x128xf32> -> vector<1x128xf32>
      %77 = arith.addf %72, %76 : vector<1x128xf32>
      %cst_56 = arith.constant 6.51041686E-4 : f32
      %78 = vector.broadcast %cst_56 : f32 to vector<1x128xf32>
      %79 = arith.mulf %77, %78 : vector<1x128xf32>
      %80 = vector.shape_cast %79 : vector<1x128xf32> to vector<1x128xf32>
      %81 = vector.broadcast %80 : vector<1x128xf32> to vector<8x128xf32>
      %c0_57 = arith.constant 0 : index
      %c0_58 = arith.constant 0 : index
      %c0_59 = arith.constant 0 : index
      %82 = vector.load %arg9[%c0_57, %c0_58, %c0_59] : memref<1x8x128xf32, #tpu.memory_space<vmem>>, vector<1x8x128xf32>
      %83 = vector.shape_cast %82 : vector<1x8x128xf32> to vector<8x128xf32>
      %84 = vector.shape_cast %81 : vector<8x128xf32> to vector<1x8x128xf32>
      tpu.vector_store %arg9[%c0_57, %c0_58, %c0_59], %84 {strides = array<i32>} : memref<1x8x128xf32, #tpu.memory_space<vmem>>, vector<1x8x128xf32>,
    } else {
    }
    return
  }
  func.func @transform_0(%arg0: i32, %arg1: i32) -> (i32, i32) {
    %c1_i32 = arith.constant 1 : i32
    %0 = arith.muli %arg0, %c1_i32 : i32
    %1 = arith.addi %0, %arg1 : i32
    %c0_i32 = arith.constant 0 : i32
    %c0_i32_0 = arith.constant 0 : i32
    return %1, %c0_i32 : i32, i32
  }
  func.func @transform_1(%arg0: i32, %arg1: i32) -> (i32, i32) {
    %c0_i32 = arith.constant 0 : i32
    %c0_i32_0 = arith.constant 0 : i32
    %c0_i32_1 = arith.constant 0 : i32
    return %c0_i32, %c0_i32_0 : i32, i32
  }
  func.func @transform_2(%arg0: i32, %arg1: i32) -> (i32, i32) {
    %c0_i32 = arith.constant 0 : i32
    %c0_i32_0 = arith.constant 0 : i32
    %c0_i32_1 = arith.constant 0 : i32
    return %c0_i32, %c0_i32_0 : i32, i32
  }
  func.func @transform_3(%arg0: i32, %arg1: i32) -> (i32, i32, i32) {
    %c0_i32 = arith.constant 0 : i32
    %c0_i32_0 = arith.constant 0 : i32
    %c0_i32_1 = arith.constant 0 : i32
    %c0_i32_2 = arith.constant 0 : i32
    return %c0_i32, %c0_i32_0, %c0_i32_1 : i32, i32, i32
  }
  func.func @transform_4(%arg0: i32, %arg1: i32) -> (i32, i32, i32) {
    %c0_i32 = arith.constant 0 : i32
    %c0_i32_0 = arith.constant 0 : i32
    %c0_i32_1 = arith.constant 0 : i32
    %c0_i32_2 = arith.constant 0 : i32
    return %c0_i32, %c0_i32_0, %c0_i32_1 : i32, i32, i32
  }
  func.func @transform_5(%arg0: i32, %arg1: i32) -> (i32, i32, i32) {
    %c0_i32 = arith.constant 0 : i32
    %c0_i32_0 = arith.constant 0 : i32
    %c0_i32_1 = arith.constant 0 : i32
    %c0_i32_2 = arith.constant 0 : i32
    return %c0_i32, %c0_i32_0, %c0_i32_1 : i32, i32, i32
  }
  func.func @transform_6(%arg0: i32, %arg1: i32) -> (i32, i32) {
    %c0_i32 = arith.constant 0 : i32
    %c0_i32_0 = arith.constant 0 : i32
    %c0_i32_1 = arith.constant 0 : i32
    return %c0_i32, %c0_i32_0 : i32, i32
  }
  func.func @transform_7(%arg0: i32, %arg1: i32) -> (i32, i32, i32) {
    %c0_i32 = arith.constant 0 : i32
    %c0_i32_0 = arith.constant 0 : i32
    %c0_i32_1 = arith.constant 0 : i32
    return %arg0, %c0_i32, %c0_i32_0 : i32, i32, i32
  }
}

</mosaic_0001>

<llo_original>
// kernel: tpu_custom_call.1
$region0: #{tpu_custom_call.1}
  #allocation0 [shape = 'u32[]', space=smem, size = 0x4, offset = 0x4, fixed_abs, tag = 'smem constant byte address 0x4 - core index']
  #allocation1 [shape = 'u32[144,128]{1,0:T(1,128)}', space=vmem, size = 0x12000, scoped, tag = 'internal scratch']
  #allocation2 [shape = 'f32[3,32]{1,0:T(4,128)}', space=vmem, size = 0x800, scoped, tag = 'scratch operand']
  #allocation3 [shape = 'f32[1,3]{1,0:T(1,128)}', space=vmem, size = 0x200, scoped, tag = 'scratch operand']
  %s0 = inlined_call_operand.vmem [shape: f32[512,6], index: 0, kind: input, shape index: {}]
  %s1 = inlined_call_operand.vmem [shape: f32[6,32], index: 1, kind: input, shape index: {}]
  %s2 = inlined_call_operand.vmem [shape: f32[1,32], index: 2, kind: input, shape index: {}]
  %s3 = inlined_call_operand.vmem [shape: f32[2,32,32], index: 3, kind: input, shape index: {}]
  %s4 = inlined_call_operand.vmem [shape: f32[2,1,32], index: 4, kind: input, shape index: {}]
  %s5 = inlined_call_operand.vmem [shape: f32[3,32,128], index: 5, kind: input, shape index: {}]
  %s6 = inlined_call_operand.vmem [shape: f32[3,128], index: 6, kind: input, shape index: {}]
  %s7 = inlined_call_operand.hbm [shape: f32[2,8,128], index: 7, kind: output, shape index: {}]
  %s8 = sld [smem:[#allocation0]]
  $region69: #{tpu_custom_call.1} parent=0
    _
  %s10 = ssub.s32 1, %s8
  %s11 = scalar_select 0, %s10, %s8
  $region1: #{tpu_custom_call.1} parent=0
    #allocation4 [shape = 'u8[8192]{0}', space=vmem, size = 0x2000, scoped, tag = 'output window, operand 0']
    #allocation5 [shape = 's32[2]{0}', space=sflag, size = 0x8, scoped, tag = 'scoped memory for tpu_custom_call.1']
    %12 = vsyncpa [#allocation5], 0
    %s13 = scalar_lea.sflag [#allocation5], 1
    %14 = vsyncpa %s13, 0
    loop: start=0, step=1, limit=4
    $region2: #{tpu_custom_call.1} parent=1 // loop_pre_header
      _
    $region3: #{tpu_custom_call.1} parent=1 // loop_header
      %s16 = sphi 0, %s20
      %p17 = scmp.ge.s32.totalorder %s16, 4
      %s23 = sphi 0, %s35
      %s24 = sphi 0, %s31
      %s25 = sphi 0, %s23
      %s26 = sphi 0, %s24
      %s27 = sphi 0, %s25
      %s28 = sphi 0, %s26
      %s40 = sphi 0, %s42
      %s43 = sphi 0, %s40
      %s44 = sphi 0, %s43
      %s60 = sphi 0, %s44
      %s64 = sphi 0, %s64
      %s66 = sphi 0, %s64
      %s67 = sphi 0, %s66
      %s81 = sphi 0, %s67
      %s85 = sphi 0, %s85
      %s87 = sphi 0, %s85
      %s88 = sphi 0, %s87
      %s102 = sphi 0, %s88
      %s106 = sphi 0, %s106
      %s108 = sphi 0, %s106
      %s109 = sphi 0, %s108
      %s123 = sphi 0, %s109
      %s127 = sphi 0, %s127
      %s129 = sphi 0, %s127
      %s130 = sphi 0, %s129
      %s144 = sphi 0, %s130
      %s148 = sphi 0, %s148
      %s150 = sphi 0, %s148
      %s151 = sphi 0, %s150
      %s165 = sphi 0, %s151
      %s169 = sphi 0, %s169
      %s171 = sphi 0, %s169
      %s172 = sphi 0, %s171
      %s186 = sphi 0, %s172
      %s192 = sphi 0, %s194
      %s195 = sphi 0, %s192
      %s196 = sphi 0, %s195
      %s212 = sphi 0, %s196
    $region4: #{tpu_custom_call.1} parent=1 // loop_header_branch
      %19 = sbr.rel (%p17) target = $region8
    $region5: #{tpu_custom_call.1} parent=1 // loop_body
      %s21 = ssub.s32 %s16, 1
      %s22 = ssub.s32 %s16, 2
      %s29 = sadd.s32 1, %s24
      %p30 = scmp.ge.s32.totalorder %s29, 1
      %s31 = scalar_select %p30, 0, %s29
      %s32 = sadd.s32 1, %s23
      %s33 = scalar_select %p30, %s32, %s23
      %p34 = scmp.ge.s32.totalorder %s33, 2
      %s35 = scalar_select %p34, 0, %s33
      %s36 = sadd.s32 %s23, %s24
      %s37 = sadd.s32 %s35, %s31
      %s38 = ssub.s32 %s36, %s37
      %p39 = scmp.eq.s32.totalorder %s38, 0
      %s41 = sadd.s32 %s40, 1
      %s42 = scalar_select %p39, %s40, %s41
      %p45 = pneg %p39
      %p46 = scmp.eq.s32.totalorder %s16, 1
      %p47 = por %p45, %p46
      %p48 = scmp.ne.s32.totalorder %s40, %s43
      %p49 = scmp.eq.s32.totalorder %s16, 0
      %p50 = por %p48, %p49
      %p51 = scmp.ne.s32.totalorder %s40, %s43
      %p52 = scmp.eq.s32.totalorder %s21, 1
      %p53 = por %p51, %p52
      %p54 = scmp.ne.s32.totalorder %s43, %s44
      %p55 = scmp.eq.s32.totalorder %s21, 0
      %p56 = por %p54, %p55
      %p57 = scmp.ne.s32.totalorder %s43, %s44
      %p58 = scmp.eq.s32.totalorder %s22, 1
      %p59 = por %p57, %p58
      %p61 = scmp.ne.s32.totalorder %s44, %s60
      %p62 = scmp.eq.s32.totalorder %s22, 0
      %p63 = por %p61, %p62
      %s65 = sadd.s32 %s64, 1
      %p68 = scmp.eq.s32.totalorder %s16, 1
      %p69 = scmp.ne.s32.totalorder %s64, %s66
      %p70 = scmp.eq.s32.totalorder %s16, 0
      %p71 = por %p69, %p70
      %p72 = scmp.ne.s32.totalorder %s64, %s66
      %p73 = scmp.eq.s32.totalorder %s21, 1
      %p74 = por %p72, %p73
      %p75 = scmp.ne.s32.totalorder %s66, %s67
      %p76 = scmp.eq.s32.totalorder %s21, 0
      %p77 = por %p75, %p76
      %p78 = scmp.ne.s32.totalorder %s66, %s67
      %p79 = scmp.eq.s32.totalorder %s22, 1
      %p80 = por %p78, %p79
      %p82 = scmp.ne.s32.totalorder %s67, %s81
      %p83 = scmp.eq.s32.totalorder %s22, 0
      %p84 = por %p82, %p83
      %s86 = sadd.s32 %s85, 1
      %p89 = scmp.eq.s32.totalorder %s16, 1
      %p90 = scmp.ne.s32.totalorder %s85, %s87
      %p91 = scmp.eq.s32.totalorder %s16, 0
      %p92 = por %p90, %p91
      %p93 = scmp.ne.s32.totalorder %s85, %s87
      %p94 = scmp.eq.s32.totalorder %s21, 1
      %p95 = por %p93, %p94
      %p96 = scmp.ne.s32.totalorder %s87, %s88
      %p97 = scmp.eq.s32.totalorder %s21, 0
      %p98 = por %p96, %p97
      %p99 = scmp.ne.s32.totalorder %s87, %s88
      %p100 = scmp.eq.s32.totalorder %s22, 1
      %p101 = por %p99, %p100
      %p103 = scmp.ne.s32.totalorder %s88, %s102
      %p104 = scmp.eq.s32.totalorder %s22, 0
      %p105 = por %p103, %p104
      %s107 = sadd.s32 %s106, 1
      %p110 = scmp.eq.s32.totalorder %s16, 1
      %p111 = scmp.ne.s32.totalorder %s106, %s108
      %p112 = scmp.eq.s32.totalorder %s16, 0
      %p113 = por %p111, %p112
      %p114 = scmp.ne.s32.totalorder %s106, %s108
      %p115 = scmp.eq.s32.totalorder %s21, 1
      %p116 = por %p114, %p115
      %p117 = scmp.ne.s32.totalorder %s108, %s109
      %p118 = scmp.eq.s32.totalorder %s21, 0
      %p119 = por %p117, %p118
      %p120 = scmp.ne.s32.totalorder %s108, %s109
      %p121 = scmp.eq.s32.totalorder %s22, 1
      %p122 = por %p120, %p121
      %p124 = scmp.ne.s32.totalorder %s109, %s123
      %p125 = scmp.eq.s32.totalorder %s22, 0
      %p126 = por %p124, %p125
      %s128 = sadd.s32 %s127, 1
      %p131 = scmp.eq.s32.totalorder %s16, 1
      %p132 = scmp.ne.s32.totalorder %s127, %s129
      %p133 = scmp.eq.s32.totalorder %s16, 0
      %p134 = por %p132, %p133
      %p135 = scmp.ne.s32.totalorder %s127, %s129
      %p136 = scmp.eq.s32.totalorder %s21, 1
      %p137 = por %p135, %p136
      %p138 = scmp.ne.s32.totalorder %s129, %s130
      %p139 = scmp.eq.s32.totalorder %s21, 0
      %p140 = por %p138, %p139
      %p141 = scmp.ne.s32.totalorder %s129, %s130
      %p142 = scmp.eq.s32.totalorder %s22, 1
      %p143 = por %p141, %p142
      %p145 = scmp.ne.s32.totalorder %s130, %s144
      %p146 = scmp.eq.s32.totalorder %s22, 0
      %p147 = por %p145, %p146
      %s149 = sadd.s32 %s148, 1
      %p152 = scmp.eq.s32.totalorder %s16, 1
      %p153 = scmp.ne.s32.totalorder %s148, %s150
      %p154 = scmp.eq.s32.totalorder %s16, 0
      %p155 = por %p153, %p154
      %p156 = scmp.ne.s32.totalorder %s148, %s150
      %p157 = scmp.eq.s32.totalorder %s21, 1
      %p158 = por %p156, %p157
      %p159 = scmp.ne.s32.totalorder %s150, %s151
      %p160 = scmp.eq.s32.totalorder %s21, 0
      %p161 = por %p159, %p160
      %p162 = scmp.ne.s32.totalorder %s150, %s151
      %p163 = scmp.eq.s32.totalorder %s22, 1
      %p164 = por %p162, %p163
      %p166 = scmp.ne.s32.totalorder %s151, %s165
      %p167 = scmp.eq.s32.totalorder %s22, 0
      %p168 = por %p166, %p167
      %s170 = sadd.s32 %s169, 1
      %p173 = scmp.eq.s32.totalorder %s16, 1
      %p174 = scmp.ne.s32.totalorder %s169, %s171
      %p175 = scmp.eq.s32.totalorder %s16, 0
      %p176 = por %p174, %p175
      %p177 = scmp.ne.s32.totalorder %s169, %s171
      %p178 = scmp.eq.s32.totalorder %s21, 1
      %p179 = por %p177, %p178
      %p180 = scmp.ne.s32.totalorder %s171, %s172
      %p181 = scmp.eq.s32.totalorder %s21, 0
      %p182 = por %p180, %p181
      %p183 = scmp.ne.s32.totalorder %s171, %s172
      %p184 = scmp.eq.s32.totalorder %s22, 1
      %p185 = por %p183, %p184
      %p187 = scmp.ne.s32.totalorder %s172, %s186
      %p188 = scmp.eq.s32.totalorder %s22, 0
      %p189 = por %p187, %p188
      %s190 = ssub.s32 %s23, %s35
      %p191 = scmp.eq.s32.totalorder %s190, 0
      %s193 = sadd.s32 %s192, 1
      %s194 = scalar_select %p191, %s192, %s193
      %p197 = pneg %p191
      %p198 = scmp.eq.s32.totalorder %s16, 1
      %p199 = por %p197, %p198
      %p200 = scmp.ne.s32.totalorder %s192, %s195
      %p201 = scmp.eq.s32.totalorder %s16, 0
      %p202 = por %p200, %p201
      %p203 = scmp.ne.s32.totalorder %s192, %s195
      %p204 = scmp.eq.s32.totalorder %s21, 1
      %p205 = por %p203, %p204
      %p206 = scmp.ne.s32.totalorder %s195, %s196
      %p207 = scmp.eq.s32.totalorder %s21, 0
      %p208 = por %p206, %p207
      %p209 = scmp.ne.s32.totalorder %s195, %s196
      %p210 = scmp.eq.s32.totalorder %s22, 1
      %p211 = por %p209, %p210
      %p213 = scmp.ne.s32.totalorder %s196, %s212
      %p214 = scmp.eq.s32.totalorder %s22, 0
      %p215 = por %p213, %p214
      %p216 = scmp.le.s32.totalorder 1, %s16
      %p217 = scmp.lt.s32.totalorder %s16, 3
      %p218 = pnand %p216, %p217
      %p219 = pneg %p218
      // Predicated region
      $region9: #{tpu_custom_call.1} parent=5 // pred_check
        _
      $region10: #{tpu_custom_call.1} parent=5 // pred_check_branch
        %221 = sbr.rel (%p218) target = $region12
      $region11: #{tpu_custom_call.1} parent=5 // pred_region
        %s222 = ssub.s32 %s16, 1
        // Predicated region
        $region13: #{tpu_custom_call.1} parent=11 // pred_check
          %p223 = pneg %p77
        $region14: #{tpu_custom_call.1} parent=11 // pred_check_branch
          %225 = sbr.rel (%p223) target = $region16
        $region15: #{tpu_custom_call.1} parent=11 // pred_region
          _
        $region16: #{tpu_custom_call.1} parent=11 // pred_fallthru
          _
        // Predicated region
        $region17: #{tpu_custom_call.1} parent=11 // pred_check
          %p226 = pneg %p98
        $region18: #{tpu_custom_call.1} parent=11 // pred_check_branch
          %228 = sbr.rel (%p226) target = $region20
        $region19: #{tpu_custom_call.1} parent=11 // pred_region
          _
        $region20: #{tpu_custom_call.1} parent=11 // pred_fallthru
          _
        // Predicated region
        $region21: #{tpu_custom_call.1} parent=11 // pred_check
          %p229 = pneg %p119
        $region22: #{tpu_custom_call.1} parent=11 // pred_check_branch
          %231 = sbr.rel (%p229) target = $region24
        $region23: #{tpu_custom_call.1} parent=11 // pred_region
          _
        $region24: #{tpu_custom_call.1} parent=11 // pred_fallthru
          _
        // Predicated region
        $region25: #{tpu_custom_call.1} parent=11 // pred_check
          %p232 = pneg %p140
        $region26: #{tpu_custom_call.1} parent=11 // pred_check_branch
          %234 = sbr.rel (%p232) target = $region28
        $region27: #{tpu_custom_call.1} parent=11 // pred_region
          _
        $region28: #{tpu_custom_call.1} parent=11 // pred_fallthru
          _
        // Predicated region
        $region29: #{tpu_custom_call.1} parent=11 // pred_check
          %p235 = pneg %p161
        $region30: #{tpu_custom_call.1} parent=11 // pred_check_branch
          %237 = sbr.rel (%p235) target = $region32
        $region31: #{tpu_custom_call.1} parent=11 // pred_region
          _
        $region32: #{tpu_custom_call.1} parent=11 // pred_fallthru
          _
        // Predicated region
        $region33: #{tpu_custom_call.1} parent=11 // pred_check
          %p238 = pneg %p182
        $region34: #{tpu_custom_call.1} parent=11 // pred_check_branch
          %240 = sbr.rel (%p238) target = $region36
        $region35: #{tpu_custom_call.1} parent=11 // pred_region
          _
        $region36: #{tpu_custom_call.1} parent=11 // pred_fallthru
          _
      $region12: #{tpu_custom_call.1} parent=5 // pred_fallthru
        _
      %p241 = scmp.lt.s32.totalorder %s16, 2
      // Predicated region
      $region37: #{tpu_custom_call.1} parent=5 // pred_check
        %p242 = pneg %p241
      $region38: #{tpu_custom_call.1} parent=5 // pred_check_branch
        %244 = sbr.rel (%p242) target = $region40
      $region39: #{tpu_custom_call.1} parent=5 // pred_region
        // Predicated region
        $region41: #{tpu_custom_call.1} parent=39 // pred_check
          %p245 = pneg %p50
        $region42: #{tpu_custom_call.1} parent=39 // pred_check_branch
          %247 = sbr.rel (%p245) target = $region44
        $region43: #{tpu_custom_call.1} parent=39 // pred_region
          %s248 = sadd.s32 %s23, %s24
          %s249 = smul.u32 32, %s248
          %p250 = scmp.lt.s32.totalorder %s249, 63
          %s251 = scalar_select %p250, %s249, 63
          %s252 = smul.addr %s251, 8
          %s253 = scalar_lea.vmem %s0, %s252
          %s254 = sadd.s32 %s23, %s24
          %s255 = smul.u32 32, %s254
        $region44: #{tpu_custom_call.1} parent=39 // pred_fallthru
          _
      $region40: #{tpu_custom_call.1} parent=5 // pred_fallthru
        _
      %p256 = scmp.le.s32.totalorder 1, %s16
      %p257 = scmp.lt.s32.totalorder %s16, 3
      %p258 = pnand %p256, %p257
      %p259 = pneg %p258
      // Predicated region
      $region45: #{tpu_custom_call.1} parent=5 // pred_check
        _
      $region46: #{tpu_custom_call.1} parent=5 // pred_check_branch
        %261 = sbr.rel (%p258) target = $region48
      $region47: #{tpu_custom_call.1} parent=5 // pred_region
        %s262 = ssub.s32 %s16, 1
        %s263 = sadd.s32 %s25, %s26
        %s264 = smul.u32 32, %s263
        %p265 = scmp.lt.s32.totalorder %s264, 63
        %s266 = scalar_select %p265, %s264, 63
        %s267 = smul.addr %s266, 8
        %s268 = scalar_lea.vmem %s0, %s267
        %p269 = pneg %p56
        %p270 = pneg %p53
        %p271 = pneg %p77
        %p272 = pneg %p74
        %p273 = pneg %p98
        %p274 = pneg %p95
        %p275 = pneg %p119
        %p276 = pneg %p116
        %p277 = pneg %p140
        %p278 = pneg %p137
        %p279 = pneg %p161
        %p280 = pneg %p158
        %p281 = pneg %p182
        %p282 = pneg %p179
        %p283 = pneg %p208
        %p284 = pneg %p205
        %s285 = sand.u32 %s195, 1
        %s286 = scalar_lea.sflag [#allocation5], %s285
        %s287 = sand.u32 %s195, 1
        %s288 = smul.addr %s287, 8
        %s289 = scalar_lea.vmem [#allocation4], %s288
        %s290 = sadd.s32 %s25, %s26
        %s291 = smul.u32 32, %s290
        %p292 = scmp.lt.s32.totalorder %s291, 63
        %s293 = scalar_select %p292, %s291, 63
        %s294 = smul.addr %s293, 8
        %s295 = scalar_lea.vmem %s0, %s294
        %s296 = sadd.s32 %s25, %s26
        %s297 = smul.u32 32, %s296
        %p298 = scmp.eq.s32.totalorder %s26, 0
        // Predicated region
        $region49: #{tpu_custom_call.1} parent=47 // pred_check
          %p299 = pneg %p298
        $region50: #{tpu_custom_call.1} parent=47 // pred_check_branch
          %301 = sbr.rel (%p299) target = $region52
        $region51: #{tpu_custom_call.1} parent=47 // pred_region
          %vm302 = vcmask 256000
          %303 = vst.msk [vmem:[#allocation2] sm:$0x7] %vm302, 0.0
          %vm304 = vcmask 16384
          %305 = vst.msk [vmem:[#allocation3] sm:$0x1] %vm304, 0.0
        $region52: #{tpu_custom_call.1} parent=47 // pred_fallthru
          _
        %v306 = vld [vmem:[%s295] sm:$0xff]
        %v307 = vld [vmem:[%s295 + $0x8] sm:$0xff]
        %v308 = vld [vmem:[%s295 + $0x10] sm:$0xff]
        %v309 = vld [vmem:[%s295 + $0x18] sm:$0xff]
        %v310 = vld [vmem:[%s295 + $0x20] sm:$0xff]
        %v311 = vld [vmem:[%s295 + $0x28] sm:$0xff]
        %v312 = vld [vmem:[%s295 + $0x30] sm:$0xff]
        %v313 = vld [vmem:[%s295 + $0x38] sm:$0xff]
        %v314 = vld [vmem:[%s295 + $0x40] sm:$0xff]
        %v315 = vld [vmem:[%s295 + $0x48] sm:$0xff]
        %v316 = vld [vmem:[%s295 + $0x50] sm:$0xff]
        %v317 = vld [vmem:[%s295 + $0x58] sm:$0xff]
        %v318 = vld [vmem:[%s295 + $0x60] sm:$0xff]
        %v319 = vld [vmem:[%s295 + $0x68] sm:$0xff]
        %v320 = vld [vmem:[%s295 + $0x70] sm:$0xff]
        %v321 = vld [vmem:[%s295 + $0x78] sm:$0xff]
        %v322 = vld [vmem:[%s295 + $0x80] sm:$0xff]
        %v323 = vld [vmem:[%s295 + $0x88] sm:$0xff]
        %v324 = vld [vmem:[%s295 + $0x90] sm:$0xff]
        %v325 = vld [vmem:[%s295 + $0x98] sm:$0xff]
        %v326 = vld [vmem:[%s295 + $0xa0] sm:$0xff]
        %v327 = vld [vmem:[%s295 + $0xa8] sm:$0xff]
        %v328 = vld [vmem:[%s295 + $0xb0] sm:$0xff]
        %v329 = vld [vmem:[%s295 + $0xb8] sm:$0xff]
        %v330 = vld [vmem:[%s295 + $0xc0] sm:$0xff]
        %v331 = vld [vmem:[%s295 + $0xc8] sm:$0xff]
        %v332 = vld [vmem:[%s295 + $0xd0] sm:$0xff]
        %v333 = vld [vmem:[%s295 + $0xd8] sm:$0xff]
        %v334 = vld [vmem:[%s295 + $0xe0] sm:$0xff]
        %v335 = vld [vmem:[%s295 + $0xe8] sm:$0xff]
        %v336 = vld [vmem:[%s295 + $0xf0] sm:$0xff]
        %v337 = vld [vmem:[%s295 + $0xf8] sm:$0xff]
        %v338 = vmul.f32 %v306, 2.0
        %v339 = vmul.f32 %v307, 2.0
        %v340 = vmul.f32 %v308, 2.0
        %v341 = vmul.f32 %v309, 2.0
        %v342 = vmul.f32 %v310, 2.0
        %v343 = vmul.f32 %v311, 2.0
        %v344 = vmul.f32 %v312, 2.0
        %v345 = vmul.f32 %v313, 2.0
        %v346 = vmul.f32 %v314, 2.0
        %v347 = vmul.f32 %v315, 2.0
        %v348 = vmul.f32 %v316, 2.0
        %v349 = vmul.f32 %v317, 2.0
        %v350 = vmul.f32 %v318, 2.0
        %v351 = vmul.f32 %v319, 2.0
        %v352 = vmul.f32 %v320, 2.0
        %v353 = vmul.f32 %v321, 2.0
        %v354 = vmul.f32 %v322, 2.0
        %v355 = vmul.f32 %v323, 2.0
        %v356 = vmul.f32 %v324, 2.0
        %v357 = vmul.f32 %v325, 2.0
        %v358 = vmul.f32 %v326, 2.0
        %v359 = vmul.f32 %v327, 2.0
        %v360 = vmul.f32 %v328, 2.0
        %v361 = vmul.f32 %v329, 2.0
        %v362 = vmul.f32 %v330, 2.0
        %v363 = vmul.f32 %v331, 2.0
        %v364 = vmul.f32 %v332, 2.0
        %v365 = vmul.f32 %v333, 2.0
        %v366 = vmul.f32 %v334, 2.0
        %v367 = vmul.f32 %v335, 2.0
        %v368 = vmul.f32 %v336, 2.0
        %v369 = vmul.f32 %v337, 2.0
        %v370 = vld [vmem:[%s1] sm:$0x3f]
        %v371 = vld [vmem:[%s2] sm:$0x1]
        %v373 = vlaneseq
        %v374 = vshrl.u32 %v373, 7
        %v375 = vsub.s32 0, %v374
        %v376 = vrot.slane %v371, %v375
        %vm378 = vcmask 48128
        %v380 = vsel %vm378, %v338, 0
        %v383 = vsel %vm378, %v339, 0
        %v386 = vsel %vm378, %v340, 0
        %v389 = vsel %vm378, %v341, 0
        %v392 = vsel %vm378, %v342, 0
        %v395 = vsel %vm378, %v343, 0
        %v398 = vsel %vm378, %v344, 0
        %v401 = vsel %vm378, %v345, 0
        %v404 = vsel %vm378, %v346, 0
        %v407 = vsel %vm378, %v347, 0
        %v410 = vsel %vm378, %v348, 0
        %v413 = vsel %vm378, %v349, 0
        %v416 = vsel %vm378, %v350, 0
        %v419 = vsel %vm378, %v351, 0
        %v422 = vsel %vm378, %v352, 0
        %v425 = vsel %vm378, %v353, 0
        %v428 = vsel %vm378, %v354, 0
        %v431 = vsel %vm378, %v355, 0
        %v434 = vsel %vm378, %v356, 0
        %v437 = vsel %vm378, %v357, 0
        %v440 = vsel %vm378, %v358, 0
        %v443 = vsel %vm378, %v359, 0
        %v446 = vsel %vm378, %v360, 0
        %v449 = vsel %vm378, %v361, 0
        %v452 = vsel %vm378, %v362, 0
        %v455 = vsel %vm378, %v363, 0
        %v458 = vsel %vm378, %v364, 0
        %v461 = vsel %vm378, %v365, 0
        %v464 = vsel %vm378, %v366, 0
        %v467 = vsel %vm378, %v367, 0
        %v470 = vsel %vm378, %v368, 0
        %v473 = vsel %vm378, %v369, 0
        %vm475 = vcmask 1045504
        %v477 = vsel %vm475, %v370, 0
        %479 = vmatprep.subr.mxu0 0.0
        %480 = vmatpush1.msra.mxu0 %v477
        %481 = vmatprep.subr.mxu0 0.0
        %482 = vmatpush1.msra.mxu0 0.0
        %483 = vmatprep.subr.mxu0 0.0
        %484 = vmatpush1.msra.mxu0 0.0
        %485 = vmatprep.subr.mxu0 0.0
        %486 = vmatpush1.msra.mxu0 0.0
        %487 = vmatprep.subr.mxu0 0.0
        %488 = vmatpush1.msra.mxu0 0.0
        %489 = vmatprep.subr.mxu0 0.0
        %490 = vmatpush1.msra.mxu0 0.0
        %491 = vmatprep.subr.mxu0 0.0
        %492 = vmatpush1.msra.mxu0 0.0
        %493 = vmatprep.subr.mxu0 0.0
        %494 = vmatpush1.msra.mxu0 0.0
        %495 = vmatprep.subr.mxu0 0.0
        %496 = vmatpush1.msra.mxu0 0.0
        %497 = vmatprep.subr.mxu0 0.0
        %498 = vmatpush1.msra.mxu0 0.0
        %499 = vmatprep.subr.mxu0 0.0
        %500 = vmatpush1.msra.mxu0 0.0
        %501 = vmatprep.subr.mxu0 0.0
        %502 = vmatpush1.msra.mxu0 0.0
        %503 = vmatprep.subr.mxu0 0.0
        %504 = vmatpush1.msra.mxu0 0.0
        %505 = vmatprep.subr.mxu0 0.0
        %506 = vmatpush1.msra.mxu0 0.0
        %507 = vmatprep.subr.mxu0 0.0
        %508 = vmatpush1.msra.mxu0 0.0
        %509 = vmatprep.subr.mxu0 0.0
        %510 = vmatpush1.msra.mxu0 0.0
        %511 = vmatprep.subr.mxu0 0.0
        %512 = vmatpush1.msra.mxu0 0.0
        %513 = vmatprep.subr.mxu0 0.0
        %514 = vmatpush1.msra.mxu0 0.0
        %515 = vmatprep.subr.mxu0 0.0
        %516 = vmatpush1.msra.mxu0 0.0
        %517 = vmatprep.subr.mxu0 0.0
        %518 = vmatpush1.msra.mxu0 0.0
        %519 = vmatprep.subr.mxu0 0.0
        %520 = vmatpush1.msra.mxu0 0.0
        %521 = vmatprep.subr.mxu0 0.0
        %522 = vmatpush1.msra.mxu0 0.0
        %523 = vmatprep.subr.mxu0 0.0
        %524 = vmatpush1.msra.mxu0 0.0
        %525 = vmatprep.subr.mxu0 0.0
        %526 = vmatpush1.msra.mxu0 0.0
        %527 = vmatprep.subr.mxu0 0.0
        %528 = vmatpush1.msra.mxu0 0.0
        %529 = vmatprep.subr.mxu0 0.0
        %530 = vmatpush1.msra.mxu0 0.0
        %531 = vmatprep.subr.mxu0 0.0
        %532 = vmatpush1.msra.mxu0 0.0
        %533 = vmatprep.subr.mxu0 0.0
        %534 = vmatpush1.msra.mxu0 0.0
        %535 = vmatprep.subr.mxu0 0.0
        %536 = vmatpush1.msra.mxu0 0.0
        %537 = vmatprep.subr.mxu0 0.0
        %538 = vmatpush1.msra.mxu0 0.0
        %539 = vmatprep.subr.mxu0 0.0
        %540 = vmatpush1.msra.mxu0 0.0
        %541 = vmatprep.subr.mxu0 0.0
        %542 = vmatpush1.msra.mxu0 0.0
        %543 = vmatprep.mubr.f32.mxu0 0.0
        %544 = vmatmul.mubr.f32.gmra.mrb[0].mxu0 %v380
        %v545 = vpop.f32.mrb[0].mxu0
        %v546 = vadd.f32 %v376, %v545
        %v547 = vpop.f32.mrb[0].mxu0
        %548 = vmatprep.mubr.f32.mxu0 0.0
        %549 = vmatmul.mubr.f32.gmra.mrb[0].mxu0 %v383
        %v550 = vpop.f32.mrb[0].mxu0
        %v551 = vadd.f32 %v376, %v550
        %v552 = vpop.f32.mrb[0].mxu0
        %553 = vmatprep.mubr.f32.mxu0 0.0
        %554 = vmatmul.mubr.f32.gmra.mrb[0].mxu0 %v386
        %v555 = vpop.f32.mrb[0].mxu0
        %v556 = vadd.f32 %v376, %v555
        %v557 = vpop.f32.mrb[0].mxu0
        %558 = vmatprep.mubr.f32.mxu0 0.0
        %559 = vmatmul.mubr.f32.gmra.mrb[0].mxu0 %v389
        %v560 = vpop.f32.mrb[0].mxu0
        %v561 = vadd.f32 %v376, %v560
        %v562 = vpop.f32.mrb[0].mxu0
        %563 = vmatprep.mubr.f32.mxu0 0.0
        %564 = vmatmul.mubr.f32.gmra.mrb[0].mxu0 %v392
        %v565 = vpop.f32.mrb[0].mxu0
        %v566 = vadd.f32 %v376, %v565
        %v567 = vpop.f32.mrb[0].mxu0
        %568 = vmatprep.mubr.f32.mxu0 0.0
        %569 = vmatmul.mubr.f32.gmra.mrb[0].mxu0 %v395
        %v570 = vpop.f32.mrb[0].mxu0
        %v571 = vadd.f32 %v376, %v570
        %v572 = vpop.f32.mrb[0].mxu0
        %573 = vmatprep.mubr.f32.mxu0 0.0
        %574 = vmatmul.mubr.f32.gmra.mrb[0].mxu0 %v398
        %v575 = vpop.f32.mrb[0].mxu0
        %v576 = vadd.f32 %v376, %v575
        %v577 = vpop.f32.mrb[0].mxu0
        %578 = vmatprep.mubr.f32.mxu0 0.0
        %579 = vmatmul.mubr.f32.gmra.mrb[0].mxu0 %v401
        %v580 = vpop.f32.mrb[0].mxu0
        %v581 = vadd.f32 %v376, %v580
        %v582 = vpop.f32.mrb[0].mxu0
        %583 = vmatprep.mubr.f32.mxu0 0.0
        %584 = vmatmul.mubr.f32.gmra.mrb[0].mxu0 %v404
        %v585 = vpop.f32.mrb[0].mxu0
        %v586 = vadd.f32 %v376, %v585
        %v587 = vpop.f32.mrb[0].mxu0
        %588 = vmatprep.mubr.f32.mxu0 0.0
        %589 = vmatmul.mubr.f32.gmra.mrb[0].mxu0 %v407
        %v590 = vpop.f32.mrb[0].mxu0
        %v591 = vadd.f32 %v376, %v590
        %v592 = vpop.f32.mrb[0].mxu0
        %593 = vmatprep.mubr.f32.mxu0 0.0
        %594 = vmatmul.mubr.f32.gmra.mrb[0].mxu0 %v410
        %v595 = vpop.f32.mrb[0].mxu0
        %v596 = vadd.f32 %v376, %v595
        %v597 = vpop.f32.mrb[0].mxu0
        %598 = vmatprep.mubr.f32.mxu0 0.0
        %599 = vmatmul.mubr.f32.gmra.mrb[0].mxu0 %v413
        %v600 = vpop.f32.mrb[0].mxu0
        %v601 = vadd.f32 %v376, %v600
        %v602 = vpop.f32.mrb[0].mxu0
        %603 = vmatprep.mubr.f32.mxu0 0.0
        %604 = vmatmul.mubr.f32.gmra.mrb[0].mxu0 %v416
        %v605 = vpop.f32.mrb[0].mxu0
        %v606 = vadd.f32 %v376, %v605
        %v607 = vpop.f32.mrb[0].mxu0
        %608 = vmatprep.mubr.f32.mxu0 0.0
        %609 = vmatmul.mubr.f32.gmra.mrb[0].mxu0 %v419
        %v610 = vpop.f32.mrb[0].mxu0
        %v611 = vadd.f32 %v376, %v610
        %v612 = vpop.f32.mrb[0].mxu0
        %613 = vmatprep.mubr.f32.mxu0 0.0
        %614 = vmatmul.mubr.f32.gmra.mrb[0].mxu0 %v422
        %v615 = vpop.f32.mrb[0].mxu0
        %v616 = vadd.f32 %v376, %v615
        %v617 = vpop.f32.mrb[0].mxu0
        %618 = vmatprep.mubr.f32.mxu0 0.0
        %619 = vmatmul.mubr.f32.gmra.mrb[0].mxu0 %v425
        %v620 = vpop.f32.mrb[0].mxu0
        %v621 = vadd.f32 %v376, %v620
        %v622 = vpop.f32.mrb[0].mxu0
        %623 = vmatprep.mubr.f32.mxu0 0.0
        %624 = vmatmul.mubr.f32.gmra.mrb[0].mxu0 %v428
        %v625 = vpop.f32.mrb[0].mxu0
        %v626 = vadd.f32 %v376, %v625
        %v627 = vpop.f32.mrb[0].mxu0
        %628 = vmatprep.mubr.f32.mxu0 0.0
        %629 = vmatmul.mubr.f32.gmra.mrb[0].mxu0 %v431
        %v630 = vpop.f32.mrb[0].mxu0
        %v631 = vadd.f32 %v376, %v630
        %v632 = vpop.f32.mrb[0].mxu0
        %633 = vmatprep.mubr.f32.mxu0 0.0
        %634 = vmatmul.mubr.f32.gmra.mrb[0].mxu0 %v434
        %v635 = vpop.f32.mrb[0].mxu0
        %v636 = vadd.f32 %v376, %v635
        %v637 = vpop.f32.mrb[0].mxu0
        %638 = vmatprep.mubr.f32.mxu0 0.0
        %639 = vmatmul.mubr.f32.gmra.mrb[0].mxu0 %v437
        %v640 = vpop.f32.mrb[0].mxu0
        %v641 = vadd.f32 %v376, %v640
        %v642 = vpop.f32.mrb[0].mxu0
        %643 = vmatprep.mubr.f32.mxu0 0.0
        %644 = vmatmul.mubr.f32.gmra.mrb[0].mxu0 %v440
        %v645 = vpop.f32.mrb[0].mxu0
        %v646 = vadd.f32 %v376, %v645
        %v647 = vpop.f32.mrb[0].mxu0
        %648 = vmatprep.mubr.f32.mxu0 0.0
        %649 = vmatmul.mubr.f32.gmra.mrb[0].mxu0 %v443
        %v650 = vpop.f32.mrb[0].mxu0
        %v651 = vadd.f32 %v376, %v650
        %v652 = vpop.f32.mrb[0].mxu0
        %653 = vmatprep.mubr.f32.mxu0 0.0
        %654 = vmatmul.mubr.f32.gmra.mrb[0].mxu0 %v446
        %v655 = vpop.f32.mrb[0].mxu0
        %v656 = vadd.f32 %v376, %v655
        %v657 = vpop.f32.mrb[0].mxu0
        %658 = vmatprep.mubr.f32.mxu0 0.0
        %659 = vmatmul.mubr.f32.gmra.mrb[0].mxu0 %v449
        %v660 = vpop.f32.mrb[0].mxu0
        %v661 = vadd.f32 %v376, %v660
        %v662 = vpop.f32.mrb[0].mxu0
        %663 = vmatprep.mubr.f32.mxu0 0.0
        %664 = vmatmul.mubr.f32.gmra.mrb[0].mxu0 %v452
        %v665 = vpop.f32.mrb[0].mxu0
        %v666 = vadd.f32 %v376, %v665
        %v667 = vpop.f32.mrb[0].mxu0
        %668 = vmatprep.mubr.f32.mxu0 0.0
        %669 = vmatmul.mubr.f32.gmra.mrb[0].mxu0 %v455
        %v670 = vpop.f32.mrb[0].mxu0
        %v671 = vadd.f32 %v376, %v670
        %v672 = vpop.f32.mrb[0].mxu0
        %673 = vmatprep.mubr.f32.mxu0 0.0
        %674 = vmatmul.mubr.f32.gmra.mrb[0].mxu0 %v458
        %v675 = vpop.f32.mrb[0].mxu0
        %v676 = vadd.f32 %v376, %v675
        %v677 = vpop.f32.mrb[0].mxu0
        %678 = vmatprep.mubr.f32.mxu0 0.0
        %679 = vmatmul.mubr.f32.gmra.mrb[0].mxu0 %v461
        %v680 = vpop.f32.mrb[0].mxu0
        %v681 = vadd.f32 %v376, %v680
        %v682 = vpop.f32.mrb[0].mxu0
        %683 = vmatprep.mubr.f32.mxu0 0.0
        %684 = vmatmul.mubr.f32.gmra.mrb[0].mxu0 %v464
        %v685 = vpop.f32.mrb[0].mxu0
        %v686 = vadd.f32 %v376, %v685
        %v687 = vpop.f32.mrb[0].mxu0
        %688 = vmatprep.mubr.f32.mxu0 0.0
        %689 = vmatmul.mubr.f32.gmra.mrb[0].mxu0 %v467
        %v690 = vpop.f32.mrb[0].mxu0
        %v691 = vadd.f32 %v376, %v690
        %v692 = vpop.f32.mrb[0].mxu0
        %693 = vmatprep.mubr.f32.mxu0 0.0
        %694 = vmatmul.mubr.f32.gmra.mrb[0].mxu0 %v470
        %v695 = vpop.f32.mrb[0].mxu0
        %v696 = vadd.f32 %v376, %v695
        %v697 = vpop.f32.mrb[0].mxu0
        %698 = vmatprep.mubr.f32.mxu0 0.0
        %699 = vmatmul.mubr.f32.gmra.mrb[0].mxu0 %v473
        %v700 = vpop.f32.mrb[0].mxu0
        %v701 = vadd.f32 %v376, %v700
        %v702 = vpop.f32.mrb[0].mxu0
        %703 = vdwg.mxu0
        %vm704 = vcmp.gt.f32.partialorder %v546, 20.0
        %vm705 = vcmp.gt.f32.partialorder %v551, 20.0
        %vm706 = vcmp.gt.f32.partialorder %v556, 20.0
        %vm707 = vcmp.gt.f32.partialorder %v561, 20.0
        %vm708 = vcmp.gt.f32.partialorder %v566, 20.0
        %vm709 = vcmp.gt.f32.partialorder %v571, 20.0
        %vm710 = vcmp.gt.f32.partialorder %v576, 20.0
        %vm711 = vcmp.gt.f32.partialorder %v581, 20.0
        %vm712 = vcmp.gt.f32.partialorder %v586, 20.0
        %vm713 = vcmp.gt.f32.partialorder %v591, 20.0
        %vm714 = vcmp.gt.f32.partialorder %v596, 20.0
        %vm715 = vcmp.gt.f32.partialorder %v601, 20.0
        %vm716 = vcmp.gt.f32.partialorder %v606, 20.0
        %vm717 = vcmp.gt.f32.partialorder %v611, 20.0
        %vm718 = vcmp.gt.f32.partialorder %v616, 20.0
        %vm719 = vcmp.gt.f32.partialorder %v621, 20.0
        %vm720 = vcmp.gt.f32.partialorder %v626, 20.0
        %vm721 = vcmp.gt.f32.partialorder %v631, 20.0
        %vm722 = vcmp.gt.f32.partialorder %v636, 20.0
        %vm723 = vcmp.gt.f32.partialorder %v641, 20.0
        %vm724 = vcmp.gt.f32.partialorder %v646, 20.0
        %vm725 = vcmp.gt.f32.partialorder %v651, 20.0
        %vm726 = vcmp.gt.f32.partialorder %v656, 20.0
        %vm727 = vcmp.gt.f32.partialorder %v661, 20.0
        %vm728 = vcmp.gt.f32.partialorder %v666, 20.0
        %vm729 = vcmp.gt.f32.partialorder %v671, 20.0
        %vm730 = vcmp.gt.f32.partialorder %v676, 20.0
        %vm731 = vcmp.gt.f32.partialorder %v681, 20.0
        %vm732 = vcmp.gt.f32.partialorder %v686, 20.0
        %vm733 = vcmp.gt.f32.partialorder %v691, 20.0
        %vm734 = vcmp.gt.f32.partialorder %v696, 20.0
        %vm735 = vcmp.gt.f32.partialorder %v701, 20.0
        %v736 = vmin.f32 %v546, 20.0
        %v737 = vmin.f32 %v551, 20.0
        %v738 = vmin.f32 %v556, 20.0
        %v739 = vmin.f32 %v561, 20.0
        %v740 = vmin.f32 %v566, 20.0
        %v741 = vmin.f32 %v571, 20.0
        %v742 = vmin.f32 %v576, 20.0
        %v743 = vmin.f32 %v581, 20.0
        %v744 = vmin.f32 %v586, 20.0
        %v745 = vmin.f32 %v591, 20.0
        %v746 = vmin.f32 %v596, 20.0
        %v747 = vmin.f32 %v601, 20.0
        %v748 = vmin.f32 %v606, 20.0
        %v749 = vmin.f32 %v611, 20.0
        %v750 = vmin.f32 %v616, 20.0
        %v751 = vmin.f32 %v621, 20.0
        %v752 = vmin.f32 %v626, 20.0
        %v753 = vmin.f32 %v631, 20.0
        %v754 = vmin.f32 %v636, 20.0
        %v755 = vmin.f32 %v641, 20.0
        %v756 = vmin.f32 %v646, 20.0
        %v757 = vmin.f32 %v651, 20.0
        %v758 = vmin.f32 %v656, 20.0
        %v759 = vmin.f32 %v661, 20.0
        %v760 = vmin.f32 %v666, 20.0
        %v761 = vmin.f32 %v671, 20.0
        %v762 = vmin.f32 %v676, 20.0
        %v763 = vmin.f32 %v681, 20.0
        %v764 = vmin.f32 %v686, 20.0
        %v765 = vmin.f32 %v691, 20.0
        %v766 = vmin.f32 %v696, 20.0
        %v767 = vmin.f32 %v701, 20.0
        %v768 = vmul.f32 %v736, 1.442695
        %v769 = vpow.pop %v768
        %v770 = vmul.f32 %v737, 1.442695
        %v771 = vpow.pop %v770
        %v772 = vmul.f32 %v738, 1.442695
        %v773 = vpow.pop %v772
        %v774 = vmul.f32 %v739, 1.442695
        %v775 = vpow.pop %v774
        %v776 = vmul.f32 %v740, 1.442695
        %v777 = vpow.pop %v776
        %v778 = vmul.f32 %v741, 1.442695
        %v779 = vpow.pop %v778
        %v780 = vmul.f32 %v742, 1.442695
        %v781 = vpow.pop %v780
        %v782 = vmul.f32 %v743, 1.442695
        %v783 = vpow.pop %v782
        %v784 = vmul.f32 %v744, 1.442695
        %v785 = vpow.pop %v784
        %v786 = vmul.f32 %v745, 1.442695
        %v787 = vpow.pop %v786
        %v788 = vmul.f32 %v746, 1.442695
        %v789 = vpow.pop %v788
        %v790 = vmul.f32 %v747, 1.442695
        %v791 = vpow.pop %v790
        %v792 = vmul.f32 %v748, 1.442695
        %v793 = vpow.pop %v792
        %v794 = vmul.f32 %v749, 1.442695
        %v795 = vpow.pop %v794
        %v796 = vmul.f32 %v750, 1.442695
        %v797 = vpow.pop %v796
        %v798 = vmul.f32 %v751, 1.442695
        %v799 = vpow.pop %v798
        %v800 = vmul.f32 %v752, 1.442695
        %v801 = vpow.pop %v800
        %v802 = vmul.f32 %v753, 1.442695
        %v803 = vpow.pop %v802
        %v804 = vmul.f32 %v754, 1.442695
        %v805 = vpow.pop %v804
        %v806 = vmul.f32 %v755, 1.442695
        %v807 = vpow.pop %v806
        %v808 = vmul.f32 %v756, 1.442695
        %v809 = vpow.pop %v808
        %v810 = vmul.f32 %v757, 1.442695
        %v811 = vpow.pop %v810
        %v812 = vmul.f32 %v758, 1.442695
        %v813 = vpow.pop %v812
        %v814 = vmul.f32 %v759, 1.442695
        %v815 = vpow.pop %v814
        %v816 = vmul.f32 %v760, 1.442695
        %v817 = vpow.pop %v816
        %v818 = vmul.f32 %v761, 1.442695
        %v819 = vpow.pop %v818
        %v820 = vmul.f32 %v762, 1.442695
        %v821 = vpow.pop %v820
        %v822 = vmul.f32 %v763, 1.442695
        %v823 = vpow.pop %v822
        %v824 = vmul.f32 %v764, 1.442695
        %v825 = vpow.pop %v824
        %v826 = vmul.f32 %v765, 1.442695
        %v827 = vpow.pop %v826
        %v828 = vmul.f32 %v766, 1.442695
        %v829 = vpow.pop %v828
        %v830 = vmul.f32 %v767, 1.442695
        %v831 = vpow.pop %v830
        %v832 = vadd.f32 %v769, 1.0
        %v833 = vlog2.pop %v832
        %v834 = vmul.f32 %v833, 0.6931472
        %v835 = vmul.f32 -0.5, %v769
        %v836 = vadd.f32 %v835, 1.0
        %v837 = vmul.f32 %v836, %v769
        %v838 = vand.u32 2147483647, %v769
        %vm839 = vcmp.lt.f32.partialorder %v838, 0.0004427343
        %v840 = vsel %vm839, %v837, %v834
        %v841 = vadd.f32 %v771, 1.0
        %v842 = vlog2.pop %v841
        %v843 = vmul.f32 %v842, 0.6931472
        %v844 = vmul.f32 -0.5, %v771
        %v845 = vadd.f32 %v844, 1.0
        %v846 = vmul.f32 %v845, %v771
        %v847 = vand.u32 2147483647, %v771
        %vm848 = vcmp.lt.f32.partialorder %v847, 0.0004427343
        %v849 = vsel %vm848, %v846, %v843
        %v850 = vadd.f32 %v773, 1.0
        %v851 = vlog2.pop %v850
        %v852 = vmul.f32 %v851, 0.6931472
        %v853 = vmul.f32 -0.5, %v773
        %v854 = vadd.f32 %v853, 1.0
        %v855 = vmul.f32 %v854, %v773
        %v856 = vand.u32 2147483647, %v773
        %vm857 = vcmp.lt.f32.partialorder %v856, 0.0004427343
        %v858 = vsel %vm857, %v855, %v852
        %v859 = vadd.f32 %v775, 1.0
        %v860 = vlog2.pop %v859
        %v861 = vmul.f32 %v860, 0.6931472
        %v862 = vmul.f32 -0.5, %v775
        %v863 = vadd.f32 %v862, 1.0
        %v864 = vmul.f32 %v863, %v775
        %v865 = vand.u32 2147483647, %v775
        %vm866 = vcmp.lt.f32.partialorder %v865, 0.0004427343
        %v867 = vsel %vm866, %v864, %v861
        %v868 = vadd.f32 %v777, 1.0
        %v869 = vlog2.pop %v868
        %v870 = vmul.f32 %v869, 0.6931472
        %v871 = vmul.f32 -0.5, %v777
        %v872 = vadd.f32 %v871, 1.0
        %v873 = vmul.f32 %v872, %v777
        %v874 = vand.u32 2147483647, %v777
        %vm875 = vcmp.lt.f32.partialorder %v874, 0.0004427343
        %v876 = vsel %vm875, %v873, %v870
        %v877 = vadd.f32 %v779, 1.0
        %v878 = vlog2.pop %v877
        %v879 = vmul.f32 %v878, 0.6931472
        %v880 = vmul.f32 -0.5, %v779
        %v881 = vadd.f32 %v880, 1.0
        %v882 = vmul.f32 %v881, %v779
        %v883 = vand.u32 2147483647, %v779
        %vm884 = vcmp.lt.f32.partialorder %v883, 0.0004427343
        %v885 = vsel %vm884, %v882, %v879
        %v886 = vadd.f32 %v781, 1.0
        %v887 = vlog2.pop %v886
        %v888 = vmul.f32 %v887, 0.6931472
        %v889 = vmul.f32 -0.5, %v781
        %v890 = vadd.f32 %v889, 1.0
        %v891 = vmul.f32 %v890, %v781
        %v892 = vand.u32 2147483647, %v781
        %vm893 = vcmp.lt.f32.partialorder %v892, 0.0004427343
        %v894 = vsel %vm893, %v891, %v888
        %v895 = vadd.f32 %v783, 1.0
        %v896 = vlog2.pop %v895
        %v897 = vmul.f32 %v896, 0.6931472
        %v898 = vmul.f32 -0.5, %v783
        %v899 = vadd.f32 %v898, 1.0
        %v900 = vmul.f32 %v899, %v783
        %v901 = vand.u32 2147483647, %v783
        %vm902 = vcmp.lt.f32.partialorder %v901, 0.0004427343
        %v903 = vsel %vm902, %v900, %v897
        %v904 = vadd.f32 %v785, 1.0
        %v905 = vlog2.pop %v904
        %v906 = vmul.f32 %v905, 0.6931472
        %v907 = vmul.f32 -0.5, %v785
        %v908 = vadd.f32 %v907, 1.0
        %v909 = vmul.f32 %v908, %v785
        %v910 = vand.u32 2147483647, %v785
        %vm911 = vcmp.lt.f32.partialorder %v910, 0.0004427343
        %v912 = vsel %vm911, %v909, %v906
        %v913 = vadd.f32 %v787, 1.0
        %v914 = vlog2.pop %v913
        %v915 = vmul.f32 %v914, 0.6931472
        %v916 = vmul.f32 -0.5, %v787
        %v917 = vadd.f32 %v916, 1.0
        %v918 = vmul.f32 %v917, %v787
        %v919 = vand.u32 2147483647, %v787
        %vm920 = vcmp.lt.f32.partialorder %v919, 0.0004427343
        %v921 = vsel %vm920, %v918, %v915
        %v922 = vadd.f32 %v789, 1.0
        %v923 = vlog2.pop %v922
        %v924 = vmul.f32 %v923, 0.6931472
        %v925 = vmul.f32 -0.5, %v789
        %v926 = vadd.f32 %v925, 1.0
        %v927 = vmul.f32 %v926, %v789
        %v928 = vand.u32 2147483647, %v789
        %vm929 = vcmp.lt.f32.partialorder %v928, 0.0004427343
        %v930 = vsel %vm929, %v927, %v924
        %v931 = vadd.f32 %v791, 1.0
        %v932 = vlog2.pop %v931
        %v933 = vmul.f32 %v932, 0.6931472
        %v934 = vmul.f32 -0.5, %v791
        %v935 = vadd.f32 %v934, 1.0
        %v936 = vmul.f32 %v935, %v791
        %v937 = vand.u32 2147483647, %v791
        %vm938 = vcmp.lt.f32.partialorder %v937, 0.0004427343
        %v939 = vsel %vm938, %v936, %v933
        %v940 = vadd.f32 %v793, 1.0
        %v941 = vlog2.pop %v940
        %v942 = vmul.f32 %v941, 0.6931472
        %v943 = vmul.f32 -0.5, %v793
        %v944 = vadd.f32 %v943, 1.0
        %v945 = vmul.f32 %v944, %v793
        %v946 = vand.u32 2147483647, %v793
        %vm947 = vcmp.lt.f32.partialorder %v946, 0.0004427343
        %v948 = vsel %vm947, %v945, %v942
        %v949 = vadd.f32 %v795, 1.0
        %v950 = vlog2.pop %v949
        %v951 = vmul.f32 %v950, 0.6931472
        %v952 = vmul.f32 -0.5, %v795
        %v953 = vadd.f32 %v952, 1.0
        %v954 = vmul.f32 %v953, %v795
        %v955 = vand.u32 2147483647, %v795
        %vm956 = vcmp.lt.f32.partialorder %v955, 0.0004427343
        %v957 = vsel %vm956, %v954, %v951
        %v958 = vadd.f32 %v797, 1.0
        %v959 = vlog2.pop %v958
        %v960 = vmul.f32 %v959, 0.6931472
        %v961 = vmul.f32 -0.5, %v797
        %v962 = vadd.f32 %v961, 1.0
        %v963 = vmul.f32 %v962, %v797
        %v964 = vand.u32 2147483647, %v797
        %vm965 = vcmp.lt.f32.partialorder %v964, 0.0004427343
        %v966 = vsel %vm965, %v963, %v960
        %v967 = vadd.f32 %v799, 1.0
        %v968 = vlog2.pop %v967
        %v969 = vmul.f32 %v968, 0.6931472
        %v970 = vmul.f32 -0.5, %v799
        %v971 = vadd.f32 %v970, 1.0
        %v972 = vmul.f32 %v971, %v799
        %v973 = vand.u32 2147483647, %v799
        %vm974 = vcmp.lt.f32.partialorder %v973, 0.0004427343
        %v975 = vsel %vm974, %v972, %v969
        %v976 = vadd.f32 %v801, 1.0
        %v977 = vlog2.pop %v976
        %v978 = vmul.f32 %v977, 0.6931472
        %v979 = vmul.f32 -0.5, %v801
        %v980 = vadd.f32 %v979, 1.0
        %v981 = vmul.f32 %v980, %v801
        %v982 = vand.u32 2147483647, %v801
        %vm983 = vcmp.lt.f32.partialorder %v982, 0.0004427343
        %v984 = vsel %vm983, %v981, %v978
        %v985 = vadd.f32 %v803, 1.0
        %v986 = vlog2.pop %v985
        %v987 = vmul.f32 %v986, 0.6931472
        %v988 = vmul.f32 -0.5, %v803
        %v989 = vadd.f32 %v988, 1.0
        %v990 = vmul.f32 %v989, %v803
        %v991 = vand.u32 2147483647, %v803
        %vm992 = vcmp.lt.f32.partialorder %v991, 0.0004427343
        %v993 = vsel %vm992, %v990, %v987
        %v994 = vadd.f32 %v805, 1.0
        %v995 = vlog2.pop %v994
        %v996 = vmul.f32 %v995, 0.6931472
        %v997 = vmul.f32 -0.5, %v805
        %v998 = vadd.f32 %v997, 1.0
        %v999 = vmul.f32 %v998, %v805
        %v1000 = vand.u32 2147483647, %v805
        %vm1001 = vcmp.lt.f32.partialorder %v1000, 0.0004427343
        %v1002 = vsel %vm1001, %v999, %v996
        %v1003 = vadd.f32 %v807, 1.0
        %v1004 = vlog2.pop %v1003
        %v1005 = vmul.f32 %v1004, 0.6931472
        %v1006 = vmul.f32 -0.5, %v807
        %v1007 = vadd.f32 %v1006, 1.0
        %v1008 = vmul.f32 %v1007, %v807
        %v1009 = vand.u32 2147483647, %v807
        %vm1010 = vcmp.lt.f32.partialorder %v1009, 0.0004427343
        %v1011 = vsel %vm1010, %v1008, %v1005
        %v1012 = vadd.f32 %v809, 1.0
        %v1013 = vlog2.pop %v1012
        %v1014 = vmul.f32 %v1013, 0.6931472
        %v1015 = vmul.f32 -0.5, %v809
        %v1016 = vadd.f32 %v1015, 1.0
        %v1017 = vmul.f32 %v1016, %v809
        %v1018 = vand.u32 2147483647, %v809
        %vm1019 = vcmp.lt.f32.partialorder %v1018, 0.0004427343
        %v1020 = vsel %vm1019, %v1017, %v1014
        %v1021 = vadd.f32 %v811, 1.0
        %v1022 = vlog2.pop %v1021
        %v1023 = vmul.f32 %v1022, 0.6931472
        %v1024 = vmul.f32 -0.5, %v811
        %v1025 = vadd.f32 %v1024, 1.0
        %v1026 = vmul.f32 %v1025, %v811
        %v1027 = vand.u32 2147483647, %v811
        %vm1028 = vcmp.lt.f32.partialorder %v1027, 0.0004427343
        %v1029 = vsel %vm1028, %v1026, %v1023
        %v1030 = vadd.f32 %v813, 1.0
        %v1031 = vlog2.pop %v1030
        %v1032 = vmul.f32 %v1031, 0.6931472
        %v1033 = vmul.f32 -0.5, %v813
        %v1034 = vadd.f32 %v1033, 1.0
        %v1035 = vmul.f32 %v1034, %v813
        %v1036 = vand.u32 2147483647, %v813
        %vm1037 = vcmp.lt.f32.partialorder %v1036, 0.0004427343
        %v1038 = vsel %vm1037, %v1035, %v1032
        %v1039 = vadd.f32 %v815, 1.0
        %v1040 = vlog2.pop %v1039
        %v1041 = vmul.f32 %v1040, 0.6931472
        %v1042 = vmul.f32 -0.5, %v815
        %v1043 = vadd.f32 %v1042, 1.0
        %v1044 = vmul.f32 %v1043, %v815
        %v1045 = vand.u32 2147483647, %v815
        %vm1046 = vcmp.lt.f32.partialorder %v1045, 0.0004427343
        %v1047 = vsel %vm1046, %v1044, %v1041
        %v1048 = vadd.f32 %v817, 1.0
        %v1049 = vlog2.pop %v1048
        %v1050 = vmul.f32 %v1049, 0.6931472
        %v1051 = vmul.f32 -0.5, %v817
        %v1052 = vadd.f32 %v1051, 1.0
        %v1053 = vmul.f32 %v1052, %v817
        %v1054 = vand.u32 2147483647, %v817
        %vm1055 = vcmp.lt.f32.partialorder %v1054, 0.0004427343
        %v1056 = vsel %vm1055, %v1053, %v1050
        %v1057 = vadd.f32 %v819, 1.0
        %v1058 = vlog2.pop %v1057
        %v1059 = vmul.f32 %v1058, 0.6931472
        %v1060 = vmul.f32 -0.5, %v819
        %v1061 = vadd.f32 %v1060, 1.0
        %v1062 = vmul.f32 %v1061, %v819
        %v1063 = vand.u32 2147483647, %v819
        %vm1064 = vcmp.lt.f32.partialorder %v1063, 0.0004427343
        %v1065 = vsel %vm1064, %v1062, %v1059
        %v1066 = vadd.f32 %v821, 1.0
        %v1067 = vlog2.pop %v1066
        %v1068 = vmul.f32 %v1067, 0.6931472
        %v1069 = vmul.f32 -0.5, %v821
        %v1070 = vadd.f32 %v1069, 1.0
        %v1071 = vmul.f32 %v1070, %v821
        %v1072 = vand.u32 2147483647, %v821
        %vm1073 = vcmp.lt.f32.partialorder %v1072, 0.0004427343
        %v1074 = vsel %vm1073, %v1071, %v1068
        %v1075 = vadd.f32 %v823, 1.0
        %v1076 = vlog2.pop %v1075
        %v1077 = vmul.f32 %v1076, 0.6931472
        %v1078 = vmul.f32 -0.5, %v823
        %v1079 = vadd.f32 %v1078, 1.0
        %v1080 = vmul.f32 %v1079, %v823
        %v1081 = vand.u32 2147483647, %v823
        %vm1082 = vcmp.lt.f32.partialorder %v1081, 0.0004427343
        %v1083 = vsel %vm1082, %v1080, %v1077
        %v1084 = vadd.f32 %v825, 1.0
        %v1085 = vlog2.pop %v1084
        %v1086 = vmul.f32 %v1085, 0.6931472
        %v1087 = vmul.f32 -0.5, %v825
        %v1088 = vadd.f32 %v1087, 1.0
        %v1089 = vmul.f32 %v1088, %v825
        %v1090 = vand.u32 2147483647, %v825
        %vm1091 = vcmp.lt.f32.partialorder %v1090, 0.0004427343
        %v1092 = vsel %vm1091, %v1089, %v1086
        %v1093 = vadd.f32 %v827, 1.0
        %v1094 = vlog2.pop %v1093
        %v1095 = vmul.f32 %v1094, 0.6931472
        %v1096 = vmul.f32 -0.5, %v827
        %v1097 = vadd.f32 %v1096, 1.0
        %v1098 = vmul.f32 %v1097, %v827
        %v1099 = vand.u32 2147483647, %v827
        %vm1100 = vcmp.lt.f32.partialorder %v1099, 0.0004427343
        %v1101 = vsel %vm1100, %v1098, %v1095
        %v1102 = vadd.f32 %v829, 1.0
        %v1103 = vlog2.pop %v1102
        %v1104 = vmul.f32 %v1103, 0.6931472
        %v1105 = vmul.f32 -0.5, %v829
        %v1106 = vadd.f32 %v1105, 1.0
        %v1107 = vmul.f32 %v1106, %v829
        %v1108 = vand.u32 2147483647, %v829
        %vm1109 = vcmp.lt.f32.partialorder %v1108, 0.0004427343
        %v1110 = vsel %vm1109, %v1107, %v1104
        %v1111 = vadd.f32 %v831, 1.0
        %v1112 = vlog2.pop %v1111
        %v1113 = vmul.f32 %v1112, 0.6931472
        %v1114 = vmul.f32 -0.5, %v831
        %v1115 = vadd.f32 %v1114, 1.0
        %v1116 = vmul.f32 %v1115, %v831
        %v1117 = vand.u32 2147483647, %v831
        %vm1118 = vcmp.lt.f32.partialorder %v1117, 0.0004427343
        %v1119 = vsel %vm1118, %v1116, %v1113
        %v1120 = vsel %vm704, %v546, %v840
        %v1121 = vsel %vm705, %v551, %v849
        %v1122 = vsel %vm706, %v556, %v858
        %v1123 = vsel %vm707, %v561, %v867
        %v1124 = vsel %vm708, %v566, %v876
        %v1125 = vsel %vm709, %v571, %v885
        %v1126 = vsel %vm710, %v576, %v894
        %v1127 = vsel %vm711, %v581, %v903
        %v1128 = vsel %vm712, %v586, %v912
        %v1129 = vsel %vm713, %v591, %v921
        %v1130 = vsel %vm714, %v596, %v930
        %v1131 = vsel %vm715, %v601, %v939
        %v1132 = vsel %vm716, %v606, %v948
        %v1133 = vsel %vm717, %v611, %v957
        %v1134 = vsel %vm718, %v616, %v966
        %v1135 = vsel %vm719, %v621, %v975
        %v1136 = vsel %vm720, %v626, %v984
        %v1137 = vsel %vm721, %v631, %v993
        %v1138 = vsel %vm722, %v636, %v1002
        %v1139 = vsel %vm723, %v641, %v1011
        %v1140 = vsel %vm724, %v646, %v1020
        %v1141 = vsel %vm725, %v651, %v1029
        %v1142 = vsel %vm726, %v656, %v1038
        %v1143 = vsel %vm727, %v661, %v1047
        %v1144 = vsel %vm728, %v666, %v1056
        %v1145 = vsel %vm729, %v671, %v1065
        %v1146 = vsel %vm730, %v676, %v1074
        %v1147 = vsel %vm731, %v681, %v1083
        %v1148 = vsel %vm732, %v686, %v1092
        %v1149 = vsel %vm733, %v691, %v1101
        %v1150 = vsel %vm734, %v696, %v1110
        %v1151 = vsel %vm735, %v701, %v1119
        %v1152 = vld [vmem:[%s3] sm:$0xff]
        %v1153 = vld [vmem:[%s3 + $0x8] sm:$0xff]
        %v1154 = vld [vmem:[%s3 + $0x10] sm:$0xff]
        %v1155 = vld [vmem:[%s3 + $0x18] sm:$0xff]
        %v1156 = vld [vmem:[%s4] sm:$0x1]
        %v1158 = vlaneseq
        %v1159 = vshrl.u32 %v1158, 7
        %v1160 = vsub.s32 0, %v1159
        %v1161 = vrot.slane %v1156, %v1160
        %vm1163 = vcmask 261120
        %v1165 = vsel %vm1163, %v1120, 0
        %v1168 = vsel %vm1163, %v1121, 0
        %v1171 = vsel %vm1163, %v1122, 0
        %v1174 = vsel %vm1163, %v1123, 0
        %v1177 = vsel %vm1163, %v1124, 0
        %v1180 = vsel %vm1163, %v1125, 0
        %v1183 = vsel %vm1163, %v1126, 0
        %v1186 = vsel %vm1163, %v1127, 0
        %v1189 = vsel %vm1163, %v1128, 0
        %v1192 = vsel %vm1163, %v1129, 0
        %v1195 = vsel %vm1163, %v1130, 0
        %v1198 = vsel %vm1163, %v1131, 0
        %v1201 = vsel %vm1163, %v1132, 0
        %v1204 = vsel %vm1163, %v1133, 0
        %v1207 = vsel %vm1163, %v1134, 0
        %v1210 = vsel %vm1163, %v1135, 0
        %v1213 = vsel %vm1163, %v1136, 0
        %v1216 = vsel %vm1163, %v1137, 0
        %v1219 = vsel %vm1163, %v1138, 0
        %v1222 = vsel %vm1163, %v1139, 0
        %v1225 = vsel %vm1163, %v1140, 0
        %v1228 = vsel %vm1163, %v1141, 0
        %v1231 = vsel %vm1163, %v1142, 0
        %v1234 = vsel %vm1163, %v1143, 0
        %v1237 = vsel %vm1163, %v1144, 0
        %v1240 = vsel %vm1163, %v1145, 0
        %v1243 = vsel %vm1163, %v1146, 0
        %v1246 = vsel %vm1163, %v1147, 0
        %v1249 = vsel %vm1163, %v1148, 0
        %v1252 = vsel %vm1163, %v1149, 0
        %v1255 = vsel %vm1163, %v1150, 0
        %v1258 = vsel %vm1163, %v1151, 0
        %1260 = vmatprep.subr.mxu0 0.0
        %1261 = vmatpush1.msra.mxu0 %v1152
        %1262 = vmatprep.subr.mxu0 0.0
        %1263 = vmatpush1.msra.mxu0 %v1153
        %1264 = vmatprep.subr.mxu0 0.0
        %1265 = vmatpush1.msra.mxu0 %v1154
        %1266 = vmatprep.subr.mxu0 0.0
        %1267 = vmatpush1.msra.mxu0 %v1155
        %1268 = vmatprep.subr.mxu0 0.0
        %1269 = vmatpush1.msra.mxu0 0.0
        %1270 = vmatprep.subr.mxu0 0.0
        %1271 = vmatpush1.msra.mxu0 0.0
        %1272 = vmatprep.subr.mxu0 0.0
        %1273 = vmatpush1.msra.mxu0 0.0
        %1274 = vmatprep.subr.mxu0 0.0
        %1275 = vmatpush1.msra.mxu0 0.0
        %1276 = vmatprep.subr.mxu0 0.0
        %1277 = vmatpush1.msra.mxu0 0.0
        %1278 = vmatprep.subr.mxu0 0.0
        %1279 = vmatpush1.msra.mxu0 0.0
        %1280 = vmatprep.subr.mxu0 0.0
        %1281 = vmatpush1.msra.mxu0 0.0
        %1282 = vmatprep.subr.mxu0 0.0
        %1283 = vmatpush1.msra.mxu0 0.0
        %1284 = vmatprep.subr.mxu0 0.0
        %1285 = vmatpush1.msra.mxu0 0.0
        %1286 = vmatprep.subr.mxu0 0.0
        %1287 = vmatpush1.msra.mxu0 0.0
        %1288 = vmatprep.subr.mxu0 0.0
        %1289 = vmatpush1.msra.mxu0 0.0
        %1290 = vmatprep.subr.mxu0 0.0
        %1291 = vmatpush1.msra.mxu0 0.0
        %1292 = vmatprep.subr.mxu0 0.0
        %1293 = vmatpush1.msra.mxu0 0.0
        %1294 = vmatprep.subr.mxu0 0.0
        %1295 = vmatpush1.msra.mxu0 0.0
        %1296 = vmatprep.subr.mxu0 0.0
        %1297 = vmatpush1.msra.mxu0 0.0
        %1298 = vmatprep.subr.mxu0 0.0
        %1299 = vmatpush1.msra.mxu0 0.0
        %1300 = vmatprep.subr.mxu0 0.0
        %1301 = vmatpush1.msra.mxu0 0.0
        %1302 = vmatprep.subr.mxu0 0.0
        %1303 = vmatpush1.msra.mxu0 0.0
        %1304 = vmatprep.subr.mxu0 0.0
        %1305 = vmatpush1.msra.mxu0 0.0
        %1306 = vmatprep.subr.mxu0 0.0
        %1307 = vmatpush1.msra.mxu0 0.0
        %1308 = vmatprep.subr.mxu0 0.0
        %1309 = vmatpush1.msra.mxu0 0.0
        %1310 = vmatprep.subr.mxu0 0.0
        %1311 = vmatpush1.msra.mxu0 0.0
        %1312 = vmatprep.subr.mxu0 0.0
        %1313 = vmatpush1.msra.mxu0 0.0
        %1314 = vmatprep.subr.mxu0 0.0
        %1315 = vmatpush1.msra.mxu0 0.0
        %1316 = vmatprep.subr.mxu0 0.0
        %1317 = vmatpush1.msra.mxu0 0.0
        %1318 = vmatprep.subr.mxu0 0.0
        %1319 = vmatpush1.msra.mxu0 0.0
        %1320 = vmatprep.subr.mxu0 0.0
        %1321 = vmatpush1.msra.mxu0 0.0
        %1322 = vmatprep.subr.mxu0 0.0
        %1323 = vmatpush1.msra.mxu0 0.0
        %1324 = vmatprep.mubr.f32.mxu0 0.0
        %1325 = vmatmul.mubr.f32.gmra.mrb[0].mxu0 %v1165
        %v1326 = vpop.f32.mrb[0].mxu0
        %v1327 = vadd.f32 %v1161, %v1326
        %v1328 = vpop.f32.mrb[0].mxu0
        %1329 = vmatprep.mubr.f32.mxu0 0.0
        %1330 = vmatmul.mubr.f32.gmra.mrb[0].mxu0 %v1168
        %v1331 = vpop.f32.mrb[0].mxu0
        %v1332 = vadd.f32 %v1161, %v1331
        %v1333 = vpop.f32.mrb[0].mxu0
        %1334 = vmatprep.mubr.f32.mxu0 0.0
        %1335 = vmatmul.mubr.f32.gmra.mrb[0].mxu0 %v1171
        %v1336 = vpop.f32.mrb[0].mxu0
        %v1337 = vadd.f32 %v1161, %v1336
        %v1338 = vpop.f32.mrb[0].mxu0
        %1339 = vmatprep.mubr.f32.mxu0 0.0
        %1340 = vmatmul.mubr.f32.gmra.mrb[0].mxu0 %v1174
        %v1341 = vpop.f32.mrb[0].mxu0
        %v1342 = vadd.f32 %v1161, %v1341
        %v1343 = vpop.f32.mrb[0].mxu0
        %1344 = vmatprep.mubr.f32.mxu0 0.0
        %1345 = vmatmul.mubr.f32.gmra.mrb[0].mxu0 %v1177
        %v1346 = vpop.f32.mrb[0].mxu0
        %v1347 = vadd.f32 %v1161, %v1346
        %v1348 = vpop.f32.mrb[0].mxu0
        %1349 = vmatprep.mubr.f32.mxu0 0.0
        %1350 = vmatmul.mubr.f32.gmra.mrb[0].mxu0 %v1180
        %v1351 = vpop.f32.mrb[0].mxu0
        %v1352 = vadd.f32 %v1161, %v1351
        %v1353 = vpop.f32.mrb[0].mxu0
        %1354 = vmatprep.mubr.f32.mxu0 0.0
        %1355 = vmatmul.mubr.f32.gmra.mrb[0].mxu0 %v1183
        %v1356 = vpop.f32.mrb[0].mxu0
        %v1357 = vadd.f32 %v1161, %v1356
        %v1358 = vpop.f32.mrb[0].mxu0
        %1359 = vmatprep.mubr.f32.mxu0 0.0
        %1360 = vmatmul.mubr.f32.gmra.mrb[0].mxu0 %v1186
        %v1361 = vpop.f32.mrb[0].mxu0
        %v1362 = vadd.f32 %v1161, %v1361
        %v1363 = vpop.f32.mrb[0].mxu0
        %1364 = vmatprep.mubr.f32.mxu0 0.0
        %1365 = vmatmul.mubr.f32.gmra.mrb[0].mxu0 %v1189
        %v1366 = vpop.f32.mrb[0].mxu0
        %v1367 = vadd.f32 %v1161, %v1366
        %v1368 = vpop.f32.mrb[0].mxu0
        %1369 = vmatprep.mubr.f32.mxu0 0.0
        %1370 = vmatmul.mubr.f32.gmra.mrb[0].mxu0 %v1192
        %v1371 = vpop.f32.mrb[0].mxu0
        %v1372 = vadd.f32 %v1161, %v1371
        %v1373 = vpop.f32.mrb[0].mxu0
        %1374 = vmatprep.mubr.f32.mxu0 0.0
        %1375 = vmatmul.mubr.f32.gmra.mrb[0].mxu0 %v1195
        %v1376 = vpop.f32.mrb[0].mxu0
        %v1377 = vadd.f32 %v1161, %v1376
        %v1378 = vpop.f32.mrb[0].mxu0
        %1379 = vmatprep.mubr.f32.mxu0 0.0
        %1380 = vmatmul.mubr.f32.gmra.mrb[0].mxu0 %v1198
        %v1381 = vpop.f32.mrb[0].mxu0
        %v1382 = vadd.f32 %v1161, %v1381
        %v1383 = vpop.f32.mrb[0].mxu0
        %1384 = vmatprep.mubr.f32.mxu0 0.0
        %1385 = vmatmul.mubr.f32.gmra.mrb[0].mxu0 %v1201
        %v1386 = vpop.f32.mrb[0].mxu0
        %v1387 = vadd.f32 %v1161, %v1386
        %v1388 = vpop.f32.mrb[0].mxu0
        %1389 = vmatprep.mubr.f32.mxu0 0.0
        %1390 = vmatmul.mubr.f32.gmra.mrb[0].mxu0 %v1204
        %v1391 = vpop.f32.mrb[0].mxu0
        %v1392 = vadd.f32 %v1161, %v1391
        %v1393 = vpop.f32.mrb[0].mxu0
        %1394 = vmatprep.mubr.f32.mxu0 0.0
        %1395 = vmatmul.mubr.f32.gmra.mrb[0].mxu0 %v1207
        %v1396 = vpop.f32.mrb[0].mxu0
        %v1397 = vadd.f32 %v1161, %v1396
        %v1398 = vpop.f32.mrb[0].mxu0
        %1399 = vmatprep.mubr.f32.mxu0 0.0
        %1400 = vmatmul.mubr.f32.gmra.mrb[0].mxu0 %v1210
        %v1401 = vpop.f32.mrb[0].mxu0
        %v1402 = vadd.f32 %v1161, %v1401
        %v1403 = vpop.f32.mrb[0].mxu0
        %1404 = vmatprep.mubr.f32.mxu0 0.0
        %1405 = vmatmul.mubr.f32.gmra.mrb[0].mxu0 %v1213
        %v1406 = vpop.f32.mrb[0].mxu0
        %v1407 = vadd.f32 %v1161, %v1406
        %v1408 = vpop.f32.mrb[0].mxu0
        %1409 = vmatprep.mubr.f32.mxu0 0.0
        %1410 = vmatmul.mubr.f32.gmra.mrb[0].mxu0 %v1216
        %v1411 = vpop.f32.mrb[0].mxu0
        %v1412 = vadd.f32 %v1161, %v1411
        %v1413 = vpop.f32.mrb[0].mxu0
        %1414 = vmatprep.mubr.f32.mxu0 0.0
        %1415 = vmatmul.mubr.f32.gmra.mrb[0].mxu0 %v1219
        %v1416 = vpop.f32.mrb[0].mxu0
        %v1417 = vadd.f32 %v1161, %v1416
        %v1418 = vpop.f32.mrb[0].mxu0
        %1419 = vmatprep.mubr.f32.mxu0 0.0
        %1420 = vmatmul.mubr.f32.gmra.mrb[0].mxu0 %v1222
        %v1421 = vpop.f32.mrb[0].mxu0
        %v1422 = vadd.f32 %v1161, %v1421
        %v1423 = vpop.f32.mrb[0].mxu0
        %1424 = vmatprep.mubr.f32.mxu0 0.0
        %1425 = vmatmul.mubr.f32.gmra.mrb[0].mxu0 %v1225
        %v1426 = vpop.f32.mrb[0].mxu0
        %v1427 = vadd.f32 %v1161, %v1426
        %v1428 = vpop.f32.mrb[0].mxu0
        %1429 = vmatprep.mubr.f32.mxu0 0.0
        %1430 = vmatmul.mubr.f32.gmra.mrb[0].mxu0 %v1228
        %v1431 = vpop.f32.mrb[0].mxu0
        %v1432 = vadd.f32 %v1161, %v1431
        %v1433 = vpop.f32.mrb[0].mxu0
        %1434 = vmatprep.mubr.f32.mxu0 0.0
        %1435 = vmatmul.mubr.f32.gmra.mrb[0].mxu0 %v1231
        %v1436 = vpop.f32.mrb[0].mxu0
        %v1437 = vadd.f32 %v1161, %v1436
        %v1438 = vpop.f32.mrb[0].mxu0
        %1439 = vmatprep.mubr.f32.mxu0 0.0
        %1440 = vmatmul.mubr.f32.gmra.mrb[0].mxu0 %v1234
        %v1441 = vpop.f32.mrb[0].mxu0
        %v1442 = vadd.f32 %v1161, %v1441
        %v1443 = vpop.f32.mrb[0].mxu0
        %1444 = vmatprep.mubr.f32.mxu0 0.0
        %1445 = vmatmul.mubr.f32.gmra.mrb[0].mxu0 %v1237
        %v1446 = vpop.f32.mrb[0].mxu0
        %v1447 = vadd.f32 %v1161, %v1446
        %v1448 = vpop.f32.mrb[0].mxu0
        %1449 = vmatprep.mubr.f32.mxu0 0.0
        %1450 = vmatmul.mubr.f32.gmra.mrb[0].mxu0 %v1240
        %v1451 = vpop.f32.mrb[0].mxu0
        %v1452 = vadd.f32 %v1161, %v1451
        %v1453 = vpop.f32.mrb[0].mxu0
        %1454 = vmatprep.mubr.f32.mxu0 0.0
        %1455 = vmatmul.mubr.f32.gmra.mrb[0].mxu0 %v1243
        %v1456 = vpop.f32.mrb[0].mxu0
        %v1457 = vadd.f32 %v1161, %v1456
        %v1458 = vpop.f32.mrb[0].mxu0
        %1459 = vmatprep.mubr.f32.mxu0 0.0
        %1460 = vmatmul.mubr.f32.gmra.mrb[0].mxu0 %v1246
        %v1461 = vpop.f32.mrb[0].mxu0
        %v1462 = vadd.f32 %v1161, %v1461
        %v1463 = vpop.f32.mrb[0].mxu0
        %1464 = vmatprep.mubr.f32.mxu0 0.0
        %1465 = vmatmul.mubr.f32.gmra.mrb[0].mxu0 %v1249
        %v1466 = vpop.f32.mrb[0].mxu0
        %v1467 = vadd.f32 %v1161, %v1466
        %v1468 = vpop.f32.mrb[0].mxu0
        %1469 = vmatprep.mubr.f32.mxu0 0.0
        %1470 = vmatmul.mubr.f32.gmra.mrb[0].mxu0 %v1252
        %v1471 = vpop.f32.mrb[0].mxu0
        %v1472 = vadd.f32 %v1161, %v1471
        %v1473 = vpop.f32.mrb[0].mxu0
        %1474 = vmatprep.mubr.f32.mxu0 0.0
        %1475 = vmatmul.mubr.f32.gmra.mrb[0].mxu0 %v1255
        %v1476 = vpop.f32.mrb[0].mxu0
        %v1477 = vadd.f32 %v1161, %v1476
        %v1478 = vpop.f32.mrb[0].mxu0
        %1479 = vmatprep.mubr.f32.mxu0 0.0
        %1480 = vmatmul.mubr.f32.gmra.mrb[0].mxu0 %v1258
        %v1481 = vpop.f32.mrb[0].mxu0
        %v1482 = vadd.f32 %v1161, %v1481
        %v1483 = vpop.f32.mrb[0].mxu0
        %1484 = vdwg.mxu0
        %vm1485 = vcmp.gt.f32.partialorder %v1327, 20.0
        %vm1486 = vcmp.gt.f32.partialorder %v1332, 20.0
        %vm1487 = vcmp.gt.f32.partialorder %v1337, 20.0
        %vm1488 = vcmp.gt.f32.partialorder %v1342, 20.0
        %vm1489 = vcmp.gt.f32.partialorder %v1347, 20.0
        %vm1490 = vcmp.gt.f32.partialorder %v1352, 20.0
        %vm1491 = vcmp.gt.f32.partialorder %v1357, 20.0
        %vm1492 = vcmp.gt.f32.partialorder %v1362, 20.0
        %vm1493 = vcmp.gt.f32.partialorder %v1367, 20.0
        %vm1494 = vcmp.gt.f32.partialorder %v1372, 20.0
        %vm1495 = vcmp.gt.f32.partialorder %v1377, 20.0
        %vm1496 = vcmp.gt.f32.partialorder %v1382, 20.0
        %vm1497 = vcmp.gt.f32.partialorder %v1387, 20.0
        %vm1498 = vcmp.gt.f32.partialorder %v1392, 20.0
        %vm1499 = vcmp.gt.f32.partialorder %v1397, 20.0
        %vm1500 = vcmp.gt.f32.partialorder %v1402, 20.0
        %vm1501 = vcmp.gt.f32.partialorder %v1407, 20.0
        %vm1502 = vcmp.gt.f32.partialorder %v1412, 20.0
        %vm1503 = vcmp.gt.f32.partialorder %v1417, 20.0
        %vm1504 = vcmp.gt.f32.partialorder %v1422, 20.0
        %vm1505 = vcmp.gt.f32.partialorder %v1427, 20.0
        %vm1506 = vcmp.gt.f32.partialorder %v1432, 20.0
        %vm1507 = vcmp.gt.f32.partialorder %v1437, 20.0
        %vm1508 = vcmp.gt.f32.partialorder %v1442, 20.0
        %vm1509 = vcmp.gt.f32.partialorder %v1447, 20.0
        %vm1510 = vcmp.gt.f32.partialorder %v1452, 20.0
        %vm1511 = vcmp.gt.f32.partialorder %v1457, 20.0
        %vm1512 = vcmp.gt.f32.partialorder %v1462, 20.0
        %vm1513 = vcmp.gt.f32.partialorder %v1467, 20.0
        %vm1514 = vcmp.gt.f32.partialorder %v1472, 20.0
        %vm1515 = vcmp.gt.f32.partialorder %v1477, 20.0
        %vm1516 = vcmp.gt.f32.partialorder %v1482, 20.0
        %v1517 = vmin.f32 %v1327, 20.0
        %v1518 = vmin.f32 %v1332, 20.0
        %v1519 = vmin.f32 %v1337, 20.0
        %v1520 = vmin.f32 %v1342, 20.0
        %v1521 = vmin.f32 %v1347, 20.0
        %v1522 = vmin.f32 %v1352, 20.0
        %v1523 = vmin.f32 %v1357, 20.0
        %v1524 = vmin.f32 %v1362, 20.0
        %v1525 = vmin.f32 %v1367, 20.0
        %v1526 = vmin.f32 %v1372, 20.0
        %v1527 = vmin.f32 %v1377, 20.0
        %v1528 = vmin.f32 %v1382, 20.0
        %v1529 = vmin.f32 %v1387, 20.0
        %v1530 = vmin.f32 %v1392, 20.0
        %v1531 = vmin.f32 %v1397, 20.0
        %v1532 = vmin.f32 %v1402, 20.0
        %v1533 = vmin.f32 %v1407, 20.0
        %v1534 = vmin.f32 %v1412, 20.0
        %v1535 = vmin.f32 %v1417, 20.0
        %v1536 = vmin.f32 %v1422, 20.0
        %v1537 = vmin.f32 %v1427, 20.0
        %v1538 = vmin.f32 %v1432, 20.0
        %v1539 = vmin.f32 %v1437, 20.0
        %v1540 = vmin.f32 %v1442, 20.0
        %v1541 = vmin.f32 %v1447, 20.0
        %v1542 = vmin.f32 %v1452, 20.0
        %v1543 = vmin.f32 %v1457, 20.0
        %v1544 = vmin.f32 %v1462, 20.0
        %v1545 = vmin.f32 %v1467, 20.0
        %v1546 = vmin.f32 %v1472, 20.0
        %v1547 = vmin.f32 %v1477, 20.0
        %v1548 = vmin.f32 %v1482, 20.0
        %v1549 = vmul.f32 %v1517, 1.442695
        %v1550 = vpow.pop %v1549
        %v1551 = vmul.f32 %v1518, 1.442695
        %v1552 = vpow.pop %v1551
        %v1553 = vmul.f32 %v1519, 1.442695
        %v1554 = vpow.pop %v1553
        %v1555 = vmul.f32 %v1520, 1.442695
        %v1556 = vpow.pop %v1555
        %v1557 = vmul.f32 %v1521, 1.442695
        %v1558 = vpow.pop %v1557
        %v1559 = vmul.f32 %v1522, 1.442695
        %v1560 = vpow.pop %v1559
        %v1561 = vmul.f32 %v1523, 1.442695
        %v1562 = vpow.pop %v1561
        %v1563 = vmul.f32 %v1524, 1.442695
        %v1564 = vpow.pop %v1563
        %v1565 = vmul.f32 %v1525, 1.442695
        %v1566 = vpow.pop %v1565
        %v1567 = vmul.f32 %v1526, 1.442695
        %v1568 = vpow.pop %v1567
        %v1569 = vmul.f32 %v1527, 1.442695
        %v1570 = vpow.pop %v1569
        %v1571 = vmul.f32 %v1528, 1.442695
        %v1572 = vpow.pop %v1571
        %v1573 = vmul.f32 %v1529, 1.442695
        %v1574 = vpow.pop %v1573
        %v1575 = vmul.f32 %v1530, 1.442695
        %v1576 = vpow.pop %v1575
        %v1577 = vmul.f32 %v1531, 1.442695
        %v1578 = vpow.pop %v1577
        %v1579 = vmul.f32 %v1532, 1.442695
        %v1580 = vpow.pop %v1579
        %v1581 = vmul.f32 %v1533, 1.442695
        %v1582 = vpow.pop %v1581
        %v1583 = vmul.f32 %v1534, 1.442695
        %v1584 = vpow.pop %v1583
        %v1585 = vmul.f32 %v1535, 1.442695
        %v1586 = vpow.pop %v1585
        %v1587 = vmul.f32 %v1536, 1.442695
        %v1588 = vpow.pop %v1587
        %v1589 = vmul.f32 %v1537, 1.442695
        %v1590 = vpow.pop %v1589
        %v1591 = vmul.f32 %v1538, 1.442695
        %v1592 = vpow.pop %v1591
        %v1593 = vmul.f32 %v1539, 1.442695
        %v1594 = vpow.pop %v1593
        %v1595 = vmul.f32 %v1540, 1.442695
        %v1596 = vpow.pop %v1595
        %v1597 = vmul.f32 %v1541, 1.442695
        %v1598 = vpow.pop %v1597
        %v1599 = vmul.f32 %v1542, 1.442695
        %v1600 = vpow.pop %v1599
        %v1601 = vmul.f32 %v1543, 1.442695
        %v1602 = vpow.pop %v1601
        %v1603 = vmul.f32 %v1544, 1.442695
        %v1604 = vpow.pop %v1603
        %v1605 = vmul.f32 %v1545, 1.442695
        %v1606 = vpow.pop %v1605
        %v1607 = vmul.f32 %v1546, 1.442695
        %v1608 = vpow.pop %v1607
        %v1609 = vmul.f32 %v1547, 1.442695
        %v1610 = vpow.pop %v1609
        %v1611 = vmul.f32 %v1548, 1.442695
        %v1612 = vpow.pop %v1611
        %v1613 = vadd.f32 %v1550, 1.0
        %v1614 = vlog2.pop %v1613
        %v1615 = vmul.f32 %v1614, 0.6931472
        %v1616 = vmul.f32 -0.5, %v1550
        %v1617 = vadd.f32 %v1616, 1.0
        %v1618 = vmul.f32 %v1617, %v1550
        %v1619 = vand.u32 2147483647, %v1550
        %vm1620 = vcmp.lt.f32.partialorder %v1619, 0.0004427343
        %v1621 = vsel %vm1620, %v1618, %v1615
        %v1622 = vadd.f32 %v1552, 1.0
        %v1623 = vlog2.pop %v1622
        %v1624 = vmul.f32 %v1623, 0.6931472
        %v1625 = vmul.f32 -0.5, %v1552
        %v1626 = vadd.f32 %v1625, 1.0
        %v1627 = vmul.f32 %v1626, %v1552
        %v1628 = vand.u32 2147483647, %v1552
        %vm1629 = vcmp.lt.f32.partialorder %v1628, 0.0004427343
        %v1630 = vsel %vm1629, %v1627, %v1624
        %v1631 = vadd.f32 %v1554, 1.0
        %v1632 = vlog2.pop %v1631
        %v1633 = vmul.f32 %v1632, 0.6931472
        %v1634 = vmul.f32 -0.5, %v1554
        %v1635 = vadd.f32 %v1634, 1.0
        %v1636 = vmul.f32 %v1635, %v1554
        %v1637 = vand.u32 2147483647, %v1554
        %vm1638 = vcmp.lt.f32.partialorder %v1637, 0.0004427343
        %v1639 = vsel %vm1638, %v1636, %v1633
        %v1640 = vadd.f32 %v1556, 1.0
        %v1641 = vlog2.pop %v1640
        %v1642 = vmul.f32 %v1641, 0.6931472
        %v1643 = vmul.f32 -0.5, %v1556
        %v1644 = vadd.f32 %v1643, 1.0
        %v1645 = vmul.f32 %v1644, %v1556
        %v1646 = vand.u32 2147483647, %v1556
        %vm1647 = vcmp.lt.f32.partialorder %v1646, 0.0004427343
        %v1648 = vsel %vm1647, %v1645, %v1642
        %v1649 = vadd.f32 %v1558, 1.0
        %v1650 = vlog2.pop %v1649
        %v1651 = vmul.f32 %v1650, 0.6931472
        %v1652 = vmul.f32 -0.5, %v1558
        %v1653 = vadd.f32 %v1652, 1.0
        %v1654 = vmul.f32 %v1653, %v1558
        %v1655 = vand.u32 2147483647, %v1558
        %vm1656 = vcmp.lt.f32.partialorder %v1655, 0.0004427343
        %v1657 = vsel %vm1656, %v1654, %v1651
        %v1658 = vadd.f32 %v1560, 1.0
        %v1659 = vlog2.pop %v1658
        %v1660 = vmul.f32 %v1659, 0.6931472
        %v1661 = vmul.f32 -0.5, %v1560
        %v1662 = vadd.f32 %v1661, 1.0
        %v1663 = vmul.f32 %v1662, %v1560
        %v1664 = vand.u32 2147483647, %v1560
        %vm1665 = vcmp.lt.f32.partialorder %v1664, 0.0004427343
        %v1666 = vsel %vm1665, %v1663, %v1660
        %v1667 = vadd.f32 %v1562, 1.0
        %v1668 = vlog2.pop %v1667
        %v1669 = vmul.f32 %v1668, 0.6931472
        %v1670 = vmul.f32 -0.5, %v1562
        %v1671 = vadd.f32 %v1670, 1.0
        %v1672 = vmul.f32 %v1671, %v1562
        %v1673 = vand.u32 2147483647, %v1562
        %vm1674 = vcmp.lt.f32.partialorder %v1673, 0.0004427343
        %v1675 = vsel %vm1674, %v1672, %v1669
        %v1676 = vadd.f32 %v1564, 1.0
        %v1677 = vlog2.pop %v1676
        %v1678 = vmul.f32 %v1677, 0.6931472
        %v1679 = vmul.f32 -0.5, %v1564
        %v1680 = vadd.f32 %v1679, 1.0
        %v1681 = vmul.f32 %v1680, %v1564
        %v1682 = vand.u32 2147483647, %v1564
        %vm1683 = vcmp.lt.f32.partialorder %v1682, 0.0004427343
        %v1684 = vsel %vm1683, %v1681, %v1678
        %v1685 = vadd.f32 %v1566, 1.0
        %v1686 = vlog2.pop %v1685
        %v1687 = vmul.f32 %v1686, 0.6931472
        %v1688 = vmul.f32 -0.5, %v1566
        %v1689 = vadd.f32 %v1688, 1.0
        %v1690 = vmul.f32 %v1689, %v1566
        %v1691 = vand.u32 2147483647, %v1566
        %vm1692 = vcmp.lt.f32.partialorder %v1691, 0.0004427343
        %v1693 = vsel %vm1692, %v1690, %v1687
        %v1694 = vadd.f32 %v1568, 1.0
        %v1695 = vlog2.pop %v1694
        %v1696 = vmul.f32 %v1695, 0.6931472
        %v1697 = vmul.f32 -0.5, %v1568
        %v1698 = vadd.f32 %v1697, 1.0
        %v1699 = vmul.f32 %v1698, %v1568
        %v1700 = vand.u32 2147483647, %v1568
        %vm1701 = vcmp.lt.f32.partialorder %v1700, 0.0004427343
        %v1702 = vsel %vm1701, %v1699, %v1696
        %v1703 = vadd.f32 %v1570, 1.0
        %v1704 = vlog2.pop %v1703
        %v1705 = vmul.f32 %v1704, 0.6931472
        %v1706 = vmul.f32 -0.5, %v1570
        %v1707 = vadd.f32 %v1706, 1.0
        %v1708 = vmul.f32 %v1707, %v1570
        %v1709 = vand.u32 2147483647, %v1570
        %vm1710 = vcmp.lt.f32.partialorder %v1709, 0.0004427343
        %v1711 = vsel %vm1710, %v1708, %v1705
        %v1712 = vadd.f32 %v1572, 1.0
        %v1713 = vlog2.pop %v1712
        %v1714 = vmul.f32 %v1713, 0.6931472
        %v1715 = vmul.f32 -0.5, %v1572
        %v1716 = vadd.f32 %v1715, 1.0
        %v1717 = vmul.f32 %v1716, %v1572
        %v1718 = vand.u32 2147483647, %v1572
        %vm1719 = vcmp.lt.f32.partialorder %v1718, 0.0004427343
        %v1720 = vsel %vm1719, %v1717, %v1714
        %v1721 = vadd.f32 %v1574, 1.0
        %v1722 = vlog2.pop %v1721
        %v1723 = vmul.f32 %v1722, 0.6931472
        %v1724 = vmul.f32 -0.5, %v1574
        %v1725 = vadd.f32 %v1724, 1.0
        %v1726 = vmul.f32 %v1725, %v1574
        %v1727 = vand.u32 2147483647, %v1574
        %vm1728 = vcmp.lt.f32.partialorder %v1727, 0.0004427343
        %v1729 = vsel %vm1728, %v1726, %v1723
        %v1730 = vadd.f32 %v1576, 1.0
        %v1731 = vlog2.pop %v1730
        %v1732 = vmul.f32 %v1731, 0.6931472
        %v1733 = vmul.f32 -0.5, %v1576
        %v1734 = vadd.f32 %v1733, 1.0
        %v1735 = vmul.f32 %v1734, %v1576
        %v1736 = vand.u32 2147483647, %v1576
        %vm1737 = vcmp.lt.f32.partialorder %v1736, 0.0004427343
        %v1738 = vsel %vm1737, %v1735, %v1732
        %v1739 = vadd.f32 %v1578, 1.0
        %v1740 = vlog2.pop %v1739
        %v1741 = vmul.f32 %v1740, 0.6931472
        %v1742 = vmul.f32 -0.5, %v1578
        %v1743 = vadd.f32 %v1742, 1.0
        %v1744 = vmul.f32 %v1743, %v1578
        %v1745 = vand.u32 2147483647, %v1578
        %vm1746 = vcmp.lt.f32.partialorder %v1745, 0.0004427343
        %v1747 = vsel %vm1746, %v1744, %v1741
        %v1748 = vadd.f32 %v1580, 1.0
        %v1749 = vlog2.pop %v1748
        %v1750 = vmul.f32 %v1749, 0.6931472
        %v1751 = vmul.f32 -0.5, %v1580
        %v1752 = vadd.f32 %v1751, 1.0
        %v1753 = vmul.f32 %v1752, %v1580
        %v1754 = vand.u32 2147483647, %v1580
        %vm1755 = vcmp.lt.f32.partialorder %v1754, 0.0004427343
        %v1756 = vsel %vm1755, %v1753, %v1750
        %v1757 = vadd.f32 %v1582, 1.0
        %v1758 = vlog2.pop %v1757
        %v1759 = vmul.f32 %v1758, 0.6931472
        %v1760 = vmul.f32 -0.5, %v1582
        %v1761 = vadd.f32 %v1760, 1.0
        %v1762 = vmul.f32 %v1761, %v1582
        %v1763 = vand.u32 2147483647, %v1582
        %vm1764 = vcmp.lt.f32.partialorder %v1763, 0.0004427343
        %v1765 = vsel %vm1764, %v1762, %v1759
        %v1766 = vadd.f32 %v1584, 1.0
        %v1767 = vlog2.pop %v1766
        %v1768 = vmul.f32 %v1767, 0.6931472
        %v1769 = vmul.f32 -0.5, %v1584
        %v1770 = vadd.f32 %v1769, 1.0
        %v1771 = vmul.f32 %v1770, %v1584
        %v1772 = vand.u32 2147483647, %v1584
        %vm1773 = vcmp.lt.f32.partialorder %v1772, 0.0004427343
        %v1774 = vsel %vm1773, %v1771, %v1768
        %v1775 = vadd.f32 %v1586, 1.0
        %v1776 = vlog2.pop %v1775
        %v1777 = vmul.f32 %v1776, 0.6931472
        %v1778 = vmul.f32 -0.5, %v1586
        %v1779 = vadd.f32 %v1778, 1.0
        %v1780 = vmul.f32 %v1779, %v1586
        %v1781 = vand.u32 2147483647, %v1586
        %vm1782 = vcmp.lt.f32.partialorder %v1781, 0.0004427343
        %v1783 = vsel %vm1782, %v1780, %v1777
        %v1784 = vadd.f32 %v1588, 1.0
        %v1785 = vlog2.pop %v1784
        %v1786 = vmul.f32 %v1785, 0.6931472
        %v1787 = vmul.f32 -0.5, %v1588
        %v1788 = vadd.f32 %v1787, 1.0
        %v1789 = vmul.f32 %v1788, %v1588
        %v1790 = vand.u32 2147483647, %v1588
        %vm1791 = vcmp.lt.f32.partialorder %v1790, 0.0004427343
        %v1792 = vsel %vm1791, %v1789, %v1786
        %v1793 = vadd.f32 %v1590, 1.0
        %v1794 = vlog2.pop %v1793
        %v1795 = vmul.f32 %v1794, 0.6931472
        %v1796 = vmul.f32 -0.5, %v1590
        %v1797 = vadd.f32 %v1796, 1.0
        %v1798 = vmul.f32 %v1797, %v1590
        %v1799 = vand.u32 2147483647, %v1590
        %vm1800 = vcmp.lt.f32.partialorder %v1799, 0.0004427343
        %v1801 = vsel %vm1800, %v1798, %v1795
        %v1802 = vadd.f32 %v1592, 1.0
        %v1803 = vlog2.pop %v1802
        %v1804 = vmul.f32 %v1803, 0.6931472
        %v1805 = vmul.f32 -0.5, %v1592
        %v1806 = vadd.f32 %v1805, 1.0
        %v1807 = vmul.f32 %v1806, %v1592
        %v1808 = vand.u32 2147483647, %v1592
        %vm1809 = vcmp.lt.f32.partialorder %v1808, 0.0004427343
        %v1810 = vsel %vm1809, %v1807, %v1804
        %v1811 = vadd.f32 %v1594, 1.0
        %v1812 = vlog2.pop %v1811
        %v1813 = vmul.f32 %v1812, 0.6931472
        %v1814 = vmul.f32 -0.5, %v1594
        %v1815 = vadd.f32 %v1814, 1.0
        %v1816 = vmul.f32 %v1815, %v1594
        %v1817 = vand.u32 2147483647, %v1594
        %vm1818 = vcmp.lt.f32.partialorder %v1817, 0.0004427343
        %v1819 = vsel %vm1818, %v1816, %v1813
        %v1820 = vadd.f32 %v1596, 1.0
        %v1821 = vlog2.pop %v1820
        %v1822 = vmul.f32 %v1821, 0.6931472
        %v1823 = vmul.f32 -0.5, %v1596
        %v1824 = vadd.f32 %v1823, 1.0
        %v1825 = vmul.f32 %v1824, %v1596
        %v1826 = vand.u32 2147483647, %v1596
        %vm1827 = vcmp.lt.f32.partialorder %v1826, 0.0004427343
        %v1828 = vsel %vm1827, %v1825, %v1822
        %v1829 = vadd.f32 %v1598, 1.0
        %v1830 = vlog2.pop %v1829
        %v1831 = vmul.f32 %v1830, 0.6931472
        %v1832 = vmul.f32 -0.5, %v1598
        %v1833 = vadd.f32 %v1832, 1.0
        %v1834 = vmul.f32 %v1833, %v1598
        %v1835 = vand.u32 2147483647, %v1598
        %vm1836 = vcmp.lt.f32.partialorder %v1835, 0.0004427343
        %v1837 = vsel %vm1836, %v1834, %v1831
        %v1838 = vadd.f32 %v1600, 1.0
        %v1839 = vlog2.pop %v1838
        %v1840 = vmul.f32 %v1839, 0.6931472
        %v1841 = vmul.f32 -0.5, %v1600
        %v1842 = vadd.f32 %v1841, 1.0
        %v1843 = vmul.f32 %v1842, %v1600
        %v1844 = vand.u32 2147483647, %v1600
        %vm1845 = vcmp.lt.f32.partialorder %v1844, 0.0004427343
        %v1846 = vsel %vm1845, %v1843, %v1840
        %v1847 = vadd.f32 %v1602, 1.0
        %v1848 = vlog2.pop %v1847
        %v1849 = vmul.f32 %v1848, 0.6931472
        %v1850 = vmul.f32 -0.5, %v1602
        %v1851 = vadd.f32 %v1850, 1.0
        %v1852 = vmul.f32 %v1851, %v1602
        %v1853 = vand.u32 2147483647, %v1602
        %vm1854 = vcmp.lt.f32.partialorder %v1853, 0.0004427343
        %v1855 = vsel %vm1854, %v1852, %v1849
        %v1856 = vadd.f32 %v1604, 1.0
        %v1857 = vlog2.pop %v1856
        %v1858 = vmul.f32 %v1857, 0.6931472
        %v1859 = vmul.f32 -0.5, %v1604
        %v1860 = vadd.f32 %v1859, 1.0
        %v1861 = vmul.f32 %v1860, %v1604
        %v1862 = vand.u32 2147483647, %v1604
        %vm1863 = vcmp.lt.f32.partialorder %v1862, 0.0004427343
        %v1864 = vsel %vm1863, %v1861, %v1858
        %v1865 = vadd.f32 %v1606, 1.0
        %v1866 = vlog2.pop %v1865
        %v1867 = vmul.f32 %v1866, 0.6931472
        %v1868 = vmul.f32 -0.5, %v1606
        %v1869 = vadd.f32 %v1868, 1.0
        %v1870 = vmul.f32 %v1869, %v1606
        %v1871 = vand.u32 2147483647, %v1606
        %vm1872 = vcmp.lt.f32.partialorder %v1871, 0.0004427343
        %v1873 = vsel %vm1872, %v1870, %v1867
        %v1874 = vadd.f32 %v1608, 1.0
        %v1875 = vlog2.pop %v1874
        %v1876 = vmul.f32 %v1875, 0.6931472
        %v1877 = vmul.f32 -0.5, %v1608
        %v1878 = vadd.f32 %v1877, 1.0
        %v1879 = vmul.f32 %v1878, %v1608
        %v1880 = vand.u32 2147483647, %v1608
        %vm1881 = vcmp.lt.f32.partialorder %v1880, 0.0004427343
        %v1882 = vsel %vm1881, %v1879, %v1876
        %v1883 = vadd.f32 %v1610, 1.0
        %v1884 = vlog2.pop %v1883
        %v1885 = vmul.f32 %v1884, 0.6931472
        %v1886 = vmul.f32 -0.5, %v1610
        %v1887 = vadd.f32 %v1886, 1.0
        %v1888 = vmul.f32 %v1887, %v1610
        %v1889 = vand.u32 2147483647, %v1610
        %vm1890 = vcmp.lt.f32.partialorder %v1889, 0.0004427343
        %v1891 = vsel %vm1890, %v1888, %v1885
        %v1892 = vadd.f32 %v1612, 1.0
        %v1893 = vlog2.pop %v1892
        %v1894 = vmul.f32 %v1893, 0.6931472
        %v1895 = vmul.f32 -0.5, %v1612
        %v1896 = vadd.f32 %v1895, 1.0
        %v1897 = vmul.f32 %v1896, %v1612
        %v1898 = vand.u32 2147483647, %v1612
        %vm1899 = vcmp.lt.f32.partialorder %v1898, 0.0004427343
        %v1900 = vsel %vm1899, %v1897, %v1894
        %v1901 = vsel %vm1485, %v1327, %v1621
        %v1902 = vsel %vm1486, %v1332, %v1630
        %v1903 = vsel %vm1487, %v1337, %v1639
        %v1904 = vsel %vm1488, %v1342, %v1648
        %v1905 = vsel %vm1489, %v1347, %v1657
        %v1906 = vsel %vm1490, %v1352, %v1666
        %v1907 = vsel %vm1491, %v1357, %v1675
        %v1908 = vsel %vm1492, %v1362, %v1684
        %v1909 = vsel %vm1493, %v1367, %v1693
        %v1910 = vsel %vm1494, %v1372, %v1702
        %v1911 = vsel %vm1495, %v1377, %v1711
        %v1912 = vsel %vm1496, %v1382, %v1720
        %v1913 = vsel %vm1497, %v1387, %v1729
        %v1914 = vsel %vm1498, %v1392, %v1738
        %v1915 = vsel %vm1499, %v1397, %v1747
        %v1916 = vsel %vm1500, %v1402, %v1756
        %v1917 = vsel %vm1501, %v1407, %v1765
        %v1918 = vsel %vm1502, %v1412, %v1774
        %v1919 = vsel %vm1503, %v1417, %v1783
        %v1920 = vsel %vm1504, %v1422, %v1792
        %v1921 = vsel %vm1505, %v1427, %v1801
        %v1922 = vsel %vm1506, %v1432, %v1810
        %v1923 = vsel %vm1507, %v1437, %v1819
        %v1924 = vsel %vm1508, %v1442, %v1828
        %v1925 = vsel %vm1509, %v1447, %v1837
        %v1926 = vsel %vm1510, %v1452, %v1846
        %v1927 = vsel %vm1511, %v1457, %v1855
        %v1928 = vsel %vm1512, %v1462, %v1864
        %v1929 = vsel %vm1513, %v1467, %v1873
        %v1930 = vsel %vm1514, %v1472, %v1882
        %v1931 = vsel %vm1515, %v1477, %v1891
        %v1932 = vsel %vm1516, %v1482, %v1900
        %s1933 = scalar_lea.vmem %s3, 32
        %v1934 = vld [vmem:[%s1933] sm:$0xff]
        %v1935 = vld [vmem:[%s1933 + $0x8] sm:$0xff]
        %v1936 = vld [vmem:[%s1933 + $0x10] sm:$0xff]
        %v1937 = vld [vmem:[%s1933 + $0x18] sm:$0xff]
        %s1938 = scalar_lea.vmem %s4, 1
        %v1939 = vld [vmem:[%s1938] sm:$0x1]
        %v1941 = vlaneseq
        %v1942 = vshrl.u32 %v1941, 7
        %v1943 = vsub.s32 0, %v1942
        %v1944 = vrot.slane %v1939, %v1943
        %v1947 = vsel %vm1163, %v1901, 0
        %v1950 = vsel %vm1163, %v1902, 0
        %v1953 = vsel %vm1163, %v1903, 0
        %v1956 = vsel %vm1163, %v1904, 0
        %v1959 = vsel %vm1163, %v1905, 0
        %v1962 = vsel %vm1163, %v1906, 0
        %v1965 = vsel %vm1163, %v1907, 0
        %v1968 = vsel %vm1163, %v1908, 0
        %v1971 = vsel %vm1163, %v1909, 0
        %v1974 = vsel %vm1163, %v1910, 0
        %v1977 = vsel %vm1163, %v1911, 0
        %v1980 = vsel %vm1163, %v1912, 0
        %v1983 = vsel %vm1163, %v1913, 0
        %v1986 = vsel %vm1163, %v1914, 0
        %v1989 = vsel %vm1163, %v1915, 0
        %v1992 = vsel %vm1163, %v1916, 0
        %v1995 = vsel %vm1163, %v1917, 0
        %v1998 = vsel %vm1163, %v1918, 0
        %v2001 = vsel %vm1163, %v1919, 0
        %v2004 = vsel %vm1163, %v1920, 0
        %v2007 = vsel %vm1163, %v1921, 0
        %v2010 = vsel %vm1163, %v1922, 0
        %v2013 = vsel %vm1163, %v1923, 0
        %v2016 = vsel %vm1163, %v1924, 0
        %v2019 = vsel %vm1163, %v1925, 0
        %v2022 = vsel %vm1163, %v1926, 0
        %v2025 = vsel %vm1163, %v1927, 0
        %v2028 = vsel %vm1163, %v1928, 0
        %v2031 = vsel %vm1163, %v1929, 0
        %v2034 = vsel %vm1163, %v1930, 0
        %v2037 = vsel %vm1163, %v1931, 0
        %v2040 = vsel %vm1163, %v1932, 0
        %2042 = vmatprep.subr.mxu0 0.0
        %2043 = vmatpush1.msra.mxu0 %v1934
        %2044 = vmatprep.subr.mxu0 0.0
        %2045 = vmatpush1.msra.mxu0 %v1935
        %2046 = vmatprep.subr.mxu0 0.0
        %2047 = vmatpush1.msra.mxu0 %v1936
        %2048 = vmatprep.subr.mxu0 0.0
        %2049 = vmatpush1.msra.mxu0 %v1937
        %2050 = vmatprep.subr.mxu0 0.0
        %2051 = vmatpush1.msra.mxu0 0.0
        %2052 = vmatprep.subr.mxu0 0.0
        %2053 = vmatpush1.msra.mxu0 0.0
        %2054 = vmatprep.subr.mxu0 0.0
        %2055 = vmatpush1.msra.mxu0 0.0
        %2056 = vmatprep.subr.mxu0 0.0
        %2057 = vmatpush1.msra.mxu0 0.0
        %2058 = vmatprep.subr.mxu0 0.0
        %2059 = vmatpush1.msra.mxu0 0.0
        %2060 = vmatprep.subr.mxu0 0.0
        %2061 = vmatpush1.msra.mxu0 0.0
        %2062 = vmatprep.subr.mxu0 0.0
        %2063 = vmatpush1.msra.mxu0 0.0
        %2064 = vmatprep.subr.mxu0 0.0
        %2065 = vmatpush1.msra.mxu0 0.0
        %2066 = vmatprep.subr.mxu0 0.0
        %2067 = vmatpush1.msra.mxu0 0.0
        %2068 = vmatprep.subr.mxu0 0.0
        %2069 = vmatpush1.msra.mxu0 0.0
        %2070 = vmatprep.subr.mxu0 0.0
        %2071 = vmatpush1.msra.mxu0 0.0
        %2072 = vmatprep.subr.mxu0 0.0
        %2073 = vmatpush1.msra.mxu0 0.0
        %2074 = vmatprep.subr.mxu0 0.0
        %2075 = vmatpush1.msra.mxu0 0.0
        %2076 = vmatprep.subr.mxu0 0.0
        %2077 = vmatpush1.msra.mxu0 0.0
        %2078 = vmatprep.subr.mxu0 0.0
        %2079 = vmatpush1.msra.mxu0 0.0
        %2080 = vmatprep.subr.mxu0 0.0
        %2081 = vmatpush1.msra.mxu0 0.0
        %2082 = vmatprep.subr.mxu0 0.0
        %2083 = vmatpush1.msra.mxu0 0.0
        %2084 = vmatprep.subr.mxu0 0.0
        %2085 = vmatpush1.msra.mxu0 0.0
        %2086 = vmatprep.subr.mxu0 0.0
        %2087 = vmatpush1.msra.mxu0 0.0
        %2088 = vmatprep.subr.mxu0 0.0
        %2089 = vmatpush1.msra.mxu0 0.0
        %2090 = vmatprep.subr.mxu0 0.0
        %2091 = vmatpush1.msra.mxu0 0.0
        %2092 = vmatprep.subr.mxu0 0.0
        %2093 = vmatpush1.msra.mxu0 0.0
        %2094 = vmatprep.subr.mxu0 0.0
        %2095 = vmatpush1.msra.mxu0 0.0
        %2096 = vmatprep.subr.mxu0 0.0
        %2097 = vmatpush1.msra.mxu0 0.0
        %2098 = vmatprep.subr.mxu0 0.0
        %2099 = vmatpush1.msra.mxu0 0.0
        %2100 = vmatprep.subr.mxu0 0.0
        %2101 = vmatpush1.msra.mxu0 0.0
        %2102 = vmatprep.subr.mxu0 0.0
        %2103 = vmatpush1.msra.mxu0 0.0
        %2104 = vmatprep.subr.mxu0 0.0
        %2105 = vmatpush1.msra.mxu0 0.0
        %2106 = vmatprep.mubr.f32.mxu0 0.0
        %2107 = vmatmul.mubr.f32.gmra.mrb[0].mxu0 %v1947
        %v2108 = vpop.f32.mrb[0].mxu0
        %v2109 = vadd.f32 %v1944, %v2108
        %v2110 = vpop.f32.mrb[0].mxu0
        %2111 = vmatprep.mubr.f32.mxu0 0.0
        %2112 = vmatmul.mubr.f32.gmra.mrb[0].mxu0 %v1950
        %v2113 = vpop.f32.mrb[0].mxu0
        %v2114 = vadd.f32 %v1944, %v2113
        %v2115 = vpop.f32.mrb[0].mxu0
        %2116 = vmatprep.mubr.f32.mxu0 0.0
        %2117 = vmatmul.mubr.f32.gmra.mrb[0].mxu0 %v1953
        %v2118 = vpop.f32.mrb[0].mxu0
        %v2119 = vadd.f32 %v1944, %v2118
        %v2120 = vpop.f32.mrb[0].mxu0
        %2121 = vmatprep.mubr.f32.mxu0 0.0
        %2122 = vmatmul.mubr.f32.gmra.mrb[0].mxu0 %v1956
        %v2123 = vpop.f32.mrb[0].mxu0
        %v2124 = vadd.f32 %v1944, %v2123
        %v2125 = vpop.f32.mrb[0].mxu0
        %2126 = vmatprep.mubr.f32.mxu0 0.0
        %2127 = vmatmul.mubr.f32.gmra.mrb[0].mxu0 %v1959
        %v2128 = vpop.f32.mrb[0].mxu0
        %v2129 = vadd.f32 %v1944, %v2128
        %v2130 = vpop.f32.mrb[0].mxu0
        %2131 = vmatprep.mubr.f32.mxu0 0.0
        %2132 = vmatmul.mubr.f32.gmra.mrb[0].mxu0 %v1962
        %v2133 = vpop.f32.mrb[0].mxu0
        %v2134 = vadd.f32 %v1944, %v2133
        %v2135 = vpop.f32.mrb[0].mxu0
        %2136 = vmatprep.mubr.f32.mxu0 0.0
        %2137 = vmatmul.mubr.f32.gmra.mrb[0].mxu0 %v1965
        %v2138 = vpop.f32.mrb[0].mxu0
        %v2139 = vadd.f32 %v1944, %v2138
        %v2140 = vpop.f32.mrb[0].mxu0
        %2141 = vmatprep.mubr.f32.mxu0 0.0
        %2142 = vmatmul.mubr.f32.gmra.mrb[0].mxu0 %v1968
        %v2143 = vpop.f32.mrb[0].mxu0
        %v2144 = vadd.f32 %v1944, %v2143
        %v2145 = vpop.f32.mrb[0].mxu0
        %2146 = vmatprep.mubr.f32.mxu0 0.0
        %2147 = vmatmul.mubr.f32.gmra.mrb[0].mxu0 %v1971
        %v2148 = vpop.f32.mrb[0].mxu0
        %v2149 = vadd.f32 %v1944, %v2148
        %v2150 = vpop.f32.mrb[0].mxu0
        %2151 = vmatprep.mubr.f32.mxu0 0.0
        %2152 = vmatmul.mubr.f32.gmra.mrb[0].mxu0 %v1974
        %v2153 = vpop.f32.mrb[0].mxu0
        %v2154 = vadd.f32 %v1944, %v2153
        %v2155 = vpop.f32.mrb[0].mxu0
        %2156 = vmatprep.mubr.f32.mxu0 0.0
        %2157 = vmatmul.mubr.f32.gmra.mrb[0].mxu0 %v1977
        %v2158 = vpop.f32.mrb[0].mxu0
        %v2159 = vadd.f32 %v1944, %v2158
        %v2160 = vpop.f32.mrb[0].mxu0
        %2161 = vmatprep.mubr.f32.mxu0 0.0
        %2162 = vmatmul.mubr.f32.gmra.mrb[0].mxu0 %v1980
        %v2163 = vpop.f32.mrb[0].mxu0
        %v2164 = vadd.f32 %v1944, %v2163
        %v2165 = vpop.f32.mrb[0].mxu0
        %2166 = vmatprep.mubr.f32.mxu0 0.0
        %2167 = vmatmul.mubr.f32.gmra.mrb[0].mxu0 %v1983
        %v2168 = vpop.f32.mrb[0].mxu0
        %v2169 = vadd.f32 %v1944, %v2168
        %v2170 = vpop.f32.mrb[0].mxu0
        %2171 = vmatprep.mubr.f32.mxu0 0.0
        %2172 = vmatmul.mubr.f32.gmra.mrb[0].mxu0 %v1986
        %v2173 = vpop.f32.mrb[0].mxu0
        %v2174 = vadd.f32 %v1944, %v2173
        %v2175 = vpop.f32.mrb[0].mxu0
        %2176 = vmatprep.mubr.f32.mxu0 0.0
        %2177 = vmatmul.mubr.f32.gmra.mrb[0].mxu0 %v1989
        %v2178 = vpop.f32.mrb[0].mxu0
        %v2179 = vadd.f32 %v1944, %v2178
        %v2180 = vpop.f32.mrb[0].mxu0
        %2181 = vmatprep.mubr.f32.mxu0 0.0
        %2182 = vmatmul.mubr.f32.gmra.mrb[0].mxu0 %v1992
        %v2183 = vpop.f32.mrb[0].mxu0
        %v2184 = vadd.f32 %v1944, %v2183
        %v2185 = vpop.f32.mrb[0].mxu0
        %2186 = vmatprep.mubr.f32.mxu0 0.0
        %2187 = vmatmul.mubr.f32.gmra.mrb[0].mxu0 %v1995
        %v2188 = vpop.f32.mrb[0].mxu0
        %v2189 = vadd.f32 %v1944, %v2188
        %v2190 = vpop.f32.mrb[0].mxu0
        %2191 = vmatprep.mubr.f32.mxu0 0.0
        %2192 = vmatmul.mubr.f32.gmra.mrb[0].mxu0 %v1998
        %v2193 = vpop.f32.mrb[0].mxu0
        %v2194 = vadd.f32 %v1944, %v2193
        %v2195 = vpop.f32.mrb[0].mxu0
        %2196 = vmatprep.mubr.f32.mxu0 0.0
        %2197 = vmatmul.mubr.f32.gmra.mrb[0].mxu0 %v2001
        %v2198 = vpop.f32.mrb[0].mxu0
        %v2199 = vadd.f32 %v1944, %v2198
        %v2200 = vpop.f32.mrb[0].mxu0
        %2201 = vmatprep.mubr.f32.mxu0 0.0
        %2202 = vmatmul.mubr.f32.gmra.mrb[0].mxu0 %v2004
        %v2203 = vpop.f32.mrb[0].mxu0
        %v2204 = vadd.f32 %v1944, %v2203
        %v2205 = vpop.f32.mrb[0].mxu0
        %2206 = vmatprep.mubr.f32.mxu0 0.0
        %2207 = vmatmul.mubr.f32.gmra.mrb[0].mxu0 %v2007
        %v2208 = vpop.f32.mrb[0].mxu0
        %v2209 = vadd.f32 %v1944, %v2208
        %v2210 = vpop.f32.mrb[0].mxu0
        %2211 = vmatprep.mubr.f32.mxu0 0.0
        %2212 = vmatmul.mubr.f32.gmra.mrb[0].mxu0 %v2010
        %v2213 = vpop.f32.mrb[0].mxu0
        %v2214 = vadd.f32 %v1944, %v2213
        %v2215 = vpop.f32.mrb[0].mxu0
        %2216 = vmatprep.mubr.f32.mxu0 0.0
        %2217 = vmatmul.mubr.f32.gmra.mrb[0].mxu0 %v2013
        %v2218 = vpop.f32.mrb[0].mxu0
        %v2219 = vadd.f32 %v1944, %v2218
        %v2220 = vpop.f32.mrb[0].mxu0
        %2221 = vmatprep.mubr.f32.mxu0 0.0
        %2222 = vmatmul.mubr.f32.gmra.mrb[0].mxu0 %v2016
        %v2223 = vpop.f32.mrb[0].mxu0
        %v2224 = vadd.f32 %v1944, %v2223
        %v2225 = vpop.f32.mrb[0].mxu0
        %2226 = vmatprep.mubr.f32.mxu0 0.0
        %2227 = vmatmul.mubr.f32.gmra.mrb[0].mxu0 %v2019
        %v2228 = vpop.f32.mrb[0].mxu0
        %v2229 = vadd.f32 %v1944, %v2228
        %v2230 = vpop.f32.mrb[0].mxu0
        %2231 = vmatprep.mubr.f32.mxu0 0.0
        %2232 = vmatmul.mubr.f32.gmra.mrb[0].mxu0 %v2022
        %v2233 = vpop.f32.mrb[0].mxu0
        %v2234 = vadd.f32 %v1944, %v2233
        %v2235 = vpop.f32.mrb[0].mxu0
        %2236 = vmatprep.mubr.f32.mxu0 0.0
        %2237 = vmatmul.mubr.f32.gmra.mrb[0].mxu0 %v2025
        %v2238 = vpop.f32.mrb[0].mxu0
        %v2239 = vadd.f32 %v1944, %v2238
        %v2240 = vpop.f32.mrb[0].mxu0
        %2241 = vmatprep.mubr.f32.mxu0 0.0
        %2242 = vmatmul.mubr.f32.gmra.mrb[0].mxu0 %v2028
        %v2243 = vpop.f32.mrb[0].mxu0
        %v2244 = vadd.f32 %v1944, %v2243
        %v2245 = vpop.f32.mrb[0].mxu0
        %2246 = vmatprep.mubr.f32.mxu0 0.0
        %2247 = vmatmul.mubr.f32.gmra.mrb[0].mxu0 %v2031
        %v2248 = vpop.f32.mrb[0].mxu0
        %v2249 = vadd.f32 %v1944, %v2248
        %v2250 = vpop.f32.mrb[0].mxu0
        %2251 = vmatprep.mubr.f32.mxu0 0.0
        %2252 = vmatmul.mubr.f32.gmra.mrb[0].mxu0 %v2034
        %v2253 = vpop.f32.mrb[0].mxu0
        %v2254 = vadd.f32 %v1944, %v2253
        %v2255 = vpop.f32.mrb[0].mxu0
        %2256 = vmatprep.mubr.f32.mxu0 0.0
        %2257 = vmatmul.mubr.f32.gmra.mrb[0].mxu0 %v2037
        %v2258 = vpop.f32.mrb[0].mxu0
        %v2259 = vadd.f32 %v1944, %v2258
        %v2260 = vpop.f32.mrb[0].mxu0
        %2261 = vmatprep.mubr.f32.mxu0 0.0
        %2262 = vmatmul.mubr.f32.gmra.mrb[0].mxu0 %v2040
        %v2263 = vpop.f32.mrb[0].mxu0
        %v2264 = vadd.f32 %v1944, %v2263
        %v2265 = vpop.f32.mrb[0].mxu0
        %2266 = vdwg.mxu0
        %vm2267 = vcmp.gt.f32.partialorder %v2109, 20.0
        %vm2268 = vcmp.gt.f32.partialorder %v2114, 20.0
        %vm2269 = vcmp.gt.f32.partialorder %v2119, 20.0
        %vm2270 = vcmp.gt.f32.partialorder %v2124, 20.0
        %vm2271 = vcmp.gt.f32.partialorder %v2129, 20.0
        %vm2272 = vcmp.gt.f32.partialorder %v2134, 20.0
        %vm2273 = vcmp.gt.f32.partialorder %v2139, 20.0
        %vm2274 = vcmp.gt.f32.partialorder %v2144, 20.0
        %vm2275 = vcmp.gt.f32.partialorder %v2149, 20.0
        %vm2276 = vcmp.gt.f32.partialorder %v2154, 20.0
        %vm2277 = vcmp.gt.f32.partialorder %v2159, 20.0
        %vm2278 = vcmp.gt.f32.partialorder %v2164, 20.0
        %vm2279 = vcmp.gt.f32.partialorder %v2169, 20.0
        %vm2280 = vcmp.gt.f32.partialorder %v2174, 20.0
        %vm2281 = vcmp.gt.f32.partialorder %v2179, 20.0
        %vm2282 = vcmp.gt.f32.partialorder %v2184, 20.0
        %vm2283 = vcmp.gt.f32.partialorder %v2189, 20.0
        %vm2284 = vcmp.gt.f32.partialorder %v2194, 20.0
        %vm2285 = vcmp.gt.f32.partialorder %v2199, 20.0
        %vm2286 = vcmp.gt.f32.partialorder %v2204, 20.0
        %vm2287 = vcmp.gt.f32.partialorder %v2209, 20.0
        %vm2288 = vcmp.gt.f32.partialorder %v2214, 20.0
        %vm2289 = vcmp.gt.f32.partialorder %v2219, 20.0
        %vm2290 = vcmp.gt.f32.partialorder %v2224, 20.0
        %vm2291 = vcmp.gt.f32.partialorder %v2229, 20.0
        %vm2292 = vcmp.gt.f32.partialorder %v2234, 20.0
        %vm2293 = vcmp.gt.f32.partialorder %v2239, 20.0
        %vm2294 = vcmp.gt.f32.partialorder %v2244, 20.0
        %vm2295 = vcmp.gt.f32.partialorder %v2249, 20.0
        %vm2296 = vcmp.gt.f32.partialorder %v2254, 20.0
        %vm2297 = vcmp.gt.f32.partialorder %v2259, 20.0
        %vm2298 = vcmp.gt.f32.partialorder %v2264, 20.0
        %v2299 = vmin.f32 %v2109, 20.0
        %v2300 = vmin.f32 %v2114, 20.0
        %v2301 = vmin.f32 %v2119, 20.0
        %v2302 = vmin.f32 %v2124, 20.0
        %v2303 = vmin.f32 %v2129, 20.0
        %v2304 = vmin.f32 %v2134, 20.0
        %v2305 = vmin.f32 %v2139, 20.0
        %v2306 = vmin.f32 %v2144, 20.0
        %v2307 = vmin.f32 %v2149, 20.0
        %v2308 = vmin.f32 %v2154, 20.0
        %v2309 = vmin.f32 %v2159, 20.0
        %v2310 = vmin.f32 %v2164, 20.0
        %v2311 = vmin.f32 %v2169, 20.0
        %v2312 = vmin.f32 %v2174, 20.0
        %v2313 = vmin.f32 %v2179, 20.0
        %v2314 = vmin.f32 %v2184, 20.0
        %v2315 = vmin.f32 %v2189, 20.0
        %v2316 = vmin.f32 %v2194, 20.0
        %v2317 = vmin.f32 %v2199, 20.0
        %v2318 = vmin.f32 %v2204, 20.0
        %v2319 = vmin.f32 %v2209, 20.0
        %v2320 = vmin.f32 %v2214, 20.0
        %v2321 = vmin.f32 %v2219, 20.0
        %v2322 = vmin.f32 %v2224, 20.0
        %v2323 = vmin.f32 %v2229, 20.0
        %v2324 = vmin.f32 %v2234, 20.0
        %v2325 = vmin.f32 %v2239, 20.0
        %v2326 = vmin.f32 %v2244, 20.0
        %v2327 = vmin.f32 %v2249, 20.0
        %v2328 = vmin.f32 %v2254, 20.0
        %v2329 = vmin.f32 %v2259, 20.0
        %v2330 = vmin.f32 %v2264, 20.0
        %v2331 = vmul.f32 %v2299, 1.442695
        %v2332 = vpow.pop %v2331
        %v2333 = vmul.f32 %v2300, 1.442695
        %v2334 = vpow.pop %v2333
        %v2335 = vmul.f32 %v2301, 1.442695
        %v2336 = vpow.pop %v2335
        %v2337 = vmul.f32 %v2302, 1.442695
        %v2338 = vpow.pop %v2337
        %v2339 = vmul.f32 %v2303, 1.442695
        %v2340 = vpow.pop %v2339
        %v2341 = vmul.f32 %v2304, 1.442695
        %v2342 = vpow.pop %v2341
        %v2343 = vmul.f32 %v2305, 1.442695
        %v2344 = vpow.pop %v2343
        %v2345 = vmul.f32 %v2306, 1.442695
        %v2346 = vpow.pop %v2345
        %v2347 = vmul.f32 %v2307, 1.442695
        %v2348 = vpow.pop %v2347
        %v2349 = vmul.f32 %v2308, 1.442695
        %v2350 = vpow.pop %v2349
        %v2351 = vmul.f32 %v2309, 1.442695
        %v2352 = vpow.pop %v2351
        %v2353 = vmul.f32 %v2310, 1.442695
        %v2354 = vpow.pop %v2353
        %v2355 = vmul.f32 %v2311, 1.442695
        %v2356 = vpow.pop %v2355
        %v2357 = vmul.f32 %v2312, 1.442695
        %v2358 = vpow.pop %v2357
        %v2359 = vmul.f32 %v2313, 1.442695
        %v2360 = vpow.pop %v2359
        %v2361 = vmul.f32 %v2314, 1.442695
        %v2362 = vpow.pop %v2361
        %v2363 = vmul.f32 %v2315, 1.442695
        %v2364 = vpow.pop %v2363
        %v2365 = vmul.f32 %v2316, 1.442695
        %v2366 = vpow.pop %v2365
        %v2367 = vmul.f32 %v2317, 1.442695
        %v2368 = vpow.pop %v2367
        %v2369 = vmul.f32 %v2318, 1.442695
        %v2370 = vpow.pop %v2369
        %v2371 = vmul.f32 %v2319, 1.442695
        %v2372 = vpow.pop %v2371
        %v2373 = vmul.f32 %v2320, 1.442695
        %v2374 = vpow.pop %v2373
        %v2375 = vmul.f32 %v2321, 1.442695
        %v2376 = vpow.pop %v2375
        %v2377 = vmul.f32 %v2322, 1.442695
        %v2378 = vpow.pop %v2377
        %v2379 = vmul.f32 %v2323, 1.442695
        %v2380 = vpow.pop %v2379
        %v2381 = vmul.f32 %v2324, 1.442695
        %v2382 = vpow.pop %v2381
        %v2383 = vmul.f32 %v2325, 1.442695
        %v2384 = vpow.pop %v2383
        %v2385 = vmul.f32 %v2326, 1.442695
        %v2386 = vpow.pop %v2385
        %v2387 = vmul.f32 %v2327, 1.442695
        %v2388 = vpow.pop %v2387
        %v2389 = vmul.f32 %v2328, 1.442695
        %v2390 = vpow.pop %v2389
        %v2391 = vmul.f32 %v2329, 1.442695
        %v2392 = vpow.pop %v2391
        %v2393 = vmul.f32 %v2330, 1.442695
        %v2394 = vpow.pop %v2393
        %v2395 = vadd.f32 %v2332, 1.0
        %v2396 = vlog2.pop %v2395
        %v2397 = vmul.f32 %v2396, 0.6931472
        %v2398 = vmul.f32 -0.5, %v2332
        %v2399 = vadd.f32 %v2398, 1.0
        %v2400 = vmul.f32 %v2399, %v2332
        %v2401 = vand.u32 2147483647, %v2332
        %vm2402 = vcmp.lt.f32.partialorder %v2401, 0.0004427343
        %v2403 = vsel %vm2402, %v2400, %v2397
        %v2404 = vadd.f32 %v2334, 1.0
        %v2405 = vlog2.pop %v2404
        %v2406 = vmul.f32 %v2405, 0.6931472
        %v2407 = vmul.f32 -0.5, %v2334
        %v2408 = vadd.f32 %v2407, 1.0
        %v2409 = vmul.f32 %v2408, %v2334
        %v2410 = vand.u32 2147483647, %v2334
        %vm2411 = vcmp.lt.f32.partialorder %v2410, 0.0004427343
        %v2412 = vsel %vm2411, %v2409, %v2406
        %v2413 = vadd.f32 %v2336, 1.0
        %v2414 = vlog2.pop %v2413
        %v2415 = vmul.f32 %v2414, 0.6931472
        %v2416 = vmul.f32 -0.5, %v2336
        %v2417 = vadd.f32 %v2416, 1.0
        %v2418 = vmul.f32 %v2417, %v2336
        %v2419 = vand.u32 2147483647, %v2336
        %vm2420 = vcmp.lt.f32.partialorder %v2419, 0.0004427343
        %v2421 = vsel %vm2420, %v2418, %v2415
        %v2422 = vadd.f32 %v2338, 1.0
        %v2423 = vlog2.pop %v2422
        %v2424 = vmul.f32 %v2423, 0.6931472
        %v2425 = vmul.f32 -0.5, %v2338
        %v2426 = vadd.f32 %v2425, 1.0
        %v2427 = vmul.f32 %v2426, %v2338
        %v2428 = vand.u32 2147483647, %v2338
        %vm2429 = vcmp.lt.f32.partialorder %v2428, 0.0004427343
        %v2430 = vsel %vm2429, %v2427, %v2424
        %v2431 = vadd.f32 %v2340, 1.0
        %v2432 = vlog2.pop %v2431
        %v2433 = vmul.f32 %v2432, 0.6931472
        %v2434 = vmul.f32 -0.5, %v2340
        %v2435 = vadd.f32 %v2434, 1.0
        %v2436 = vmul.f32 %v2435, %v2340
        %v2437 = vand.u32 2147483647, %v2340
        %vm2438 = vcmp.lt.f32.partialorder %v2437, 0.0004427343
        %v2439 = vsel %vm2438, %v2436, %v2433
        %v2440 = vadd.f32 %v2342, 1.0
        %v2441 = vlog2.pop %v2440
        %v2442 = vmul.f32 %v2441, 0.6931472
        %v2443 = vmul.f32 -0.5, %v2342
        %v2444 = vadd.f32 %v2443, 1.0
        %v2445 = vmul.f32 %v2444, %v2342
        %v2446 = vand.u32 2147483647, %v2342
        %vm2447 = vcmp.lt.f32.partialorder %v2446, 0.0004427343
        %v2448 = vsel %vm2447, %v2445, %v2442
        %v2449 = vadd.f32 %v2344, 1.0
        %v2450 = vlog2.pop %v2449
        %v2451 = vmul.f32 %v2450, 0.6931472
        %v2452 = vmul.f32 -0.5, %v2344
        %v2453 = vadd.f32 %v2452, 1.0
        %v2454 = vmul.f32 %v2453, %v2344
        %v2455 = vand.u32 2147483647, %v2344
        %vm2456 = vcmp.lt.f32.partialorder %v2455, 0.0004427343
        %v2457 = vsel %vm2456, %v2454, %v2451
        %v2458 = vadd.f32 %v2346, 1.0
        %v2459 = vlog2.pop %v2458
        %v2460 = vmul.f32 %v2459, 0.6931472
        %v2461 = vmul.f32 -0.5, %v2346
        %v2462 = vadd.f32 %v2461, 1.0
        %v2463 = vmul.f32 %v2462, %v2346
        %v2464 = vand.u32 2147483647, %v2346
        %vm2465 = vcmp.lt.f32.partialorder %v2464, 0.0004427343
        %v2466 = vsel %vm2465, %v2463, %v2460
        %v2467 = vadd.f32 %v2348, 1.0
        %v2468 = vlog2.pop %v2467
        %v2469 = vmul.f32 %v2468, 0.6931472
        %v2470 = vmul.f32 -0.5, %v2348
        %v2471 = vadd.f32 %v2470, 1.0
        %v2472 = vmul.f32 %v2471, %v2348
        %v2473 = vand.u32 2147483647, %v2348
        %vm2474 = vcmp.lt.f32.partialorder %v2473, 0.0004427343
        %v2475 = vsel %vm2474, %v2472, %v2469
        %v2476 = vadd.f32 %v2350, 1.0
        %v2477 = vlog2.pop %v2476
        %v2478 = vmul.f32 %v2477, 0.6931472
        %v2479 = vmul.f32 -0.5, %v2350
        %v2480 = vadd.f32 %v2479, 1.0
        %v2481 = vmul.f32 %v2480, %v2350
        %v2482 = vand.u32 2147483647, %v2350
        %vm2483 = vcmp.lt.f32.partialorder %v2482, 0.0004427343
        %v2484 = vsel %vm2483, %v2481, %v2478
        %v2485 = vadd.f32 %v2352, 1.0
        %v2486 = vlog2.pop %v2485
        %v2487 = vmul.f32 %v2486, 0.6931472
        %v2488 = vmul.f32 -0.5, %v2352
        %v2489 = vadd.f32 %v2488, 1.0
        %v2490 = vmul.f32 %v2489, %v2352
        %v2491 = vand.u32 2147483647, %v2352
        %vm2492 = vcmp.lt.f32.partialorder %v2491, 0.0004427343
        %v2493 = vsel %vm2492, %v2490, %v2487
        %v2494 = vadd.f32 %v2354, 1.0
        %v2495 = vlog2.pop %v2494
        %v2496 = vmul.f32 %v2495, 0.6931472
        %v2497 = vmul.f32 -0.5, %v2354
        %v2498 = vadd.f32 %v2497, 1.0
        %v2499 = vmul.f32 %v2498, %v2354
        %v2500 = vand.u32 2147483647, %v2354
        %vm2501 = vcmp.lt.f32.partialorder %v2500, 0.0004427343
        %v2502 = vsel %vm2501, %v2499, %v2496
        %v2503 = vadd.f32 %v2356, 1.0
        %v2504 = vlog2.pop %v2503
        %v2505 = vmul.f32 %v2504, 0.6931472
        %v2506 = vmul.f32 -0.5, %v2356
        %v2507 = vadd.f32 %v2506, 1.0
        %v2508 = vmul.f32 %v2507, %v2356
        %v2509 = vand.u32 2147483647, %v2356
        %vm2510 = vcmp.lt.f32.partialorder %v2509, 0.0004427343
        %v2511 = vsel %vm2510, %v2508, %v2505
        %v2512 = vadd.f32 %v2358, 1.0
        %v2513 = vlog2.pop %v2512
        %v2514 = vmul.f32 %v2513, 0.6931472
        %v2515 = vmul.f32 -0.5, %v2358
        %v2516 = vadd.f32 %v2515, 1.0
        %v2517 = vmul.f32 %v2516, %v2358
        %v2518 = vand.u32 2147483647, %v2358
        %vm2519 = vcmp.lt.f32.partialorder %v2518, 0.0004427343
        %v2520 = vsel %vm2519, %v2517, %v2514
        %v2521 = vadd.f32 %v2360, 1.0
        %v2522 = vlog2.pop %v2521
        %v2523 = vmul.f32 %v2522, 0.6931472
        %v2524 = vmul.f32 -0.5, %v2360
        %v2525 = vadd.f32 %v2524, 1.0
        %v2526 = vmul.f32 %v2525, %v2360
        %v2527 = vand.u32 2147483647, %v2360
        %vm2528 = vcmp.lt.f32.partialorder %v2527, 0.0004427343
        %v2529 = vsel %vm2528, %v2526, %v2523
        %v2530 = vadd.f32 %v2362, 1.0
        %v2531 = vlog2.pop %v2530
        %v2532 = vmul.f32 %v2531, 0.6931472
        %v2533 = vmul.f32 -0.5, %v2362
        %v2534 = vadd.f32 %v2533, 1.0
        %v2535 = vmul.f32 %v2534, %v2362
        %v2536 = vand.u32 2147483647, %v2362
        %vm2537 = vcmp.lt.f32.partialorder %v2536, 0.0004427343
        %v2538 = vsel %vm2537, %v2535, %v2532
        %v2539 = vadd.f32 %v2364, 1.0
        %v2540 = vlog2.pop %v2539
        %v2541 = vmul.f32 %v2540, 0.6931472
        %v2542 = vmul.f32 -0.5, %v2364
        %v2543 = vadd.f32 %v2542, 1.0
        %v2544 = vmul.f32 %v2543, %v2364
        %v2545 = vand.u32 2147483647, %v2364
        %vm2546 = vcmp.lt.f32.partialorder %v2545, 0.0004427343
        %v2547 = vsel %vm2546, %v2544, %v2541
        %v2548 = vadd.f32 %v2366, 1.0
        %v2549 = vlog2.pop %v2548
        %v2550 = vmul.f32 %v2549, 0.6931472
        %v2551 = vmul.f32 -0.5, %v2366
        %v2552 = vadd.f32 %v2551, 1.0
        %v2553 = vmul.f32 %v2552, %v2366
        %v2554 = vand.u32 2147483647, %v2366
        %vm2555 = vcmp.lt.f32.partialorder %v2554, 0.0004427343
        %v2556 = vsel %vm2555, %v2553, %v2550
        %v2557 = vadd.f32 %v2368, 1.0
        %v2558 = vlog2.pop %v2557
        %v2559 = vmul.f32 %v2558, 0.6931472
        %v2560 = vmul.f32 -0.5, %v2368
        %v2561 = vadd.f32 %v2560, 1.0
        %v2562 = vmul.f32 %v2561, %v2368
        %v2563 = vand.u32 2147483647, %v2368
        %vm2564 = vcmp.lt.f32.partialorder %v2563, 0.0004427343
        %v2565 = vsel %vm2564, %v2562, %v2559
        %v2566 = vadd.f32 %v2370, 1.0
        %v2567 = vlog2.pop %v2566
        %v2568 = vmul.f32 %v2567, 0.6931472
        %v2569 = vmul.f32 -0.5, %v2370
        %v2570 = vadd.f32 %v2569, 1.0
        %v2571 = vmul.f32 %v2570, %v2370
        %v2572 = vand.u32 2147483647, %v2370
        %vm2573 = vcmp.lt.f32.partialorder %v2572, 0.0004427343
        %v2574 = vsel %vm2573, %v2571, %v2568
        %v2575 = vadd.f32 %v2372, 1.0
        %v2576 = vlog2.pop %v2575
        %v2577 = vmul.f32 %v2576, 0.6931472
        %v2578 = vmul.f32 -0.5, %v2372
        %v2579 = vadd.f32 %v2578, 1.0
        %v2580 = vmul.f32 %v2579, %v2372
        %v2581 = vand.u32 2147483647, %v2372
        %vm2582 = vcmp.lt.f32.partialorder %v2581, 0.0004427343
        %v2583 = vsel %vm2582, %v2580, %v2577
        %v2584 = vadd.f32 %v2374, 1.0
        %v2585 = vlog2.pop %v2584
        %v2586 = vmul.f32 %v2585, 0.6931472
        %v2587 = vmul.f32 -0.5, %v2374
        %v2588 = vadd.f32 %v2587, 1.0
        %v2589 = vmul.f32 %v2588, %v2374
        %v2590 = vand.u32 2147483647, %v2374
        %vm2591 = vcmp.lt.f32.partialorder %v2590, 0.0004427343
        %v2592 = vsel %vm2591, %v2589, %v2586
        %v2593 = vadd.f32 %v2376, 1.0
        %v2594 = vlog2.pop %v2593
        %v2595 = vmul.f32 %v2594, 0.6931472
        %v2596 = vmul.f32 -0.5, %v2376
        %v2597 = vadd.f32 %v2596, 1.0
        %v2598 = vmul.f32 %v2597, %v2376
        %v2599 = vand.u32 2147483647, %v2376
        %vm2600 = vcmp.lt.f32.partialorder %v2599, 0.0004427343
        %v2601 = vsel %vm2600, %v2598, %v2595
        %v2602 = vadd.f32 %v2378, 1.0
        %v2603 = vlog2.pop %v2602
        %v2604 = vmul.f32 %v2603, 0.6931472
        %v2605 = vmul.f32 -0.5, %v2378
        %v2606 = vadd.f32 %v2605, 1.0
        %v2607 = vmul.f32 %v2606, %v2378
        %v2608 = vand.u32 2147483647, %v2378
        %vm2609 = vcmp.lt.f32.partialorder %v2608, 0.0004427343
        %v2610 = vsel %vm2609, %v2607, %v2604
        %v2611 = vadd.f32 %v2380, 1.0
        %v2612 = vlog2.pop %v2611
        %v2613 = vmul.f32 %v2612, 0.6931472
        %v2614 = vmul.f32 -0.5, %v2380
        %v2615 = vadd.f32 %v2614, 1.0
        %v2616 = vmul.f32 %v2615, %v2380
        %v2617 = vand.u32 2147483647, %v2380
        %vm2618 = vcmp.lt.f32.partialorder %v2617, 0.0004427343
        %v2619 = vsel %vm2618, %v2616, %v2613
        %v2620 = vadd.f32 %v2382, 1.0
        %v2621 = vlog2.pop %v2620
        %v2622 = vmul.f32 %v2621, 0.6931472
        %v2623 = vmul.f32 -0.5, %v2382
        %v2624 = vadd.f32 %v2623, 1.0
        %v2625 = vmul.f32 %v2624, %v2382
        %v2626 = vand.u32 2147483647, %v2382
        %vm2627 = vcmp.lt.f32.partialorder %v2626, 0.0004427343
        %v2628 = vsel %vm2627, %v2625, %v2622
        %v2629 = vadd.f32 %v2384, 1.0
        %v2630 = vlog2.pop %v2629
        %v2631 = vmul.f32 %v2630, 0.6931472
        %v2632 = vmul.f32 -0.5, %v2384
        %v2633 = vadd.f32 %v2632, 1.0
        %v2634 = vmul.f32 %v2633, %v2384
        %v2635 = vand.u32 2147483647, %v2384
        %vm2636 = vcmp.lt.f32.partialorder %v2635, 0.0004427343
        %v2637 = vsel %vm2636, %v2634, %v2631
        %v2638 = vadd.f32 %v2386, 1.0
        %v2639 = vlog2.pop %v2638
        %v2640 = vmul.f32 %v2639, 0.6931472
        %v2641 = vmul.f32 -0.5, %v2386
        %v2642 = vadd.f32 %v2641, 1.0
        %v2643 = vmul.f32 %v2642, %v2386
        %v2644 = vand.u32 2147483647, %v2386
        %vm2645 = vcmp.lt.f32.partialorder %v2644, 0.0004427343
        %v2646 = vsel %vm2645, %v2643, %v2640
        %v2647 = vadd.f32 %v2388, 1.0
        %v2648 = vlog2.pop %v2647
        %v2649 = vmul.f32 %v2648, 0.6931472
        %v2650 = vmul.f32 -0.5, %v2388
        %v2651 = vadd.f32 %v2650, 1.0
        %v2652 = vmul.f32 %v2651, %v2388
        %v2653 = vand.u32 2147483647, %v2388
        %vm2654 = vcmp.lt.f32.partialorder %v2653, 0.0004427343
        %v2655 = vsel %vm2654, %v2652, %v2649
        %v2656 = vadd.f32 %v2390, 1.0
        %v2657 = vlog2.pop %v2656
        %v2658 = vmul.f32 %v2657, 0.6931472
        %v2659 = vmul.f32 -0.5, %v2390
        %v2660 = vadd.f32 %v2659, 1.0
        %v2661 = vmul.f32 %v2660, %v2390
        %v2662 = vand.u32 2147483647, %v2390
        %vm2663 = vcmp.lt.f32.partialorder %v2662, 0.0004427343
        %v2664 = vsel %vm2663, %v2661, %v2658
        %v2665 = vadd.f32 %v2392, 1.0
        %v2666 = vlog2.pop %v2665
        %v2667 = vmul.f32 %v2666, 0.6931472
        %v2668 = vmul.f32 -0.5, %v2392
        %v2669 = vadd.f32 %v2668, 1.0
        %v2670 = vmul.f32 %v2669, %v2392
        %v2671 = vand.u32 2147483647, %v2392
        %vm2672 = vcmp.lt.f32.partialorder %v2671, 0.0004427343
        %v2673 = vsel %vm2672, %v2670, %v2667
        %v2674 = vadd.f32 %v2394, 1.0
        %v2675 = vlog2.pop %v2674
        %v2676 = vmul.f32 %v2675, 0.6931472
        %v2677 = vmul.f32 -0.5, %v2394
        %v2678 = vadd.f32 %v2677, 1.0
        %v2679 = vmul.f32 %v2678, %v2394
        %v2680 = vand.u32 2147483647, %v2394
        %vm2681 = vcmp.lt.f32.partialorder %v2680, 0.0004427343
        %v2682 = vsel %vm2681, %v2679, %v2676
        %v2683 = vsel %vm2267, %v2109, %v2403
        %v2684 = vsel %vm2268, %v2114, %v2412
        %v2685 = vsel %vm2269, %v2119, %v2421
        %v2686 = vsel %vm2270, %v2124, %v2430
        %v2687 = vsel %vm2271, %v2129, %v2439
        %v2688 = vsel %vm2272, %v2134, %v2448
        %v2689 = vsel %vm2273, %v2139, %v2457
        %v2690 = vsel %vm2274, %v2144, %v2466
        %v2691 = vsel %vm2275, %v2149, %v2475
        %v2692 = vsel %vm2276, %v2154, %v2484
        %v2693 = vsel %vm2277, %v2159, %v2493
        %v2694 = vsel %vm2278, %v2164, %v2502
        %v2695 = vsel %vm2279, %v2169, %v2511
        %v2696 = vsel %vm2280, %v2174, %v2520
        %v2697 = vsel %vm2281, %v2179, %v2529
        %v2698 = vsel %vm2282, %v2184, %v2538
        %v2699 = vsel %vm2283, %v2189, %v2547
        %v2700 = vsel %vm2284, %v2194, %v2556
        %v2701 = vsel %vm2285, %v2199, %v2565
        %v2702 = vsel %vm2286, %v2204, %v2574
        %v2703 = vsel %vm2287, %v2209, %v2583
        %v2704 = vsel %vm2288, %v2214, %v2592
        %v2705 = vsel %vm2289, %v2219, %v2601
        %v2706 = vsel %vm2290, %v2224, %v2610
        %v2707 = vsel %vm2291, %v2229, %v2619
        %v2708 = vsel %vm2292, %v2234, %v2628
        %v2709 = vsel %vm2293, %v2239, %v2637
        %v2710 = vsel %vm2294, %v2244, %v2646
        %v2711 = vsel %vm2295, %v2249, %v2655
        %v2712 = vsel %vm2296, %v2254, %v2664
        %v2713 = vsel %vm2297, %v2259, %v2673
        %v2714 = vsel %vm2298, %v2264, %v2682
        %v2715 = vld [vmem:[#allocation2] sm:$0x7]
        %2716 = vxpose.xlu0.b32.start [1/16] %v338, 128
        %2717 = vxpose.xlu0.b32.cont [2/16] %v339, 128
        %2718 = vxpose.xlu0.b32.cont [3/16] %v340, 128
        %2719 = vxpose.xlu0.b32.cont [4/16] %v341, 128
        %2720 = vxpose.xlu0.b32.cont [5/16] %v342, 128
        %2721 = vxpose.xlu0.b32.cont [6/16] %v343, 128
        %2722 = vxpose.xlu0.b32.cont [7/16] %v344, 128
        %2723 = vxpose.xlu0.b32.cont [8/16] %v345, 128
        %2724 = vxpose.xlu0.b32.cont [9/16] %v346, 128
        %2725 = vxpose.xlu0.b32.cont [10/16] %v347, 128
        %2726 = vxpose.xlu0.b32.cont [11/16] %v348, 128
        %2727 = vxpose.xlu0.b32.cont [12/16] %v349, 128
        %2728 = vxpose.xlu0.b32.cont [13/16] %v350, 128
        %2729 = vxpose.xlu0.b32.cont [14/16] %v351, 128
        %2730 = vxpose.xlu0.b32.cont [15/16] %v352, 128
        %2731 = vxpose.xlu0.b32.end [16/16] %v353, 128
        %v2732 = vpop.trf.xlu0
        %v2733 = vpop.trf.xlu0
        %v2734 = vpop.trf.xlu0
        %v2735 = vpop.trf.xlu0
        %v2736 = vpop.trf.xlu0
        %v2737 = vpop.trf.xlu0
        %v2738 = vpop.trf.xlu0
        %v2739 = vpop.trf.xlu0
        %v2740 = vpop.trf.xlu0
        %v2741 = vpop.trf.xlu0
        %v2742 = vpop.trf.xlu0
        %v2743 = vpop.trf.xlu0
        %v2744 = vpop.trf.xlu0
        %v2745 = vpop.trf.xlu0
        %v2746 = vpop.trf.xlu0
        %v2747 = vpop.trf.xlu0
        %2748 = vxpose.xlu0.b32.start [1/16] %v354, 128
        %2749 = vxpose.xlu0.b32.cont [2/16] %v355, 128
        %2750 = vxpose.xlu0.b32.cont [3/16] %v356, 128
        %2751 = vxpose.xlu0.b32.cont [4/16] %v357, 128
        %2752 = vxpose.xlu0.b32.cont [5/16] %v358, 128
        %2753 = vxpose.xlu0.b32.cont [6/16] %v359, 128
        %2754 = vxpose.xlu0.b32.cont [7/16] %v360, 128
        %2755 = vxpose.xlu0.b32.cont [8/16] %v361, 128
        %2756 = vxpose.xlu0.b32.cont [9/16] %v362, 128
        %2757 = vxpose.xlu0.b32.cont [10/16] %v363, 128
        %2758 = vxpose.xlu0.b32.cont [11/16] %v364, 128
        %2759 = vxpose.xlu0.b32.cont [12/16] %v365, 128
        %2760 = vxpose.xlu0.b32.cont [13/16] %v366, 128
        %2761 = vxpose.xlu0.b32.cont [14/16] %v367, 128
        %2762 = vxpose.xlu0.b32.cont [15/16] %v368, 128
        %2763 = vxpose.xlu0.b32.end [16/16] %v369, 128
        %v2764 = vpop.trf.xlu0
        %v2765 = vpop.trf.xlu0
        %v2766 = vpop.trf.xlu0
        %v2767 = vpop.trf.xlu0
        %v2768 = vpop.trf.xlu0
        %v2769 = vpop.trf.xlu0
        %v2770 = vpop.trf.xlu0
        %v2771 = vpop.trf.xlu0
        %v2772 = vpop.trf.xlu0
        %v2773 = vpop.trf.xlu0
        %v2774 = vpop.trf.xlu0
        %v2775 = vpop.trf.xlu0
        %v2776 = vpop.trf.xlu0
        %v2777 = vpop.trf.xlu0
        %v2778 = vpop.trf.xlu0
        %v2779 = vpop.trf.xlu0
        %2780 = vmatprep.subr.mxu0 0.0
        %2781 = vmatpush1.msra.mxu0 %v2683
        %2782 = vmatprep.subr.mxu0 0.0
        %2783 = vmatpush1.msra.mxu0 %v2684
        %2784 = vmatprep.subr.mxu0 0.0
        %2785 = vmatpush1.msra.mxu0 %v2685
        %2786 = vmatprep.subr.mxu0 0.0
        %2787 = vmatpush1.msra.mxu0 %v2686
        %2788 = vmatprep.subr.mxu0 0.0
        %2789 = vmatpush1.msra.mxu0 %v2687
        %2790 = vmatprep.subr.mxu0 0.0
        %2791 = vmatpush1.msra.mxu0 %v2688
        %2792 = vmatprep.subr.mxu0 0.0
        %2793 = vmatpush1.msra.mxu0 %v2689
        %2794 = vmatprep.subr.mxu0 0.0
        %2795 = vmatpush1.msra.mxu0 %v2690
        %2796 = vmatprep.subr.mxu0 0.0
        %2797 = vmatpush1.msra.mxu0 %v2691
        %2798 = vmatprep.subr.mxu0 0.0
        %2799 = vmatpush1.msra.mxu0 %v2692
        %2800 = vmatprep.subr.mxu0 0.0
        %2801 = vmatpush1.msra.mxu0 %v2693
        %2802 = vmatprep.subr.mxu0 0.0
        %2803 = vmatpush1.msra.mxu0 %v2694
        %2804 = vmatprep.subr.mxu0 0.0
        %2805 = vmatpush1.msra.mxu0 %v2695
        %2806 = vmatprep.subr.mxu0 0.0
        %2807 = vmatpush1.msra.mxu0 %v2696
        %2808 = vmatprep.subr.mxu0 0.0
        %2809 = vmatpush1.msra.mxu0 %v2697
        %2810 = vmatprep.subr.mxu0 0.0
        %2811 = vmatpush1.msra.mxu0 %v2698
        %2812 = vmatprep.subr.mxu0 0.0
        %2813 = vmatpush1.msra.mxu0 %v2699
        %2814 = vmatprep.subr.mxu0 0.0
        %2815 = vmatpush1.msra.mxu0 %v2700
        %2816 = vmatprep.subr.mxu0 0.0
        %2817 = vmatpush1.msra.mxu0 %v2701
        %2818 = vmatprep.subr.mxu0 0.0
        %2819 = vmatpush1.msra.mxu0 %v2702
        %2820 = vmatprep.subr.mxu0 0.0
        %2821 = vmatpush1.msra.mxu0 %v2703
        %2822 = vmatprep.subr.mxu0 0.0
        %2823 = vmatpush1.msra.mxu0 %v2704
        %2824 = vmatprep.subr.mxu0 0.0
        %2825 = vmatpush1.msra.mxu0 %v2705
        %2826 = vmatprep.subr.mxu0 0.0
        %2827 = vmatpush1.msra.mxu0 %v2706
        %2828 = vmatprep.subr.mxu0 0.0
        %2829 = vmatpush1.msra.mxu0 %v2707
        %2830 = vmatprep.subr.mxu0 0.0
        %2831 = vmatpush1.msra.mxu0 %v2708
        %2832 = vmatprep.subr.mxu0 0.0
        %2833 = vmatpush1.msra.mxu0 %v2709
        %2834 = vmatprep.subr.mxu0 0.0
        %2835 = vmatpush1.msra.mxu0 %v2710
        %2836 = vmatprep.subr.mxu0 0.0
        %2837 = vmatpush1.msra.mxu0 %v2711
        %2838 = vmatprep.subr.mxu0 0.0
        %2839 = vmatpush1.msra.mxu0 %v2712
        %2840 = vmatprep.subr.mxu0 0.0
        %2841 = vmatpush1.msra.mxu0 %v2713
        %2842 = vmatprep.subr.mxu0 0.0
        %2843 = vmatpush1.msra.mxu0 %v2714
        %2844 = vmatprep.mubr.f32.mxu0 %v2764
        %2845 = vmatmul.mubr.f32.gmra.mrb[0].mxu0 %v2732
        %v2846 = vpop.f32.mrb[0].mxu0
        %v2847 = vadd.f32 0.0, %v2846
        %v2848 = vpop.f32.mrb[0].mxu0
        %2849 = vdwg.mxu0
        %v2850 = vadd.f32 %v2715, %v2847
        %vm2851 = vcmask 256000
        %2852 = vst.msk [vmem:[#allocation2] sm:$0x7] %vm2851, %v2850
        %v2853 = vld [vmem:[#allocation3] sm:$0x1]
        %vm2854 = vcmask 23552
        %v2855 = vsel %vm2854, %v338, 0.0
        %v2856 = vsel %vm2854, %v339, 0.0
        %v2857 = vadd.f32 %v2855, %v2856
        %v2858 = vsel %vm2854, %v340, 0.0
        %v2859 = vadd.f32 %v2857, %v2858
        %v2860 = vsel %vm2854, %v341, 0.0
        %v2861 = vadd.f32 %v2859, %v2860
        %v2862 = vsel %vm2854, %v342, 0.0
        %v2863 = vadd.f32 %v2861, %v2862
        %v2864 = vsel %vm2854, %v343, 0.0
        %v2865 = vadd.f32 %v2863, %v2864
        %v2866 = vsel %vm2854, %v344, 0.0
        %v2867 = vadd.f32 %v2865, %v2866
        %v2868 = vsel %vm2854, %v345, 0.0
        %v2869 = vadd.f32 %v2867, %v2868
        %v2870 = vsel %vm2854, %v346, 0.0
        %v2871 = vadd.f32 %v2869, %v2870
        %v2872 = vsel %vm2854, %v347, 0.0
        %v2873 = vadd.f32 %v2871, %v2872
        %v2874 = vsel %vm2854, %v348, 0.0
        %v2875 = vadd.f32 %v2873, %v2874
        %v2876 = vsel %vm2854, %v349, 0.0
        %v2877 = vadd.f32 %v2875, %v2876
        %v2878 = vsel %vm2854, %v350, 0.0
        %v2879 = vadd.f32 %v2877, %v2878
        %v2880 = vsel %vm2854, %v351, 0.0
        %v2881 = vadd.f32 %v2879, %v2880
        %v2882 = vsel %vm2854, %v352, 0.0
        %v2883 = vadd.f32 %v2881, %v2882
        %v2884 = vsel %vm2854, %v353, 0.0
        %v2885 = vadd.f32 %v2883, %v2884
        %v2886 = vsel %vm2854, %v354, 0.0
        %v2887 = vadd.f32 %v2885, %v2886
        %v2888 = vsel %vm2854, %v355, 0.0
        %v2889 = vadd.f32 %v2887, %v2888
        %v2890 = vsel %vm2854, %v356, 0.0
        %v2891 = vadd.f32 %v2889, %v2890
        %v2892 = vsel %vm2854, %v357, 0.0
        %v2893 = vadd.f32 %v2891, %v2892
        %v2894 = vsel %vm2854, %v358, 0.0
        %v2895 = vadd.f32 %v2893, %v2894
        %v2896 = vsel %vm2854, %v359, 0.0
        %v2897 = vadd.f32 %v2895, %v2896
        %v2898 = vsel %vm2854, %v360, 0.0
        %v2899 = vadd.f32 %v2897, %v2898
        %v2900 = vsel %vm2854, %v361, 0.0
        %v2901 = vadd.f32 %v2899, %v2900
        %v2902 = vsel %vm2854, %v362, 0.0
        %v2903 = vadd.f32 %v2901, %v2902
        %v2904 = vsel %vm2854, %v363, 0.0
        %v2905 = vadd.f32 %v2903, %v2904
        %v2906 = vsel %vm2854, %v364, 0.0
        %v2907 = vadd.f32 %v2905, %v2906
        %v2908 = vsel %vm2854, %v365, 0.0
        %v2909 = vadd.f32 %v2907, %v2908
        %v2910 = vsel %vm2854, %v366, 0.0
        %v2911 = vadd.f32 %v2909, %v2910
        %v2912 = vsel %vm2854, %v367, 0.0
        %v2913 = vadd.f32 %v2911, %v2912
        %v2914 = vsel %vm2854, %v368, 0.0
        %v2915 = vadd.f32 %v2913, %v2914
        %v2916 = vsel %vm2854, %v369, 0.0
        %v2917 = vadd.f32 %v2915, %v2916
        %v2918 = vrot.slane %v2917, 4
        %v2919 = vadd.f32 %v2917, %v2918
        %v2920 = vrot.slane %v2919, 2
        %v2921 = vadd.f32 %v2919, %v2920
        %v2922 = vrot.slane %v2921, 1
        %v2923 = vadd.f32 %v2921, %v2922
        %v2924 = vadd.f32 %v2853, %v2923
        %vm2925 = vcmask 16384
        %2926 = vst.msk [vmem:[#allocation3] sm:$0x1] %vm2925, %v2924
        // Predicated region
        $region53: #{tpu_custom_call.1} parent=47 // pred_check
          %p2927 = pneg %p298
        $region54: #{tpu_custom_call.1} parent=47 // pred_check_branch
          %2929 = sbr.rel (%p2927) target = $region56
        $region55: #{tpu_custom_call.1} parent=47 // pred_region
          %v2930 = vld [vmem:[#allocation2] sm:$0x7]
          %v2931 = vld [vmem:[#allocation3] sm:$0x1]
          %v2932 = vld [vmem:[%s6] sm:$0x7]
          %v2933 = vld [vmem:[%s5] sm:$0xff]
          %v2934 = vld [vmem:[%s5 + $0x8] sm:$0xff]
          %v2935 = vld [vmem:[%s5 + $0x10] sm:$0xff]
          %v2936 = vld [vmem:[%s5 + $0x18] sm:$0xff]
          %v2938 = vsel %vm1163, %v2930, 0
          %2940 = vmatprep.subr.mxu0 0.0
          %2941 = vmatpush1.msra.mxu0 %v2933
          %2942 = vmatprep.subr.mxu0 0.0
          %2943 = vmatpush1.msra.mxu0 %v2934
          %2944 = vmatprep.subr.mxu0 0.0
          %2945 = vmatpush1.msra.mxu0 %v2935
          %2946 = vmatprep.subr.mxu0 0.0
          %2947 = vmatpush1.msra.mxu0 %v2936
          %2948 = vmatprep.subr.mxu0 0.0
          %2949 = vmatpush1.msra.mxu0 0.0
          %2950 = vmatprep.subr.mxu0 0.0
          %2951 = vmatpush1.msra.mxu0 0.0
          %2952 = vmatprep.subr.mxu0 0.0
          %2953 = vmatpush1.msra.mxu0 0.0
          %2954 = vmatprep.subr.mxu0 0.0
          %2955 = vmatpush1.msra.mxu0 0.0
          %2956 = vmatprep.subr.mxu0 0.0
          %2957 = vmatpush1.msra.mxu0 0.0
          %2958 = vmatprep.subr.mxu0 0.0
          %2959 = vmatpush1.msra.mxu0 0.0
          %2960 = vmatprep.subr.mxu0 0.0
          %2961 = vmatpush1.msra.mxu0 0.0
          %2962 = vmatprep.subr.mxu0 0.0
          %2963 = vmatpush1.msra.mxu0 0.0
          %2964 = vmatprep.subr.mxu0 0.0
          %2965 = vmatpush1.msra.mxu0 0.0
          %2966 = vmatprep.subr.mxu0 0.0
          %2967 = vmatpush1.msra.mxu0 0.0
          %2968 = vmatprep.subr.mxu0 0.0
          %2969 = vmatpush1.msra.mxu0 0.0
          %2970 = vmatprep.subr.mxu0 0.0
          %2971 = vmatpush1.msra.mxu0 0.0
          %2972 = vmatprep.subr.mxu0 0.0
          %2973 = vmatpush1.msra.mxu0 0.0
          %2974 = vmatprep.subr.mxu0 0.0
          %2975 = vmatpush1.msra.mxu0 0.0
          %2976 = vmatprep.subr.mxu0 0.0
          %2977 = vmatpush1.msra.mxu0 0.0
          %2978 = vmatprep.subr.mxu0 0.0
          %2979 = vmatpush1.msra.mxu0 0.0
          %2980 = vmatprep.subr.mxu0 0.0
          %2981 = vmatpush1.msra.mxu0 0.0
          %2982 = vmatprep.subr.mxu0 0.0
          %2983 = vmatpush1.msra.mxu0 0.0
          %2984 = vmatprep.subr.mxu0 0.0
          %2985 = vmatpush1.msra.mxu0 0.0
          %2986 = vmatprep.subr.mxu0 0.0
          %2987 = vmatpush1.msra.mxu0 0.0
          %2988 = vmatprep.subr.mxu0 0.0
          %2989 = vmatpush1.msra.mxu0 0.0
          %2990 = vmatprep.subr.mxu0 0.0
          %2991 = vmatpush1.msra.mxu0 0.0
          %2992 = vmatprep.subr.mxu0 0.0
          %2993 = vmatpush1.msra.mxu0 0.0
          %2994 = vmatprep.subr.mxu0 0.0
          %2995 = vmatpush1.msra.mxu0 0.0
          %2996 = vmatprep.subr.mxu0 0.0
          %2997 = vmatpush1.msra.mxu0 0.0
          %2998 = vmatprep.subr.mxu0 0.0
          %2999 = vmatpush1.msra.mxu0 0.0
          %3000 = vmatprep.subr.mxu0 0.0
          %3001 = vmatpush1.msra.mxu0 0.0
          %3002 = vmatprep.subr.mxu0 0.0
          %3003 = vmatpush1.msra.mxu0 0.0
          %3004 = vmatprep.mubr.f32.mxu0 0.0
          %3005 = vmatmul.mubr.f32.gmra.mrb[0].mxu0 %v2938
          %v3006 = vpop.f32.mrb[0].mxu0
          %v3007 = vadd.f32 0.0, %v3006
          %v3008 = vpop.f32.mrb[0].mxu0
          %3009 = vdwg.mxu0
          %v3011 = vsel %vm2854, %v2931, 0
          %vm3013 = vcmask 1042432
          %v3015 = vsel %vm3013, %v2932, 0
          %3017 = vmatprep.subr.mxu0 0.0
          %3018 = vmatpush1.msra.mxu0 %v3015
          %3019 = vmatprep.subr.mxu0 0.0
          %3020 = vmatpush1.msra.mxu0 0.0
          %3021 = vmatprep.subr.mxu0 0.0
          %3022 = vmatpush1.msra.mxu0 0.0
          %3023 = vmatprep.subr.mxu0 0.0
          %3024 = vmatpush1.msra.mxu0 0.0
          %3025 = vmatprep.subr.mxu0 0.0
          %3026 = vmatpush1.msra.mxu0 0.0
          %3027 = vmatprep.subr.mxu0 0.0
          %3028 = vmatpush1.msra.mxu0 0.0
          %3029 = vmatprep.subr.mxu0 0.0
          %3030 = vmatpush1.msra.mxu0 0.0
          %3031 = vmatprep.subr.mxu0 0.0
          %3032 = vmatpush1.msra.mxu0 0.0
          %3033 = vmatprep.subr.mxu0 0.0
          %3034 = vmatpush1.msra.mxu0 0.0
          %3035 = vmatprep.subr.mxu0 0.0
          %3036 = vmatpush1.msra.mxu0 0.0
          %3037 = vmatprep.subr.mxu0 0.0
          %3038 = vmatpush1.msra.mxu0 0.0
          %3039 = vmatprep.subr.mxu0 0.0
          %3040 = vmatpush1.msra.mxu0 0.0
          %3041 = vmatprep.subr.mxu0 0.0
          %3042 = vmatpush1.msra.mxu0 0.0
          %3043 = vmatprep.subr.mxu0 0.0
          %3044 = vmatpush1.msra.mxu0 0.0
          %3045 = vmatprep.subr.mxu0 0.0
          %3046 = vmatpush1.msra.mxu0 0.0
          %3047 = vmatprep.subr.mxu0 0.0
          %3048 = vmatpush1.msra.mxu0 0.0
          %3049 = vmatprep.subr.mxu0 0.0
          %3050 = vmatpush1.msra.mxu0 0.0
          %3051 = vmatprep.subr.mxu0 0.0
          %3052 = vmatpush1.msra.mxu0 0.0
          %3053 = vmatprep.subr.mxu0 0.0
          %3054 = vmatpush1.msra.mxu0 0.0
          %3055 = vmatprep.subr.mxu0 0.0
          %3056 = vmatpush1.msra.mxu0 0.0
          %3057 = vmatprep.subr.mxu0 0.0
          %3058 = vmatpush1.msra.mxu0 0.0
          %3059 = vmatprep.subr.mxu0 0.0
          %3060 = vmatpush1.msra.mxu0 0.0
          %3061 = vmatprep.subr.mxu0 0.0
          %3062 = vmatpush1.msra.mxu0 0.0
          %3063 = vmatprep.subr.mxu0 0.0
          %3064 = vmatpush1.msra.mxu0 0.0
          %3065 = vmatprep.subr.mxu0 0.0
          %3066 = vmatpush1.msra.mxu0 0.0
          %3067 = vmatprep.subr.mxu0 0.0
          %3068 = vmatpush1.msra.mxu0 0.0
          %3069 = vmatprep.subr.mxu0 0.0
          %3070 = vmatpush1.msra.mxu0 0.0
          %3071 = vmatprep.subr.mxu0 0.0
          %3072 = vmatpush1.msra.mxu0 0.0
          %3073 = vmatprep.subr.mxu0 0.0
          %3074 = vmatpush1.msra.mxu0 0.0
          %3075 = vmatprep.subr.mxu0 0.0
          %3076 = vmatpush1.msra.mxu0 0.0
          %3077 = vmatprep.subr.mxu0 0.0
          %3078 = vmatpush1.msra.mxu0 0.0
          %3079 = vmatprep.subr.mxu0 0.0
          %3080 = vmatpush1.msra.mxu0 0.0
          %3081 = vmatprep.mubr.f32.mxu0 0.0
          %3082 = vmatmul.mubr.f32.gmra.mrb[0].mxu0 %v3011
          %v3083 = vpop.f32.mrb[0].mxu0
          %v3084 = vadd.f32 %v3007, %v3083
          %v3085 = vpop.f32.mrb[0].mxu0
          %3086 = vdwg.mxu0
          %s3087 = scalar_lea.vmem %s5, 32
          %v3088 = vld [vmem:[%s3087] sm:$0xff]
          %v3089 = vld [vmem:[%s3087 + $0x8] sm:$0xff]
          %v3090 = vld [vmem:[%s3087 + $0x10] sm:$0xff]
          %v3091 = vld [vmem:[%s3087 + $0x18] sm:$0xff]
          %v3092 = vrot.slane %v2930, 1
          %v3093 = vsel %vm1163, %v3092, 0
          %3095 = vmatprep.subr.mxu0 0.0
          %3096 = vmatpush1.msra.mxu0 %v3088
          %3097 = vmatprep.subr.mxu0 0.0
          %3098 = vmatpush1.msra.mxu0 %v3089
          %3099 = vmatprep.subr.mxu0 0.0
          %3100 = vmatpush1.msra.mxu0 %v3090
          %3101 = vmatprep.subr.mxu0 0.0
          %3102 = vmatpush1.msra.mxu0 %v3091
          %3103 = vmatprep.subr.mxu0 0.0
          %3104 = vmatpush1.msra.mxu0 0.0
          %3105 = vmatprep.subr.mxu0 0.0
          %3106 = vmatpush1.msra.mxu0 0.0
          %3107 = vmatprep.subr.mxu0 0.0
          %3108 = vmatpush1.msra.mxu0 0.0
          %3109 = vmatprep.subr.mxu0 0.0
          %3110 = vmatpush1.msra.mxu0 0.0
          %3111 = vmatprep.subr.mxu0 0.0
          %3112 = vmatpush1.msra.mxu0 0.0
          %3113 = vmatprep.subr.mxu0 0.0
          %3114 = vmatpush1.msra.mxu0 0.0
          %3115 = vmatprep.subr.mxu0 0.0
          %3116 = vmatpush1.msra.mxu0 0.0
          %3117 = vmatprep.subr.mxu0 0.0
          %3118 = vmatpush1.msra.mxu0 0.0
          %3119 = vmatprep.subr.mxu0 0.0
          %3120 = vmatpush1.msra.mxu0 0.0
          %3121 = vmatprep.subr.mxu0 0.0
          %3122 = vmatpush1.msra.mxu0 0.0
          %3123 = vmatprep.subr.mxu0 0.0
          %3124 = vmatpush1.msra.mxu0 0.0
          %3125 = vmatprep.subr.mxu0 0.0
          %3126 = vmatpush1.msra.mxu0 0.0
          %3127 = vmatprep.subr.mxu0 0.0
          %3128 = vmatpush1.msra.mxu0 0.0
          %3129 = vmatprep.subr.mxu0 0.0
          %3130 = vmatpush1.msra.mxu0 0.0
          %3131 = vmatprep.subr.mxu0 0.0
          %3132 = vmatpush1.msra.mxu0 0.0
          %3133 = vmatprep.subr.mxu0 0.0
          %3134 = vmatpush1.msra.mxu0 0.0
          %3135 = vmatprep.subr.mxu0 0.0
          %3136 = vmatpush1.msra.mxu0 0.0
          %3137 = vmatprep.subr.mxu0 0.0
          %3138 = vmatpush1.msra.mxu0 0.0
          %3139 = vmatprep.subr.mxu0 0.0
          %3140 = vmatpush1.msra.mxu0 0.0
          %3141 = vmatprep.subr.mxu0 0.0
          %3142 = vmatpush1.msra.mxu0 0.0
          %3143 = vmatprep.subr.mxu0 0.0
          %3144 = vmatpush1.msra.mxu0 0.0
          %3145 = vmatprep.subr.mxu0 0.0
          %3146 = vmatpush1.msra.mxu0 0.0
          %3147 = vmatprep.subr.mxu0 0.0
          %3148 = vmatpush1.msra.mxu0 0.0
          %3149 = vmatprep.subr.mxu0 0.0
          %3150 = vmatpush1.msra.mxu0 0.0
          %3151 = vmatprep.subr.mxu0 0.0
          %3152 = vmatpush1.msra.mxu0 0.0
          %3153 = vmatprep.subr.mxu0 0.0
          %3154 = vmatpush1.msra.mxu0 0.0
          %3155 = vmatprep.subr.mxu0 0.0
          %3156 = vmatpush1.msra.mxu0 0.0
          %3157 = vmatprep.subr.mxu0 0.0
          %3158 = vmatpush1.msra.mxu0 0.0
          %3159 = vmatprep.mubr.f32.mxu0 0.0
          %3160 = vmatmul.mubr.f32.gmra.mrb[0].mxu0 %v3093
          %v3161 = vpop.f32.mrb[0].mxu0
          %v3162 = vadd.f32 0.0, %v3161
          %v3163 = vpop.f32.mrb[0].mxu0
          %3164 = vdwg.mxu0
          %v3165 = vadd.f32 %v3084, %v3162
          %s3166 = scalar_lea.vmem %s5, 64
          %v3167 = vld [vmem:[%s3166] sm:$0xff]
          %v3168 = vld [vmem:[%s3166 + $0x8] sm:$0xff]
          %v3169 = vld [vmem:[%s3166 + $0x10] sm:$0xff]
          %v3170 = vld [vmem:[%s3166 + $0x18] sm:$0xff]
          %v3171 = vrot.slane %v2930, 2
          %v3172 = vsel %vm1163, %v3171, 0
          %3174 = vmatprep.subr.mxu0 0.0
          %3175 = vmatpush1.msra.mxu0 %v3167
          %3176 = vmatprep.subr.mxu0 0.0
          %3177 = vmatpush1.msra.mxu0 %v3168
          %3178 = vmatprep.subr.mxu0 0.0
          %3179 = vmatpush1.msra.mxu0 %v3169
          %3180 = vmatprep.subr.mxu0 0.0
          %3181 = vmatpush1.msra.mxu0 %v3170
          %3182 = vmatprep.subr.mxu0 0.0
          %3183 = vmatpush1.msra.mxu0 0.0
          %3184 = vmatprep.subr.mxu0 0.0
          %3185 = vmatpush1.msra.mxu0 0.0
          %3186 = vmatprep.subr.mxu0 0.0
          %3187 = vmatpush1.msra.mxu0 0.0
          %3188 = vmatprep.subr.mxu0 0.0
          %3189 = vmatpush1.msra.mxu0 0.0
          %3190 = vmatprep.subr.mxu0 0.0
          %3191 = vmatpush1.msra.mxu0 0.0
          %3192 = vmatprep.subr.mxu0 0.0
          %3193 = vmatpush1.msra.mxu0 0.0
          %3194 = vmatprep.subr.mxu0 0.0
          %3195 = vmatpush1.msra.mxu0 0.0
          %3196 = vmatprep.subr.mxu0 0.0
          %3197 = vmatpush1.msra.mxu0 0.0
          %3198 = vmatprep.subr.mxu0 0.0
          %3199 = vmatpush1.msra.mxu0 0.0
          %3200 = vmatprep.subr.mxu0 0.0
          %3201 = vmatpush1.msra.mxu0 0.0
          %3202 = vmatprep.subr.mxu0 0.0
          %3203 = vmatpush1.msra.mxu0 0.0
          %3204 = vmatprep.subr.mxu0 0.0
          %3205 = vmatpush1.msra.mxu0 0.0
          %3206 = vmatprep.subr.mxu0 0.0
          %3207 = vmatpush1.msra.mxu0 0.0
          %3208 = vmatprep.subr.mxu0 0.0
          %3209 = vmatpush1.msra.mxu0 0.0
          %3210 = vmatprep.subr.mxu0 0.0
          %3211 = vmatpush1.msra.mxu0 0.0
          %3212 = vmatprep.subr.mxu0 0.0
          %3213 = vmatpush1.msra.mxu0 0.0
          %3214 = vmatprep.subr.mxu0 0.0
          %3215 = vmatpush1.msra.mxu0 0.0
          %3216 = vmatprep.subr.mxu0 0.0
          %3217 = vmatpush1.msra.mxu0 0.0
          %3218 = vmatprep.subr.mxu0 0.0
          %3219 = vmatpush1.msra.mxu0 0.0
          %3220 = vmatprep.subr.mxu0 0.0
          %3221 = vmatpush1.msra.mxu0 0.0
          %3222 = vmatprep.subr.mxu0 0.0
          %3223 = vmatpush1.msra.mxu0 0.0
          %3224 = vmatprep.subr.mxu0 0.0
          %3225 = vmatpush1.msra.mxu0 0.0
          %3226 = vmatprep.subr.mxu0 0.0
          %3227 = vmatpush1.msra.mxu0 0.0
          %3228 = vmatprep.subr.mxu0 0.0
          %3229 = vmatpush1.msra.mxu0 0.0
          %3230 = vmatprep.subr.mxu0 0.0
          %3231 = vmatpush1.msra.mxu0 0.0
          %3232 = vmatprep.subr.mxu0 0.0
          %3233 = vmatpush1.msra.mxu0 0.0
          %3234 = vmatprep.subr.mxu0 0.0
          %3235 = vmatpush1.msra.mxu0 0.0
          %3236 = vmatprep.subr.mxu0 0.0
          %3237 = vmatpush1.msra.mxu0 0.0
          %3238 = vmatprep.mubr.f32.mxu0 0.0
          %3239 = vmatmul.mubr.f32.gmra.mrb[0].mxu0 %v3172
          %v3240 = vpop.f32.mrb[0].mxu0
          %v3241 = vadd.f32 0.0, %v3240
          %v3242 = vpop.f32.mrb[0].mxu0
          %3243 = vdwg.mxu0
          %v3244 = vadd.f32 %v3165, %v3241
          %v3245 = vmul.f32 %v3244, 0.0006510417
          %v3246 = vlaneseq
          %v3247 = vshrl.u32 %v3246, 7
          %v3248 = vsub.s32 0, %v3247
          %v3249 = vrot.slane %v3245, %v3248
          %3250 = vst [vmem:[%s289] sm:$0xff] %v3249
        $region56: #{tpu_custom_call.1} parent=47 // pred_fallthru
          _
        %s3251 = sand.u32 %s195, 1
        %s3252 = scalar_lea.sflag [#allocation5], %s3251
        %s3253 = sand.u32 %s195, 1
        %s3254 = smul.addr %s3253, 8
        %s3255 = scalar_lea.vmem [#allocation4], %s3254
        // Predicated region
        $region57: #{tpu_custom_call.1} parent=47 // pred_check
          %p3256 = pneg %p205
        $region58: #{tpu_custom_call.1} parent=47 // pred_check_branch
          %3258 = sbr.rel (%p3256) target = $region60
        $region59: #{tpu_custom_call.1} parent=47 // pred_region
          %s3260 = ssub.s32 128, 128
          %3261 = vsyncadd %s3252, %s3260
          %s3262 = smul.addr %s25, 128
          %s3263 = scalar_lea.hbm %s7, %s3262
          %s3265 = sshll.u32 %s3255, 4
          %s3266 = int_to_ptr.vmem [resolvable:$true] %s3265
          %3268 = dma.vmem_to_hbm [thread:$0]  %s3266, 128, %s3263, %s3252
        $region60: #{tpu_custom_call.1} parent=47 // pred_fallthru
          _
      $region48: #{tpu_custom_call.1} parent=5 // pred_fallthru
        _
      %p3269 = scmp.le.s32.totalorder 2, %s16
      // Predicated region
      $region61: #{tpu_custom_call.1} parent=5 // pred_check
        %p3270 = pneg %p3269
      $region62: #{tpu_custom_call.1} parent=5 // pred_check_branch
        %3272 = sbr.rel (%p3270) target = $region64
      $region63: #{tpu_custom_call.1} parent=5 // pred_region
        %s3273 = ssub.s32 %s16, 2
        // Predicated region
        $region65: #{tpu_custom_call.1} parent=63 // pred_check
          %p3274 = pneg %p211
        $region66: #{tpu_custom_call.1} parent=63 // pred_check_branch
          %3276 = sbr.rel (%p3274) target = $region68
        $region67: #{tpu_custom_call.1} parent=63 // pred_region
          %s3277 = sand.u32 %s196, 1
          %s3278 = scalar_lea.sflag [#allocation5], %s3277
          %s3279 = sand.u32 %s196, 1
          %s3280 = smul.addr %s3279, 8
          %s3281 = scalar_lea.vmem [#allocation4], %s3280
          %3282 = dma.done %s3278, 128
        $region68: #{tpu_custom_call.1} parent=63 // pred_fallthru
          _
      $region64: #{tpu_custom_call.1} parent=5 // pred_fallthru
        _
    $region6: #{tpu_custom_call.1} parent=1 // loop_footer
      %s20 = sadd.s32 1, %s16
    $region7: #{tpu_custom_call.1} parent=1 // loop_footer_branch
      %15 = sbr.rel target = $region3
    $region8: #{tpu_custom_call.1} parent=1 // loop_exit
      _
    %3283 = vsyncpa [#allocation5], 1
    %s3284 = scalar_lea.sflag [#allocation5], 1
    %3285 = vsyncpa %s3284, 1

</llo_original>
